<compile_context>
chip_gen: v7x
topology: tpu7x:2x2x1
jax: 0.10.0
libtpu: 0.0.40
codegen_flags: <defaults>
</compile_context>

<pallas_src>
import functools

import numpy as np
import jax
import jax.numpy as jnp
from jax import lax
from jax.experimental import pallas as pl
from jax.experimental.pallas import tpu as pltpu

_LANE = 128


def _round_up(x, m):
    return ((int(x) + m - 1) // m) * m


# ----------------------------------------------------------------------------
# Fused DLRM forward kernel
# ----------------------------------------------------------------------------

def _dlrm_fused_kernel(*refs,
                       num_tables,
                       pool_ls,
                       bot_acts,
                       top_acts,
                       interaction_op,
                       interaction_itself,
                       loss_threshold,
                       pair_pad,
                       m_orig):
    """Fused: bottom MLP -> embedding bags -> interaction -> top MLP -> clamp.

    Ref order (positional):
      dense_ref,
      [idx_k, table_k] * num_tables,
      [w, b] * len(bot_acts),
      [w, b] * len(top_acts),
      out_ref
    All lane dims are zero-padded to multiples of 128 on the host; padded weight rows
    are zero so padded activation columns never contaminate valid outputs.
    """
    it = iter(refs)
    dense_ref = next(it)
    emb_refs = [(next(it), next(it)) for _ in range(num_tables)]
    bot_refs = [(next(it), next(it)) for _ in range(len(bot_acts))]
    top_refs = [(next(it), next(it)) for _ in range(len(top_acts))]
    out_ref = next(it)

    def apply_mlp(h, layer_refs, acts):
        for (w_ref, b_ref), act in zip(layer_refs, acts):
            w = w_ref[...]                                     # bf16 (in_pad, out_pad)
            h = jnp.dot(h.astype(w.dtype), w,
                        preferred_element_type=jnp.float32)    # f32 accumulate (MXU)
            h = h + b_ref[...]                                 # f32 bias (VPU)
            h = jnp.maximum(h, 0.0) if act == "relu" else jax.nn.sigmoid(h)
        return h

    # ---- bottom MLP ---------------------------------------------------------
    x = apply_mlp(dense_ref[...], bot_refs, bot_acts)          # (TB, m_pad) f32
    tb = x.shape[0]
    if bot_acts and bot_acts[-1] == "sigmoid":
        # sigmoid(0) = 0.5 in padded columns would pollute the pair dot-products.
        lane = lax.broadcasted_iota(jnp.int32, x.shape, 1)
        x = jnp.where(lane < m_orig, x, 0.0)

    # ---- embedding bags: per-tile one-hot gather + fixed-L segment sum -------
    seg_cache = {}
    pooled = []
    for (idx_ref, tab_ref), L in zip(emb_refs, pool_ls):
        idx = idx_ref[...]                                     # (TB*L, 1) int32
        table = tab_ref[...]                                   # (n_pad, m_pad) f32
        nnz, n_pad = idx.shape[0], table.shape[0]

        # gather this tile's rows: onehot(idx) @ table   (exact 0/1 mask, f32 MXU)
        row_iota = lax.broadcasted_iota(jnp.int32, (nnz, n_pad), 1)
        onehot = (idx == row_iota).astype(table.dtype)
        gathered = jnp.dot(onehot, table,
                           preferred_element_type=jnp.float32)  # (TB*L, m_pad)

        # fixed pooling factor L -> static segment mask (shared across equal-L tables)
        if L not in seg_cache:
            b_iota = lax.broadcasted_iota(jnp.int32, (tb, nnz), 0)
            j_iota = lax.broadcasted_iota(jnp.int32, (tb, nnz), 1)
            start = b_iota * L
            seg_cache[L] = ((j_iota >= start) &
                            (j_iota < start + L)).astype(jnp.float32)
        pooled.append(jnp.dot(seg_cache[L], gathered,
                              preferred_element_type=jnp.float32))  # (TB, m_pad)

    # ---- feature interaction --------------------------------------------------
    feats = [x] + pooled                                        # nf x (TB, m_pad)
    if interaction_op == "dot":
        off = 1 if interaction_itself else 0
        zcols = []
        for i in range(len(feats)):
            for j in range(i + off):
                # <T_i, T_j>: VPU multiply + lane reduce (padded lanes are zero)
                zcols.append(jnp.sum(feats[i] * feats[j], axis=-1, keepdims=True))
        pieces = [x] + zcols
        fill = pair_pad - len(zcols)
        if fill > 0:
            pieces.append(jnp.zeros((tb, fill), jnp.float32))
        # single concat -> one lane-dense (TB, m_pad + pair_pad) slab.
        # TODO(synk): for 20+ tables write pair chunks into a VMEM scratch slab
        #             instead of concatenating O(nf^2) width-1 columns.
        z = jnp.concatenate(pieces, axis=1)
    else:  # "cat"
        z = jnp.concatenate(feats, axis=1)                      # (TB, nf*m_pad)

    # ---- top MLP + clamp ------------------------------------------------------
    p = apply_mlp(z, top_refs, top_acts)                        # (TB, out_pad)
    if 0.0 < loss_threshold < 1.0:
        p = jnp.clip(p, loss_threshold, 1.0 - loss_threshold)
    out_ref[...] = p.astype(out_ref.dtype)                      # lane-dense store


# ----------------------------------------------------------------------------
# DLRM model (parameters initialized like DLRM_Net.__init__) + fused forward
# ----------------------------------------------------------------------------

class DLRMPallasNet:
    def __init__(self, m_spa, ln_emb, ln_bot, ln_top,
                 arch_interaction_op="dot", arch_interaction_itself=False,
                 sigmoid_bot=-1, sigmoid_top=-1, loss_threshold=0.0, seed=0,
                 mlp_dtype=jnp.bfloat16):
        rng = np.random.RandomState(seed)
        self.arch_interaction_op = arch_interaction_op
        self.arch_interaction_itself = bool(arch_interaction_itself)
        self.loss_threshold = float(loss_threshold)
        self.mlp_dtype = mlp_dtype

        self.m_orig = int(ln_bot[-1])
        assert int(m_spa) == self.m_orig, "emb dim must equal bottom-MLP output dim"
        self.m_pad = _round_up(self.m_orig, _LANE)
        self.num_tables = int(len(ln_emb))
        nf = 1 + self.num_tables
        off = 1 if self.arch_interaction_itself else 0
        self.npairs = nf * (nf - 1) // 2 + nf * off
        self.pair_pad = _round_up(max(self.npairs, 1), _LANE)
        self.out_features = int(ln_top[-1])

        # embedding tables: uniform(+-sqrt(1/n)); padded copy (n_pad, m_pad) for kernel
        self.emb_tables_np, self.emb_tables_pad = [], []
        for n in ln_emb:
            n = int(n)
            W = rng.uniform(low=-np.sqrt(1.0 / n), high=np.sqrt(1.0 / n),
                            size=(n, self.m_orig)).astype(np.float32)
            self.emb_tables_np.append(W)
            Wp = np.zeros((_round_up(n, _LANE), self.m_pad), np.float32)
            Wp[:n, :self.m_orig] = W
            self.emb_tables_pad.append(jnp.asarray(Wp))

        # MLPs (torch.nn.Linear-style init); weights stored transposed as (in, out)
        bot_np, self.bot_acts = self._init_mlp(ln_bot, sigmoid_bot, rng)
        top_np, self.top_acts = self._init_mlp(ln_top, sigmoid_top, rng)

        # f32 values the kernel effectively uses (mlp_dtype round-trip) -> the NumPy
        # reference checks kernel logic independent of the bf16 weight quantization.
        self.bot_params_ref = [(self._roundtrip(w), b) for w, b in bot_np]
        self.top_params_ref = [(self._roundtrip(w), b) for w, b in top_np]

        # padded kernel parameters
        nb = len(ln_bot) - 1
        bot_in = [_round_up(int(ln_bot[i]), _LANE) for i in range(nb)]
        bot_out = [_round_up(int(ln_bot[i + 1]), _LANE) for i in range(nb)]
        self.bot_pad = self._pad_mlp(bot_np, bot_in, bot_out, None)

        if arch_interaction_op == "dot":
            assert int(ln_top[0]) == self.m_orig + self.npairs
            z_width = self.m_pad + self.pair_pad
            row_map = list(range(self.m_orig)) + \
                      [self.m_pad + p for p in range(self.npairs)]
        else:  # "cat"
            assert int(ln_top[0]) == nf * self.m_orig
            z_width = nf * self.m_pad
            row_map = [k * self.m_pad + q
                       for k in range(nf) for q in range(self.m_orig)]
        nt = len(ln_top) - 1
        top_in = [z_width] + [_round_up(int(ln_top[i]), _LANE) for i in range(1, nt)]
        top_out = [_round_up(int(ln_top[i + 1]), _LANE) for i in range(nt)]
        self.top_pad = self._pad_mlp(top_np, top_in, top_out, row_map)

    # -- init helpers -----------------------------------------------------------
    @staticmethod
    def _init_mlp(ln, sigmoid_layer, rng):
        params, acts = [], []
        for i in range(len(ln) - 1):
            n, m = int(ln[i]), int(ln[i + 1])
            W = rng.normal(0.0, np.sqrt(2.0 / (m + n)), size=(m, n)).astype(np.float32)
            bt = rng.normal(0.0, np.sqrt(1.0 / m), size=m).astype(np.float32)
            params.append((W.T.copy(), bt.reshape(1, m)))        # (in, out), (1, out)
            acts.append("sigmoid" if i == sigmoid_layer else "relu")
        return params, acts

    def _roundtrip(self, w):
        return np.asarray(jnp.asarray(w, dtype=self.mlp_dtype).astype(jnp.float32))

    def _pad_mlp(self, params_np, in_pads, out_pads, row_map_first):
        padded = []
        for li, ((wt, b), ip, op_) in enumerate(zip(params_np, in_pads, out_pads)):
            Wp = np.zeros((ip, op_), np.float32)
            if li == 0 and row_map_first is not None:
                for r_src, r_dst in enumerate(row_map_first):
                    Wp[r_dst, :wt.shape[1]] = wt[r_src]
            else:
                Wp[:wt.shape[0], :wt.shape[1]] = wt
            Bp = np.zeros((1, op_), np.float32)
            Bp[0, :b.shape[1]] = b[0]
            padded.append((jnp.asarray(Wp, dtype=self.mlp_dtype),
                           jnp.asarray(Bp, dtype=jnp.float32)))
        return padded

    # -- fused forward ----------------------------------------------------------
    def forward(self, dense_x, lS_o, lS_i, block_b=128):
        B, d_in = dense_x.shape
        block_b = min(int(block_b), B)
        assert B % block_b == 0, "batch must be divisible by the batch tile"
        d_in_pad = _round_up(d_in, _LANE)
        dense_pad = jnp.pad(dense_x.astype(jnp.float32),
                            ((0, 0), (0, d_in_pad - d_in)))

        inputs = [dense_pad]
        in_specs = [pl.BlockSpec((block_b, d_in_pad), lambda t: (t, 0))]

        pool_ls = []
        for k in range(self.num_tables):
            idx = np.asarray(lS_i[k]).astype(np.int32)
            off = np.asarray(lS_o[k]).astype(np.int64)
            nnz = int(idx.shape[0])
            assert nnz % B == 0, "fixed pooling factor required"
            L = nnz // B
            if not np.array_equal(off, np.arange(0, nnz, L, dtype=np.int64)):
                raise NotImplementedError(
                    "TODO(synk): variable-length bags; only the fixed-offset "
                    "XlaEmbeddingBag layout (lS_o == arange(0, B*L, L)) is supported.")
            pool_ls.append(L)
            npad, mpad = self.emb_tables_pad[k].shape
            inputs += [jnp.asarray(idx.reshape(nnz, 1)), self.emb_tables_pad[k]]
            in_specs += [
                pl.BlockSpec((block_b * L, 1), lambda t: (t, 0)),   # per-tile indices
                pl.BlockSpec((npad, mpad), lambda t: (0, 0)),       # grid-invariant
            ]

        for wt, b in self.bot_pad + self.top_pad:
            inputs += [wt, b]
            in_specs += [pl.BlockSpec(wt.shape, lambda t: (0, 0)),
                         pl.BlockSpec(b.shape, lambda t: (0, 0))]

        out_pad = int(self.top_pad[-1][0].shape[1])
        kernel = functools.partial(
            _dlrm_fused_kernel,
            num_tables=self.num_tables,
            pool_ls=tuple(pool_ls),
            bot_acts=tuple(self.bot_acts),
            top_acts=tuple(self.top_acts),
            interaction_op=self.arch_interaction_op,
            interaction_itself=self.arch_interaction_itself,
            loss_threshold=self.loss_threshold,
            pair_pad=self.pair_pad,
            m_orig=self.m_orig,
        )

        out = pl.pallas_call(
            kernel,
            out_shape=jax.ShapeDtypeStruct((B, out_pad), jnp.float32),
            grid=(B // block_b,),
            in_specs=in_specs,
            out_specs=pl.BlockSpec((block_b, out_pad), lambda t: (t, 0)),
            compiler_params=pltpu.CompilerParams(
                dimension_semantics=("parallel",),       # megacore-shardable batch grid
                vmem_limit_bytes=48 * 1024 * 1024),
        )(*inputs)
        return out[:, :self.out_features]                # drop lane padding on host


# ----------------------------------------------------------------------------
# NumPy reference (torch DLRM_Net.sequential_forward semantics)
# ----------------------------------------------------------------------------

def reference_forward(model, dense_x, lS_o, lS_i):
    def mlp(x, params, acts):
        for (wt, b), act in zip(params, acts):
            x = x @ wt + b
            x = np.maximum(x, 0.0) if act == "relu" else 1.0 / (1.0 + np.exp(-x))
        return x

    x = mlp(np.asarray(dense_x, np.float32), model.bot_params_ref, model.bot_acts)
    ly = []
    for k in range(model.num_tables):
        W = model.emb_tables_np[k]
        idx = np.asarray(lS_i[k]).astype(np.int64)
        off = np.asarray(lS_o[k]).astype(np.int64)
        off_ext = np.concatenate([off, [idx.shape[0]]])
        ly.append(np.stack([W[idx[off_ext[b]:off_ext[b + 1]]].sum(0)
                            for b in range(off.shape[0])]))
    B, d = x.shape
    if model.arch_interaction_op == "dot":
        T = np.concatenate([x] + ly, axis=1).reshape(B, -1, d)
        Z = np.einsum("bnd,bmd->bnm", T, T)
        offset = 1 if model.arch_interaction_itself else 0
        cols = [x]
        for i in range(T.shape[1]):
            for j in range(i + offset):
                cols.append(Z[:, i, j][:, None])
        z = np.concatenate(cols, axis=1)
    else:
        z = np.concatenate([x] + ly, axis=1)
    p = mlp(z, model.top_params_ref, model.top_acts)
    if 0.0 < model.loss_threshold < 1.0:
        p = np.clip(p, model.loss_threshold, 1.0 - model.loss_threshold)
    return p


# ----------------------------------------------------------------------------
# main
# ----------------------------------------------------------------------------

if __name__ == "__main__":
    # small DLRM config
    m_spa = 4                                   # embedding dim (== ln_bot[-1])
    ln_emb = np.array([10, 12, 14])             # 3 sparse feature tables
    ln_bot = np.array([4, 8, 4])                # bottom MLP
    nf = 1 + ln_emb.size                        # dense + sparse features
    npairs = nf * (nf - 1) // 2                 # 'dot' interaction pairs (no self)
    ln_top = np.array([m_spa + npairs, 8, 1])   # top MLP
    sigmoid_top = ln_top.size - 2               # sigmoid on last top layer

    model = DLRMPallasNet(m_spa, ln_emb, ln_bot, ln_top,
                          arch_interaction_op="dot",
                          arch_interaction_itself=False,
                          sigmoid_bot=-1, sigmoid_top=sigmoid_top,
                          loss_threshold=0.0, seed=0,
                          mlp_dtype=jnp.bfloat16)

    B = 256        # batch; tiled into block_b=128 -> 2 "parallel" grid steps
    L = 2          # fixed pooling factor (indices per bag)
    key = jax.random.PRNGKey(0)
    keys = jax.random.split(key, 1 + ln_emb.size)
    dense_x = jax.random.normal(keys[0], (B, int(ln_bot[0])), dtype=jnp.float32)
    lS_i = [jax.random.randint(keys[1 + k], (B * L,), 0, int(ln_emb[k]),
                               dtype=jnp.int32) for k in range(ln_emb.size)]
    lS_o = [jnp.arange(0, B * L, L, dtype=jnp.int32) for _ in range(ln_emb.size)]

    out = model.forward(dense_x, lS_o, lS_i, block_b=128)
    out = jax.block_until_ready(out)
    assert out.shape == (B, 1), out.shape

    ref = reference_forward(model, dense_x, lS_o, lS_i)
    max_err = float(np.max(np.abs(np.asarray(out) - ref)))
    assert np.allclose(np.asarray(out), ref, rtol=2e-2, atol=2e-2), max_err

    print("KERNEL_OK")
</pallas_src>

<mosaic_0001>
module attributes {stable_mosaic.version = 11 : i64} {
  func.func @_dlrm_fused_kernel(%arg0: i32, %arg1: memref<128x128xf32, #tpu.memory_space<vmem>>, %arg2: memref<256x1xi32, #tpu.memory_space<vmem>>, %arg3: memref<128x128xf32, #tpu.memory_space<vmem>>, %arg4: memref<256x1xi32, #tpu.memory_space<vmem>>, %arg5: memref<128x128xf32, #tpu.memory_space<vmem>>, %arg6: memref<256x1xi32, #tpu.memory_space<vmem>>, %arg7: memref<128x128xf32, #tpu.memory_space<vmem>>, %arg8: memref<128x128xbf16, #tpu.memory_space<vmem>>, %arg9: memref<1x128xf32, #tpu.memory_space<vmem>>, %arg10: memref<128x128xbf16, #tpu.memory_space<vmem>>, %arg11: memref<1x128xf32, #tpu.memory_space<vmem>>, %arg12: memref<256x128xbf16, #tpu.memory_space<vmem>>, %arg13: memref<1x128xf32, #tpu.memory_space<vmem>>, %arg14: memref<128x128xbf16, #tpu.memory_space<vmem>>, %arg15: memref<1x128xf32, #tpu.memory_space<vmem>>, %arg16: memref<128x128xf32, #tpu.memory_space<vmem>>) attributes {dimension_semantics = [#tpu.dimension_semantics<parallel>], iteration_bounds = array<i64: 2>, scalar_prefetch = 0 : i64, scratch_operands = 0 : i64, tpu.core_type = #tpu.core_type<tc>, window_params = [{transform_indices = @transform_0, window_bounds = array<i64: 128, 128>}, {transform_indices = @transform_1, window_bounds = array<i64: 256, 1>}, {pipeline_mode = #tpu.pipeline_mode<synchronous>, transform_indices = @transform_2, window_bounds = array<i64: 128, 128>}, {transform_indices = @transform_3, window_bounds = array<i64: 256, 1>}, {pipeline_mode = #tpu.pipeline_mode<synchronous>, transform_indices = @transform_4, window_bounds = array<i64: 128, 128>}, {transform_indices = @transform_5, window_bounds = array<i64: 256, 1>}, {pipeline_mode = #tpu.pipeline_mode<synchronous>, transform_indices = @transform_6, window_bounds = array<i64: 128, 128>}, {pipeline_mode = #tpu.pipeline_mode<synchronous>, transform_indices = @transform_7, window_bounds = array<i64: 128, 128>}, {pipeline_mode = #tpu.pipeline_mode<synchronous>, transform_indices = @transform_8, window_bounds = array<i64: 1, 128>}, {pipeline_mode = #tpu.pipeline_mode<synchronous>, transform_indices = @transform_9, window_bounds = array<i64: 128, 128>}, {pipeline_mode = #tpu.pipeline_mode<synchronous>, transform_indices = @transform_10, window_bounds = array<i64: 1, 128>}, {pipeline_mode = #tpu.pipeline_mode<synchronous>, transform_indices = @transform_11, window_bounds = array<i64: 256, 128>}, {pipeline_mode = #tpu.pipeline_mode<synchronous>, transform_indices = @transform_12, window_bounds = array<i64: 1, 128>}, {pipeline_mode = #tpu.pipeline_mode<synchronous>, transform_indices = @transform_13, window_bounds = array<i64: 128, 128>}, {pipeline_mode = #tpu.pipeline_mode<synchronous>, transform_indices = @transform_14, window_bounds = array<i64: 1, 128>}, {transform_indices = @transform_15, window_bounds = array<i64: 128, 128>}]} {
    %c0 = arith.constant 0 : index
    %c0_0 = arith.constant 0 : index
    %0 = vector.load %arg1[%c0, %c0_0] : memref<128x128xf32, #tpu.memory_space<vmem>>, vector<128x128xf32>
    %c0_1 = arith.constant 0 : index
    %c0_2 = arith.constant 0 : index
    %1 = vector.load %arg8[%c0_1, %c0_2] : memref<128x128xbf16, #tpu.memory_space<vmem>>, vector<128x128xbf16>
    %2 = arith.truncf %0 : vector<128x128xf32> to vector<128x128xbf16>
    %cst = arith.constant dense<0.000000e+00> : vector<128x128xf32>
    %3 = tpu.matmul %2, %1, %cst {dimension_numbers = #tpu.dot_dimension_numbers<[1], [0], [0], [1], [0, 0, 1, 1], [], []>} : vector<128x128xbf16>, vector<128x128xbf16>, vector<128x128xf32> -> vector<128x128xf32>
    %c0_3 = arith.constant 0 : index
    %c0_4 = arith.constant 0 : index
    %4 = vector.load %arg9[%c0_3, %c0_4] : memref<1x128xf32, #tpu.memory_space<vmem>>, vector<1x128xf32>
    %5 = vector.broadcast %4 : vector<1x128xf32> to vector<128x128xf32>
    %6 = arith.addf %3, %5 : vector<128x128xf32>
    %cst_5 = arith.constant 0.000000e+00 : f32
    %7 = vector.broadcast %cst_5 : f32 to vector<128x128xf32>
    %8 = arith.maximumf %6, %7 : vector<128x128xf32>
    %c0_6 = arith.constant 0 : index
    %c0_7 = arith.constant 0 : index
    %9 = vector.load %arg10[%c0_6, %c0_7] : memref<128x128xbf16, #tpu.memory_space<vmem>>, vector<128x128xbf16>
    %10 = arith.truncf %8 : vector<128x128xf32> to vector<128x128xbf16>
    %cst_8 = arith.constant dense<0.000000e+00> : vector<128x128xf32>
    %11 = tpu.matmul %10, %9, %cst_8 {dimension_numbers = #tpu.dot_dimension_numbers<[1], [0], [0], [1], [0, 0, 1, 1], [], []>} : vector<128x128xbf16>, vector<128x128xbf16>, vector<128x128xf32> -> vector<128x128xf32>
    %c0_9 = arith.constant 0 : index
    %c0_10 = arith.constant 0 : index
    %12 = vector.load %arg11[%c0_9, %c0_10] : memref<1x128xf32, #tpu.memory_space<vmem>>, vector<1x128xf32>
    %13 = vector.broadcast %12 : vector<1x128xf32> to vector<128x128xf32>
    %14 = arith.addf %11, %13 : vector<128x128xf32>
    %cst_11 = arith.constant 0.000000e+00 : f32
    %15 = vector.broadcast %cst_11 : f32 to vector<128x128xf32>
    %16 = arith.maximumf %14, %15 : vector<128x128xf32>
    %c0_12 = arith.constant 0 : index
    %c0_13 = arith.constant 0 : index
    %17 = vector.load %arg2[%c0_12, %c0_13] : memref<256x1xi32, #tpu.memory_space<vmem>>, vector<256x1xi32>
    %c0_14 = arith.constant 0 : index
    %c0_15 = arith.constant 0 : index
    %18 = vector.load %arg3[%c0_14, %c0_15] : memref<128x128xf32, #tpu.memory_space<vmem>>, vector<128x128xf32>
    %19 = tpu.iota {dimensions = array<i32: 1>} : vector<256x128xi32>
    %20 = vector.broadcast %17 : vector<256x1xi32> to vector<256x128xi32>
    %21 = arith.cmpi eq, %20, %19 : vector<256x128xi32>
    %22 = arith.extui %21 : vector<256x128xi1> to vector<256x128xi32>
    %23 = arith.sitofp %22 : vector<256x128xi32> to vector<256x128xf32>
    %cst_16 = arith.constant dense<0.000000e+00> : vector<256x128xf32>
    %24 = tpu.matmul %23, %18, %cst_16 {dimension_numbers = #tpu.dot_dimension_numbers<[1], [0], [0], [1], [0, 0, 1, 1], [], []>} : vector<256x128xf32>, vector<128x128xf32>, vector<256x128xf32> -> vector<256x128xf32>
    %25 = tpu.iota {dimensions = array<i32: 0>} : vector<128x256xi32>
    %26 = tpu.iota {dimensions = array<i32: 1>} : vector<128x256xi32>
    %c2_i32 = arith.constant 2 : i32
    %27 = vector.broadcast %c2_i32 : i32 to vector<128x256xi32>
    %28 = arith.muli %25, %27 : vector<128x256xi32>
    %29 = arith.cmpi sge, %26, %28 : vector<128x256xi32>
    %c2_i32_17 = arith.constant 2 : i32
    %30 = vector.broadcast %c2_i32_17 : i32 to vector<128x256xi32>
    %31 = arith.addi %28, %30 : vector<128x256xi32>
    %32 = arith.cmpi slt, %26, %31 : vector<128x256xi32>
    %33 = arith.andi %29, %32 : vector<128x256xi1>
    %34 = arith.extui %33 : vector<128x256xi1> to vector<128x256xi32>
    %35 = arith.sitofp %34 : vector<128x256xi32> to vector<128x256xf32>
    %cst_18 = arith.constant dense<0.000000e+00> : vector<128x128xf32>
    %36 = tpu.matmul %35, %24, %cst_18 {dimension_numbers = #tpu.dot_dimension_numbers<[1], [0], [0], [1], [0, 0, 1, 1], [], []>} : vector<128x256xf32>, vector<256x128xf32>, vector<128x128xf32> -> vector<128x128xf32>
    %c0_19 = arith.constant 0 : index
    %c0_20 = arith.constant 0 : index
    %37 = vector.load %arg4[%c0_19, %c0_20] : memref<256x1xi32, #tpu.memory_space<vmem>>, vector<256x1xi32>
    %c0_21 = arith.constant 0 : index
    %c0_22 = arith.constant 0 : index
    %38 = vector.load %arg5[%c0_21, %c0_22] : memref<128x128xf32, #tpu.memory_space<vmem>>, vector<128x128xf32>
    %39 = tpu.iota {dimensions = array<i32: 1>} : vector<256x128xi32>
    %40 = vector.broadcast %37 : vector<256x1xi32> to vector<256x128xi32>
    %41 = arith.cmpi eq, %40, %39 : vector<256x128xi32>
    %42 = arith.extui %41 : vector<256x128xi1> to vector<256x128xi32>
    %43 = arith.sitofp %42 : vector<256x128xi32> to vector<256x128xf32>
    %cst_23 = arith.constant dense<0.000000e+00> : vector<256x128xf32>
    %44 = tpu.matmul %43, %38, %cst_23 {dimension_numbers = #tpu.dot_dimension_numbers<[1], [0], [0], [1], [0, 0, 1, 1], [], []>} : vector<256x128xf32>, vector<128x128xf32>, vector<256x128xf32> -> vector<256x128xf32>
    %cst_24 = arith.constant dense<0.000000e+00> : vector<128x128xf32>
    %45 = tpu.matmul %35, %44, %cst_24 {dimension_numbers = #tpu.dot_dimension_numbers<[1], [0], [0], [1], [0, 0, 1, 1], [], []>} : vector<128x256xf32>, vector<256x128xf32>, vector<128x128xf32> -> vector<128x128xf32>
    %c0_25 = arith.constant 0 : index
    %c0_26 = arith.constant 0 : index
    %46 = vector.load %arg6[%c0_25, %c0_26] : memref<256x1xi32, #tpu.memory_space<vmem>>, vector<256x1xi32>
    %c0_27 = arith.constant 0 : index
    %c0_28 = arith.constant 0 : index
    %47 = vector.load %arg7[%c0_27, %c0_28] : memref<128x128xf32, #tpu.memory_space<vmem>>, vector<128x128xf32>
    %48 = tpu.iota {dimensions = array<i32: 1>} : vector<256x128xi32>
    %49 = vector.broadcast %46 : vector<256x1xi32> to vector<256x128xi32>
    %50 = arith.cmpi eq, %49, %48 : vector<256x128xi32>
    %51 = arith.extui %50 : vector<256x128xi1> to vector<256x128xi32>
    %52 = arith.sitofp %51 : vector<256x128xi32> to vector<256x128xf32>
    %cst_29 = arith.constant dense<0.000000e+00> : vector<256x128xf32>
    %53 = tpu.matmul %52, %47, %cst_29 {dimension_numbers = #tpu.dot_dimension_numbers<[1], [0], [0], [1], [0, 0, 1, 1], [], []>} : vector<256x128xf32>, vector<128x128xf32>, vector<256x128xf32> -> vector<256x128xf32>
    %cst_30 = arith.constant dense<0.000000e+00> : vector<128x128xf32>
    %54 = tpu.matmul %35, %53, %cst_30 {dimension_numbers = #tpu.dot_dimension_numbers<[1], [0], [0], [1], [0, 0, 1, 1], [], []>} : vector<128x256xf32>, vector<256x128xf32>, vector<128x128xf32> -> vector<128x128xf32>
    %55 = arith.mulf %36, %16 : vector<128x128xf32>
    %cst_31 = arith.constant dense<0.000000e+00> : vector<128xf32>
    %56 = vector.multi_reduction <add>, %55, %cst_31 [1] : vector<128x128xf32> to vector<128xf32>
    %57 = vector.shape_cast %56 : vector<128xf32> to vector<128x1xf32>
    %58 = arith.mulf %45, %16 : vector<128x128xf32>
    %cst_32 = arith.constant dense<0.000000e+00> : vector<128xf32>
    %59 = vector.multi_reduction <add>, %58, %cst_32 [1] : vector<128x128xf32> to vector<128xf32>
    %60 = vector.shape_cast %59 : vector<128xf32> to vector<128x1xf32>
    %61 = arith.mulf %45, %36 : vector<128x128xf32>
    %cst_33 = arith.constant dense<0.000000e+00> : vector<128xf32>
    %62 = vector.multi_reduction <add>, %61, %cst_33 [1] : vector<128x128xf32> to vector<128xf32>
    %63 = vector.shape_cast %62 : vector<128xf32> to vector<128x1xf32>
    %64 = arith.mulf %54, %16 : vector<128x128xf32>
    %cst_34 = arith.constant dense<0.000000e+00> : vector<128xf32>
    %65 = vector.multi_reduction <add>, %64, %cst_34 [1] : vector<128x128xf32> to vector<128xf32>
    %66 = vector.shape_cast %65 : vector<128xf32> to vector<128x1xf32>
    %67 = arith.mulf %54, %36 : vector<128x128xf32>
    %cst_35 = arith.constant dense<0.000000e+00> : vector<128xf32>
    %68 = vector.multi_reduction <add>, %67, %cst_35 [1] : vector<128x128xf32> to vector<128xf32>
    %69 = vector.shape_cast %68 : vector<128xf32> to vector<128x1xf32>
    %70 = arith.mulf %54, %45 : vector<128x128xf32>
    %cst_36 = arith.constant dense<0.000000e+00> : vector<128xf32>
    %71 = vector.multi_reduction <add>, %70, %cst_36 [1] : vector<128x128xf32> to vector<128xf32>
    %72 = vector.shape_cast %71 : vector<128xf32> to vector<128x1xf32>
    %cst_37 = arith.constant 0.000000e+00 : f32
    %73 = vector.broadcast %cst_37 : f32 to vector<128x122xf32>
    %74 = tpu.concatenate %16, %57, %60, %63, %66, %69, %72, %73 in 1 : vector<128x128xf32>, vector<128x1xf32>, vector<128x1xf32>, vector<128x1xf32>, vector<128x1xf32>, vector<128x1xf32>, vector<128x1xf32>, vector<128x122xf32> -> vector<128x256xf32>
    %c0_38 = arith.constant 0 : index
    %c0_39 = arith.constant 0 : index
    %75 = vector.load %arg12[%c0_38, %c0_39] : memref<256x128xbf16, #tpu.memory_space<vmem>>, vector<256x128xbf16>
    %76 = arith.truncf %74 : vector<128x256xf32> to vector<128x256xbf16>
    %cst_40 = arith.constant dense<0.000000e+00> : vector<128x128xf32>
    %77 = tpu.matmul %76, %75, %cst_40 {dimension_numbers = #tpu.dot_dimension_numbers<[1], [0], [0], [1], [0, 0, 1, 1], [], []>} : vector<128x256xbf16>, vector<256x128xbf16>, vector<128x128xf32> -> vector<128x128xf32>
    %c0_41 = arith.constant 0 : index
    %c0_42 = arith.constant 0 : index
    %78 = vector.load %arg13[%c0_41, %c0_42] : memref<1x128xf32, #tpu.memory_space<vmem>>, vector<1x128xf32>
    %79 = vector.broadcast %78 : vector<1x128xf32> to vector<128x128xf32>
    %80 = arith.addf %77, %79 : vector<128x128xf32>
    %cst_43 = arith.constant 0.000000e+00 : f32
    %81 = vector.broadcast %cst_43 : f32 to vector<128x128xf32>
    %82 = arith.maximumf %80, %81 : vector<128x128xf32>
    %c0_44 = arith.constant 0 : index
    %c0_45 = arith.constant 0 : index
    %83 = vector.load %arg14[%c0_44, %c0_45] : memref<128x128xbf16, #tpu.memory_space<vmem>>, vector<128x128xbf16>
    %84 = arith.truncf %82 : vector<128x128xf32> to vector<128x128xbf16>
    %cst_46 = arith.constant dense<0.000000e+00> : vector<128x128xf32>
    %85 = tpu.matmul %84, %83, %cst_46 {dimension_numbers = #tpu.dot_dimension_numbers<[1], [0], [0], [1], [0, 0, 1, 1], [], []>} : vector<128x128xbf16>, vector<128x128xbf16>, vector<128x128xf32> -> vector<128x128xf32>
    %c0_47 = arith.constant 0 : index
    %c0_48 = arith.constant 0 : index
    %86 = vector.load %arg15[%c0_47, %c0_48] : memref<1x128xf32, #tpu.memory_space<vmem>>, vector<1x128xf32>
    %87 = vector.broadcast %86 : vector<1x128xf32> to vector<128x128xf32>
    %88 = arith.addf %85, %87 : vector<128x128xf32>
    %89 = arith.negf %88 : vector<128x128xf32>
    %90 = math.exp %89 : vector<128x128xf32>
    %cst_49 = arith.constant 1.000000e+00 : f32
    %91 = vector.broadcast %cst_49 : f32 to vector<128x128xf32>
    %92 = arith.addf %91, %90 : vector<128x128xf32>
    %93 = arith.divf %91, %92 : vector<128x128xf32>
    %c0_50 = arith.constant 0 : index
    %c0_51 = arith.constant 0 : index
    %94 = vector.load %arg16[%c0_50, %c0_51] : memref<128x128xf32, #tpu.memory_space<vmem>>, vector<128x128xf32>
    tpu.vector_store %arg16[%c0_50, %c0_51], %93 {strides = array<i32>} : memref<128x128xf32, #tpu.memory_space<vmem>>, vector<128x128xf32>,
    return
  }
  func.func @transform_0(%arg0: i32) -> (i32, i32) {
    %c0_i32 = arith.constant 0 : i32
    %c0_i32_0 = arith.constant 0 : i32
    return %arg0, %c0_i32 : i32, i32
  }
  func.func @transform_1(%arg0: i32) -> (i32, i32) {
    %c0_i32 = arith.constant 0 : i32
    %c0_i32_0 = arith.constant 0 : i32
    return %arg0, %c0_i32 : i32, i32
  }
  func.func @transform_2(%arg0: i32) -> (i32, i32) {
    %c0_i32 = arith.constant 0 : i32
    %c0_i32_0 = arith.constant 0 : i32
    %c0_i32_1 = arith.constant 0 : i32
    return %c0_i32, %c0_i32_0 : i32, i32
  }
  func.func @transform_3(%arg0: i32) -> (i32, i32) {
    %c0_i32 = arith.constant 0 : i32
    %c0_i32_0 = arith.constant 0 : i32
    return %arg0, %c0_i32 : i32, i32
  }
  func.func @transform_4(%arg0: i32) -> (i32, i32) {
    %c0_i32 = arith.constant 0 : i32
    %c0_i32_0 = arith.constant 0 : i32
    %c0_i32_1 = arith.constant 0 : i32
    return %c0_i32, %c0_i32_0 : i32, i32
  }
  func.func @transform_5(%arg0: i32) -> (i32, i32) {
    %c0_i32 = arith.constant 0 : i32
    %c0_i32_0 = arith.constant 0 : i32
    return %arg0, %c0_i32 : i32, i32
  }
  func.func @transform_6(%arg0: i32) -> (i32, i32) {
    %c0_i32 = arith.constant 0 : i32
    %c0_i32_0 = arith.constant 0 : i32
    %c0_i32_1 = arith.constant 0 : i32
    return %c0_i32, %c0_i32_0 : i32, i32
  }
  func.func @transform_7(%arg0: i32) -> (i32, i32) {
    %c0_i32 = arith.constant 0 : i32
    %c0_i32_0 = arith.constant 0 : i32
    %c0_i32_1 = arith.constant 0 : i32
    return %c0_i32, %c0_i32_0 : i32, i32
  }
  func.func @transform_8(%arg0: i32) -> (i32, i32) {
    %c0_i32 = arith.constant 0 : i32
    %c0_i32_0 = arith.constant 0 : i32
    %c0_i32_1 = arith.constant 0 : i32
    return %c0_i32, %c0_i32_0 : i32, i32
  }
  func.func @transform_9(%arg0: i32) -> (i32, i32) {
    %c0_i32 = arith.constant 0 : i32
    %c0_i32_0 = arith.constant 0 : i32
    %c0_i32_1 = arith.constant 0 : i32
    return %c0_i32, %c0_i32_0 : i32, i32
  }
  func.func @transform_10(%arg0: i32) -> (i32, i32) {
    %c0_i32 = arith.constant 0 : i32
    %c0_i32_0 = arith.constant 0 : i32
    %c0_i32_1 = arith.constant 0 : i32
    return %c0_i32, %c0_i32_0 : i32, i32
  }
  func.func @transform_11(%arg0: i32) -> (i32, i32) {
    %c0_i32 = arith.constant 0 : i32
    %c0_i32_0 = arith.constant 0 : i32
    %c0_i32_1 = arith.constant 0 : i32
    return %c0_i32, %c0_i32_0 : i32, i32
  }
  func.func @transform_12(%arg0: i32) -> (i32, i32) {
    %c0_i32 = arith.constant 0 : i32
    %c0_i32_0 = arith.constant 0 : i32
    %c0_i32_1 = arith.constant 0 : i32
    return %c0_i32, %c0_i32_0 : i32, i32
  }
  func.func @transform_13(%arg0: i32) -> (i32, i32) {
    %c0_i32 = arith.constant 0 : i32
    %c0_i32_0 = arith.constant 0 : i32
    %c0_i32_1 = arith.constant 0 : i32
    return %c0_i32, %c0_i32_0 : i32, i32
  }
  func.func @transform_14(%arg0: i32) -> (i32, i32) {
    %c0_i32 = arith.constant 0 : i32
    %c0_i32_0 = arith.constant 0 : i32
    %c0_i32_1 = arith.constant 0 : i32
    return %c0_i32, %c0_i32_0 : i32, i32
  }
  func.func @transform_15(%arg0: i32) -> (i32, i32) {
    %c0_i32 = arith.constant 0 : i32
    %c0_i32_0 = arith.constant 0 : i32
    return %arg0, %c0_i32 : i32, i32
  }
}

</mosaic_0001>

<llo_original>
// kernel: tpu_custom_call.1
$region0: #{tpu_custom_call.1}
  #allocation0 [shape = 'u32[]', space=smem, size = 0x4, offset = 0x4, fixed_abs, tag = 'smem constant byte address 0x4 - core index']
  #allocation1 [shape = 'u32[144,128]{1,0:T(1,128)}', space=vmem, size = 0x12000, scoped, tag = 'internal scratch']
  %s0 = inlined_call_operand.vmem [shape: f32[256,128], index: 0, kind: input, shape index: {}]
  %s1 = inlined_call_operand.vmem [shape: s32[512,1], index: 1, kind: input, shape index: {}]
  %s2 = inlined_call_operand.vmem [shape: f32[128,128], index: 2, kind: input, shape index: {}]
  %s3 = inlined_call_operand.vmem [shape: s32[512,1], index: 3, kind: input, shape index: {}]
  %s4 = inlined_call_operand.vmem [shape: f32[128,128], index: 4, kind: input, shape index: {}]
  %s5 = inlined_call_operand.vmem [shape: s32[512,1], index: 5, kind: input, shape index: {}]
  %s6 = inlined_call_operand.vmem [shape: f32[128,128], index: 6, kind: input, shape index: {}]
  %s7 = inlined_call_operand.vmem [shape: bf16[128,128], index: 7, kind: input, shape index: {}]
  %s8 = inlined_call_operand.vmem [shape: f32[1,128], index: 8, kind: input, shape index: {}]
  %s9 = inlined_call_operand.vmem [shape: bf16[128,128], index: 9, kind: input, shape index: {}]
  %s10 = inlined_call_operand.vmem [shape: f32[1,128], index: 10, kind: input, shape index: {}]
  %s11 = inlined_call_operand.vmem [shape: bf16[256,128], index: 11, kind: input, shape index: {}]
  %s12 = inlined_call_operand.vmem [shape: f32[1,128], index: 12, kind: input, shape index: {}]
  %s13 = inlined_call_operand.vmem [shape: bf16[128,128], index: 13, kind: input, shape index: {}]
  %s14 = inlined_call_operand.vmem [shape: f32[1,128], index: 14, kind: input, shape index: {}]
  %s15 = inlined_call_operand.hbm [shape: f32[256,128], index: 15, kind: output, shape index: {}]
  %s16 = sld [smem:[#allocation0]]
  $region93: #{tpu_custom_call.1} parent=0
    _
  %s18 = ssub.s32 1, %s16
  %s19 = scalar_select 0, %s18, %s16
  $region1: #{tpu_custom_call.1} parent=0
    #allocation2 [shape = 'u8[131072]{0}', space=vmem, size = 0x20000, scoped, tag = 'output window, operand 0']
    #allocation3 [shape = 's32[2]{0}', space=sflag, size = 0x8, scoped, tag = 'scoped memory for tpu_custom_call.1']
    %20 = vsyncpa [#allocation3], 0
    %s21 = scalar_lea.sflag [#allocation3], 1
    %22 = vsyncpa %s21, 0
    loop: start=0, step=1, limit=4
    $region2: #{tpu_custom_call.1} parent=1 // loop_pre_header
      _
    $region3: #{tpu_custom_call.1} parent=1 // loop_header
      %s24 = sphi 0, %s28
      %p25 = scmp.ge.s32.totalorder %s24, 4
      %s34 = sphi 0, %s36
      %s37 = sphi 0, %s34
      %s38 = sphi 0, %s37
      %s54 = sphi 0, %s38
      %s60 = sphi 0, %s62
      %s63 = sphi 0, %s60
      %s64 = sphi 0, %s63
      %s80 = sphi 0, %s64
      %s84 = sphi 0, %s84
      %s86 = sphi 0, %s84
      %s87 = sphi 0, %s86
      %s101 = sphi 0, %s87
      %s107 = sphi 0, %s109
      %s110 = sphi 0, %s107
      %s111 = sphi 0, %s110
      %s127 = sphi 0, %s111
      %s131 = sphi 0, %s131
      %s133 = sphi 0, %s131
      %s134 = sphi 0, %s133
      %s148 = sphi 0, %s134
      %s154 = sphi 0, %s156
      %s157 = sphi 0, %s154
      %s158 = sphi 0, %s157
      %s174 = sphi 0, %s158
      %s178 = sphi 0, %s178
      %s180 = sphi 0, %s178
      %s181 = sphi 0, %s180
      %s195 = sphi 0, %s181
      %s199 = sphi 0, %s199
      %s201 = sphi 0, %s199
      %s202 = sphi 0, %s201
      %s216 = sphi 0, %s202
      %s220 = sphi 0, %s220
      %s222 = sphi 0, %s220
      %s223 = sphi 0, %s222
      %s237 = sphi 0, %s223
      %s241 = sphi 0, %s241
      %s243 = sphi 0, %s241
      %s244 = sphi 0, %s243
      %s258 = sphi 0, %s244
      %s262 = sphi 0, %s262
      %s264 = sphi 0, %s262
      %s265 = sphi 0, %s264
      %s279 = sphi 0, %s265
      %s283 = sphi 0, %s283
      %s285 = sphi 0, %s283
      %s286 = sphi 0, %s285
      %s300 = sphi 0, %s286
      %s304 = sphi 0, %s304
      %s306 = sphi 0, %s304
      %s307 = sphi 0, %s306
      %s321 = sphi 0, %s307
      %s325 = sphi 0, %s325
      %s327 = sphi 0, %s325
      %s328 = sphi 0, %s327
      %s342 = sphi 0, %s328
      %s346 = sphi 0, %s346
      %s348 = sphi 0, %s346
      %s349 = sphi 0, %s348
      %s363 = sphi 0, %s349
      %s369 = sphi 0, %s371
      %s372 = sphi 0, %s369
      %s373 = sphi 0, %s372
      %s389 = sphi 0, %s373
    $region4: #{tpu_custom_call.1} parent=1 // loop_header_branch
      %27 = sbr.rel (%p25) target = $region8
    $region5: #{tpu_custom_call.1} parent=1 // loop_body
      %s29 = ssub.s32 %s24, 1
      %s30 = ssub.s32 %s24, 2
      %s31 = sadd.s32 %s24, 1
      %s32 = ssub.s32 %s24, %s31
      %p33 = scmp.eq.s32.totalorder %s32, 0
      %s35 = sadd.s32 %s34, 1
      %s36 = scalar_select %p33, %s34, %s35
      %p39 = pneg %p33
      %p40 = scmp.eq.s32.totalorder %s24, 1
      %p41 = por %p39, %p40
      %p42 = scmp.ne.s32.totalorder %s34, %s37
      %p43 = scmp.eq.s32.totalorder %s24, 0
      %p44 = por %p42, %p43
      %p45 = scmp.ne.s32.totalorder %s34, %s37
      %p46 = scmp.eq.s32.totalorder %s29, 1
      %p47 = por %p45, %p46
      %p48 = scmp.ne.s32.totalorder %s37, %s38
      %p49 = scmp.eq.s32.totalorder %s29, 0
      %p50 = por %p48, %p49
      %p51 = scmp.ne.s32.totalorder %s37, %s38
      %p52 = scmp.eq.s32.totalorder %s30, 1
      %p53 = por %p51, %p52
      %p55 = scmp.ne.s32.totalorder %s38, %s54
      %p56 = scmp.eq.s32.totalorder %s30, 0
      %p57 = por %p55, %p56
      %s58 = ssub.s32 %s24, %s31
      %p59 = scmp.eq.s32.totalorder %s58, 0
      %s61 = sadd.s32 %s60, 1
      %s62 = scalar_select %p59, %s60, %s61
      %p65 = pneg %p59
      %p66 = scmp.eq.s32.totalorder %s24, 1
      %p67 = por %p65, %p66
      %p68 = scmp.ne.s32.totalorder %s60, %s63
      %p69 = scmp.eq.s32.totalorder %s24, 0
      %p70 = por %p68, %p69
      %p71 = scmp.ne.s32.totalorder %s60, %s63
      %p72 = scmp.eq.s32.totalorder %s29, 1
      %p73 = por %p71, %p72
      %p74 = scmp.ne.s32.totalorder %s63, %s64
      %p75 = scmp.eq.s32.totalorder %s29, 0
      %p76 = por %p74, %p75
      %p77 = scmp.ne.s32.totalorder %s63, %s64
      %p78 = scmp.eq.s32.totalorder %s30, 1
      %p79 = por %p77, %p78
      %p81 = scmp.ne.s32.totalorder %s64, %s80
      %p82 = scmp.eq.s32.totalorder %s30, 0
      %p83 = por %p81, %p82
      %s85 = sadd.s32 %s84, 1
      %p88 = scmp.eq.s32.totalorder %s24, 1
      %p89 = scmp.ne.s32.totalorder %s84, %s86
      %p90 = scmp.eq.s32.totalorder %s24, 0
      %p91 = por %p89, %p90
      %p92 = scmp.ne.s32.totalorder %s84, %s86
      %p93 = scmp.eq.s32.totalorder %s29, 1
      %p94 = por %p92, %p93
      %p95 = scmp.ne.s32.totalorder %s86, %s87
      %p96 = scmp.eq.s32.totalorder %s29, 0
      %p97 = por %p95, %p96
      %p98 = scmp.ne.s32.totalorder %s86, %s87
      %p99 = scmp.eq.s32.totalorder %s30, 1
      %p100 = por %p98, %p99
      %p102 = scmp.ne.s32.totalorder %s87, %s101
      %p103 = scmp.eq.s32.totalorder %s30, 0
      %p104 = por %p102, %p103
      %s105 = ssub.s32 %s24, %s31
      %p106 = scmp.eq.s32.totalorder %s105, 0
      %s108 = sadd.s32 %s107, 1
      %s109 = scalar_select %p106, %s107, %s108
      %p112 = pneg %p106
      %p113 = scmp.eq.s32.totalorder %s24, 1
      %p114 = por %p112, %p113
      %p115 = scmp.ne.s32.totalorder %s107, %s110
      %p116 = scmp.eq.s32.totalorder %s24, 0
      %p117 = por %p115, %p116
      %p118 = scmp.ne.s32.totalorder %s107, %s110
      %p119 = scmp.eq.s32.totalorder %s29, 1
      %p120 = por %p118, %p119
      %p121 = scmp.ne.s32.totalorder %s110, %s111
      %p122 = scmp.eq.s32.totalorder %s29, 0
      %p123 = por %p121, %p122
      %p124 = scmp.ne.s32.totalorder %s110, %s111
      %p125 = scmp.eq.s32.totalorder %s30, 1
      %p126 = por %p124, %p125
      %p128 = scmp.ne.s32.totalorder %s111, %s127
      %p129 = scmp.eq.s32.totalorder %s30, 0
      %p130 = por %p128, %p129
      %s132 = sadd.s32 %s131, 1
      %p135 = scmp.eq.s32.totalorder %s24, 1
      %p136 = scmp.ne.s32.totalorder %s131, %s133
      %p137 = scmp.eq.s32.totalorder %s24, 0
      %p138 = por %p136, %p137
      %p139 = scmp.ne.s32.totalorder %s131, %s133
      %p140 = scmp.eq.s32.totalorder %s29, 1
      %p141 = por %p139, %p140
      %p142 = scmp.ne.s32.totalorder %s133, %s134
      %p143 = scmp.eq.s32.totalorder %s29, 0
      %p144 = por %p142, %p143
      %p145 = scmp.ne.s32.totalorder %s133, %s134
      %p146 = scmp.eq.s32.totalorder %s30, 1
      %p147 = por %p145, %p146
      %p149 = scmp.ne.s32.totalorder %s134, %s148
      %p150 = scmp.eq.s32.totalorder %s30, 0
      %p151 = por %p149, %p150
      %s152 = ssub.s32 %s24, %s31
      %p153 = scmp.eq.s32.totalorder %s152, 0
      %s155 = sadd.s32 %s154, 1
      %s156 = scalar_select %p153, %s154, %s155
      %p159 = pneg %p153
      %p160 = scmp.eq.s32.totalorder %s24, 1
      %p161 = por %p159, %p160
      %p162 = scmp.ne.s32.totalorder %s154, %s157
      %p163 = scmp.eq.s32.totalorder %s24, 0
      %p164 = por %p162, %p163
      %p165 = scmp.ne.s32.totalorder %s154, %s157
      %p166 = scmp.eq.s32.totalorder %s29, 1
      %p167 = por %p165, %p166
      %p168 = scmp.ne.s32.totalorder %s157, %s158
      %p169 = scmp.eq.s32.totalorder %s29, 0
      %p170 = por %p168, %p169
      %p171 = scmp.ne.s32.totalorder %s157, %s158
      %p172 = scmp.eq.s32.totalorder %s30, 1
      %p173 = por %p171, %p172
      %p175 = scmp.ne.s32.totalorder %s158, %s174
      %p176 = scmp.eq.s32.totalorder %s30, 0
      %p177 = por %p175, %p176
      %s179 = sadd.s32 %s178, 1
      %p182 = scmp.eq.s32.totalorder %s24, 1
      %p183 = scmp.ne.s32.totalorder %s178, %s180
      %p184 = scmp.eq.s32.totalorder %s24, 0
      %p185 = por %p183, %p184
      %p186 = scmp.ne.s32.totalorder %s178, %s180
      %p187 = scmp.eq.s32.totalorder %s29, 1
      %p188 = por %p186, %p187
      %p189 = scmp.ne.s32.totalorder %s180, %s181
      %p190 = scmp.eq.s32.totalorder %s29, 0
      %p191 = por %p189, %p190
      %p192 = scmp.ne.s32.totalorder %s180, %s181
      %p193 = scmp.eq.s32.totalorder %s30, 1
      %p194 = por %p192, %p193
      %p196 = scmp.ne.s32.totalorder %s181, %s195
      %p197 = scmp.eq.s32.totalorder %s30, 0
      %p198 = por %p196, %p197
      %s200 = sadd.s32 %s199, 1
      %p203 = scmp.eq.s32.totalorder %s24, 1
      %p204 = scmp.ne.s32.totalorder %s199, %s201
      %p205 = scmp.eq.s32.totalorder %s24, 0
      %p206 = por %p204, %p205
      %p207 = scmp.ne.s32.totalorder %s199, %s201
      %p208 = scmp.eq.s32.totalorder %s29, 1
      %p209 = por %p207, %p208
      %p210 = scmp.ne.s32.totalorder %s201, %s202
      %p211 = scmp.eq.s32.totalorder %s29, 0
      %p212 = por %p210, %p211
      %p213 = scmp.ne.s32.totalorder %s201, %s202
      %p214 = scmp.eq.s32.totalorder %s30, 1
      %p215 = por %p213, %p214
      %p217 = scmp.ne.s32.totalorder %s202, %s216
      %p218 = scmp.eq.s32.totalorder %s30, 0
      %p219 = por %p217, %p218
      %s221 = sadd.s32 %s220, 1
      %p224 = scmp.eq.s32.totalorder %s24, 1
      %p225 = scmp.ne.s32.totalorder %s220, %s222
      %p226 = scmp.eq.s32.totalorder %s24, 0
      %p227 = por %p225, %p226
      %p228 = scmp.ne.s32.totalorder %s220, %s222
      %p229 = scmp.eq.s32.totalorder %s29, 1
      %p230 = por %p228, %p229
      %p231 = scmp.ne.s32.totalorder %s222, %s223
      %p232 = scmp.eq.s32.totalorder %s29, 0
      %p233 = por %p231, %p232
      %p234 = scmp.ne.s32.totalorder %s222, %s223
      %p235 = scmp.eq.s32.totalorder %s30, 1
      %p236 = por %p234, %p235
      %p238 = scmp.ne.s32.totalorder %s223, %s237
      %p239 = scmp.eq.s32.totalorder %s30, 0
      %p240 = por %p238, %p239
      %s242 = sadd.s32 %s241, 1
      %p245 = scmp.eq.s32.totalorder %s24, 1
      %p246 = scmp.ne.s32.totalorder %s241, %s243
      %p247 = scmp.eq.s32.totalorder %s24, 0
      %p248 = por %p246, %p247
      %p249 = scmp.ne.s32.totalorder %s241, %s243
      %p250 = scmp.eq.s32.totalorder %s29, 1
      %p251 = por %p249, %p250
      %p252 = scmp.ne.s32.totalorder %s243, %s244
      %p253 = scmp.eq.s32.totalorder %s29, 0
      %p254 = por %p252, %p253
      %p255 = scmp.ne.s32.totalorder %s243, %s244
      %p256 = scmp.eq.s32.totalorder %s30, 1
      %p257 = por %p255, %p256
      %p259 = scmp.ne.s32.totalorder %s244, %s258
      %p260 = scmp.eq.s32.totalorder %s30, 0
      %p261 = por %p259, %p260
      %s263 = sadd.s32 %s262, 1
      %p266 = scmp.eq.s32.totalorder %s24, 1
      %p267 = scmp.ne.s32.totalorder %s262, %s264
      %p268 = scmp.eq.s32.totalorder %s24, 0
      %p269 = por %p267, %p268
      %p270 = scmp.ne.s32.totalorder %s262, %s264
      %p271 = scmp.eq.s32.totalorder %s29, 1
      %p272 = por %p270, %p271
      %p273 = scmp.ne.s32.totalorder %s264, %s265
      %p274 = scmp.eq.s32.totalorder %s29, 0
      %p275 = por %p273, %p274
      %p276 = scmp.ne.s32.totalorder %s264, %s265
      %p277 = scmp.eq.s32.totalorder %s30, 1
      %p278 = por %p276, %p277
      %p280 = scmp.ne.s32.totalorder %s265, %s279
      %p281 = scmp.eq.s32.totalorder %s30, 0
      %p282 = por %p280, %p281
      %s284 = sadd.s32 %s283, 1
      %p287 = scmp.eq.s32.totalorder %s24, 1
      %p288 = scmp.ne.s32.totalorder %s283, %s285
      %p289 = scmp.eq.s32.totalorder %s24, 0
      %p290 = por %p288, %p289
      %p291 = scmp.ne.s32.totalorder %s283, %s285
      %p292 = scmp.eq.s32.totalorder %s29, 1
      %p293 = por %p291, %p292
      %p294 = scmp.ne.s32.totalorder %s285, %s286
      %p295 = scmp.eq.s32.totalorder %s29, 0
      %p296 = por %p294, %p295
      %p297 = scmp.ne.s32.totalorder %s285, %s286
      %p298 = scmp.eq.s32.totalorder %s30, 1
      %p299 = por %p297, %p298
      %p301 = scmp.ne.s32.totalorder %s286, %s300
      %p302 = scmp.eq.s32.totalorder %s30, 0
      %p303 = por %p301, %p302
      %s305 = sadd.s32 %s304, 1
      %p308 = scmp.eq.s32.totalorder %s24, 1
      %p309 = scmp.ne.s32.totalorder %s304, %s306
      %p310 = scmp.eq.s32.totalorder %s24, 0
      %p311 = por %p309, %p310
      %p312 = scmp.ne.s32.totalorder %s304, %s306
      %p313 = scmp.eq.s32.totalorder %s29, 1
      %p314 = por %p312, %p313
      %p315 = scmp.ne.s32.totalorder %s306, %s307
      %p316 = scmp.eq.s32.totalorder %s29, 0
      %p317 = por %p315, %p316
      %p318 = scmp.ne.s32.totalorder %s306, %s307
      %p319 = scmp.eq.s32.totalorder %s30, 1
      %p320 = por %p318, %p319
      %p322 = scmp.ne.s32.totalorder %s307, %s321
      %p323 = scmp.eq.s32.totalorder %s30, 0
      %p324 = por %p322, %p323
      %s326 = sadd.s32 %s325, 1
      %p329 = scmp.eq.s32.totalorder %s24, 1
      %p330 = scmp.ne.s32.totalorder %s325, %s327
      %p331 = scmp.eq.s32.totalorder %s24, 0
      %p332 = por %p330, %p331
      %p333 = scmp.ne.s32.totalorder %s325, %s327
      %p334 = scmp.eq.s32.totalorder %s29, 1
      %p335 = por %p333, %p334
      %p336 = scmp.ne.s32.totalorder %s327, %s328
      %p337 = scmp.eq.s32.totalorder %s29, 0
      %p338 = por %p336, %p337
      %p339 = scmp.ne.s32.totalorder %s327, %s328
      %p340 = scmp.eq.s32.totalorder %s30, 1
      %p341 = por %p339, %p340
      %p343 = scmp.ne.s32.totalorder %s328, %s342
      %p344 = scmp.eq.s32.totalorder %s30, 0
      %p345 = por %p343, %p344
      %s347 = sadd.s32 %s346, 1
      %p350 = scmp.eq.s32.totalorder %s24, 1
      %p351 = scmp.ne.s32.totalorder %s346, %s348
      %p352 = scmp.eq.s32.totalorder %s24, 0
      %p353 = por %p351, %p352
      %p354 = scmp.ne.s32.totalorder %s346, %s348
      %p355 = scmp.eq.s32.totalorder %s29, 1
      %p356 = por %p354, %p355
      %p357 = scmp.ne.s32.totalorder %s348, %s349
      %p358 = scmp.eq.s32.totalorder %s29, 0
      %p359 = por %p357, %p358
      %p360 = scmp.ne.s32.totalorder %s348, %s349
      %p361 = scmp.eq.s32.totalorder %s30, 1
      %p362 = por %p360, %p361
      %p364 = scmp.ne.s32.totalorder %s349, %s363
      %p365 = scmp.eq.s32.totalorder %s30, 0
      %p366 = por %p364, %p365
      %s367 = ssub.s32 %s24, %s31
      %p368 = scmp.eq.s32.totalorder %s367, 0
      %s370 = sadd.s32 %s369, 1
      %s371 = scalar_select %p368, %s369, %s370
      %p374 = pneg %p368
      %p375 = scmp.eq.s32.totalorder %s24, 1
      %p376 = por %p374, %p375
      %p377 = scmp.ne.s32.totalorder %s369, %s372
      %p378 = scmp.eq.s32.totalorder %s24, 0
      %p379 = por %p377, %p378
      %p380 = scmp.ne.s32.totalorder %s369, %s372
      %p381 = scmp.eq.s32.totalorder %s29, 1
      %p382 = por %p380, %p381
      %p383 = scmp.ne.s32.totalorder %s372, %s373
      %p384 = scmp.eq.s32.totalorder %s29, 0
      %p385 = por %p383, %p384
      %p386 = scmp.ne.s32.totalorder %s372, %s373
      %p387 = scmp.eq.s32.totalorder %s30, 1
      %p388 = por %p386, %p387
      %p390 = scmp.ne.s32.totalorder %s373, %s389
      %p391 = scmp.eq.s32.totalorder %s30, 0
      %p392 = por %p390, %p391
      %p393 = scmp.le.s32.totalorder 1, %s24
      %p394 = scmp.lt.s32.totalorder %s24, 3
      %p395 = pnand %p393, %p394
      %p396 = pneg %p395
      // Predicated region
      $region9: #{tpu_custom_call.1} parent=5 // pred_check
        _
      $region10: #{tpu_custom_call.1} parent=5 // pred_check_branch
        %398 = sbr.rel (%p395) target = $region12
      $region11: #{tpu_custom_call.1} parent=5 // pred_region
        %s399 = ssub.s32 %s24, 1
        // Predicated region
        $region13: #{tpu_custom_call.1} parent=11 // pred_check
          %p400 = pneg %p97
        $region14: #{tpu_custom_call.1} parent=11 // pred_check_branch
          %402 = sbr.rel (%p400) target = $region16
        $region15: #{tpu_custom_call.1} parent=11 // pred_region
          _
        $region16: #{tpu_custom_call.1} parent=11 // pred_fallthru
          _
        // Predicated region
        $region17: #{tpu_custom_call.1} parent=11 // pred_check
          %p403 = pneg %p144
        $region18: #{tpu_custom_call.1} parent=11 // pred_check_branch
          %405 = sbr.rel (%p403) target = $region20
        $region19: #{tpu_custom_call.1} parent=11 // pred_region
          _
        $region20: #{tpu_custom_call.1} parent=11 // pred_fallthru
          _
        // Predicated region
        $region21: #{tpu_custom_call.1} parent=11 // pred_check
          %p406 = pneg %p191
        $region22: #{tpu_custom_call.1} parent=11 // pred_check_branch
          %408 = sbr.rel (%p406) target = $region24
        $region23: #{tpu_custom_call.1} parent=11 // pred_region
          _
        $region24: #{tpu_custom_call.1} parent=11 // pred_fallthru
          _
        // Predicated region
        $region25: #{tpu_custom_call.1} parent=11 // pred_check
          %p409 = pneg %p212
        $region26: #{tpu_custom_call.1} parent=11 // pred_check_branch
          %411 = sbr.rel (%p409) target = $region28
        $region27: #{tpu_custom_call.1} parent=11 // pred_region
          _
        $region28: #{tpu_custom_call.1} parent=11 // pred_fallthru
          _
        // Predicated region
        $region29: #{tpu_custom_call.1} parent=11 // pred_check
          %p412 = pneg %p233
        $region30: #{tpu_custom_call.1} parent=11 // pred_check_branch
          %414 = sbr.rel (%p412) target = $region32
        $region31: #{tpu_custom_call.1} parent=11 // pred_region
          _
        $region32: #{tpu_custom_call.1} parent=11 // pred_fallthru
          _
        // Predicated region
        $region33: #{tpu_custom_call.1} parent=11 // pred_check
          %p415 = pneg %p254
        $region34: #{tpu_custom_call.1} parent=11 // pred_check_branch
          %417 = sbr.rel (%p415) target = $region36
        $region35: #{tpu_custom_call.1} parent=11 // pred_region
          _
        $region36: #{tpu_custom_call.1} parent=11 // pred_fallthru
          _
        // Predicated region
        $region37: #{tpu_custom_call.1} parent=11 // pred_check
          %p418 = pneg %p275
        $region38: #{tpu_custom_call.1} parent=11 // pred_check_branch
          %420 = sbr.rel (%p418) target = $region40
        $region39: #{tpu_custom_call.1} parent=11 // pred_region
          _
        $region40: #{tpu_custom_call.1} parent=11 // pred_fallthru
          _
        // Predicated region
        $region41: #{tpu_custom_call.1} parent=11 // pred_check
          %p421 = pneg %p296
        $region42: #{tpu_custom_call.1} parent=11 // pred_check_branch
          %423 = sbr.rel (%p421) target = $region44
        $region43: #{tpu_custom_call.1} parent=11 // pred_region
          _
        $region44: #{tpu_custom_call.1} parent=11 // pred_fallthru
          _
        // Predicated region
        $region45: #{tpu_custom_call.1} parent=11 // pred_check
          %p424 = pneg %p317
        $region46: #{tpu_custom_call.1} parent=11 // pred_check_branch
          %426 = sbr.rel (%p424) target = $region48
        $region47: #{tpu_custom_call.1} parent=11 // pred_region
          _
        $region48: #{tpu_custom_call.1} parent=11 // pred_fallthru
          _
        // Predicated region
        $region49: #{tpu_custom_call.1} parent=11 // pred_check
          %p427 = pneg %p338
        $region50: #{tpu_custom_call.1} parent=11 // pred_check_branch
          %429 = sbr.rel (%p427) target = $region52
        $region51: #{tpu_custom_call.1} parent=11 // pred_region
          _
        $region52: #{tpu_custom_call.1} parent=11 // pred_fallthru
          _
        // Predicated region
        $region53: #{tpu_custom_call.1} parent=11 // pred_check
          %p430 = pneg %p359
        $region54: #{tpu_custom_call.1} parent=11 // pred_check_branch
          %432 = sbr.rel (%p430) target = $region56
        $region55: #{tpu_custom_call.1} parent=11 // pred_region
          _
        $region56: #{tpu_custom_call.1} parent=11 // pred_fallthru
          _
      $region12: #{tpu_custom_call.1} parent=5 // pred_fallthru
        _
      %p433 = scmp.lt.s32.totalorder %s24, 2
      // Predicated region
      $region57: #{tpu_custom_call.1} parent=5 // pred_check
        %p434 = pneg %p433
      $region58: #{tpu_custom_call.1} parent=5 // pred_check_branch
        %436 = sbr.rel (%p434) target = $region60
      $region59: #{tpu_custom_call.1} parent=5 // pred_region
        // Predicated region
        $region61: #{tpu_custom_call.1} parent=59 // pred_check
          %p437 = pneg %p44
        $region62: #{tpu_custom_call.1} parent=59 // pred_check_branch
          %439 = sbr.rel (%p437) target = $region64
        $region63: #{tpu_custom_call.1} parent=59 // pred_region
          %s440 = smul.u32 16, %s24
          %p441 = scmp.lt.s32.totalorder %s440, 31
          %s442 = scalar_select %p441, %s440, 31
          %s443 = smul.addr %s442, 8
          %s444 = scalar_lea.vmem %s0, %s443
          %s445 = smul.u32 16, %s24
        $region64: #{tpu_custom_call.1} parent=59 // pred_fallthru
          _
        // Predicated region
        $region65: #{tpu_custom_call.1} parent=59 // pred_check
          %p446 = pneg %p70
        $region66: #{tpu_custom_call.1} parent=59 // pred_check_branch
          %448 = sbr.rel (%p446) target = $region68
        $region67: #{tpu_custom_call.1} parent=59 // pred_region
          %s449 = smul.u32 32, %s24
          %p450 = scmp.lt.s32.totalorder %s449, 63
          %s451 = scalar_select %p450, %s449, 63
          %s452 = smul.addr %s451, 8
          %s453 = scalar_lea.vmem %s1, %s452
          %s454 = smul.u32 32, %s24
        $region68: #{tpu_custom_call.1} parent=59 // pred_fallthru
          _
        // Predicated region
        $region69: #{tpu_custom_call.1} parent=59 // pred_check
          %p455 = pneg %p117
        $region70: #{tpu_custom_call.1} parent=59 // pred_check_branch
          %457 = sbr.rel (%p455) target = $region72
        $region71: #{tpu_custom_call.1} parent=59 // pred_region
          %s458 = smul.u32 32, %s24
          %p459 = scmp.lt.s32.totalorder %s458, 63
          %s460 = scalar_select %p459, %s458, 63
          %s461 = smul.addr %s460, 8
          %s462 = scalar_lea.vmem %s3, %s461
          %s463 = smul.u32 32, %s24
        $region72: #{tpu_custom_call.1} parent=59 // pred_fallthru
          _
        // Predicated region
        $region73: #{tpu_custom_call.1} parent=59 // pred_check
          %p464 = pneg %p164
        $region74: #{tpu_custom_call.1} parent=59 // pred_check_branch
          %466 = sbr.rel (%p464) target = $region76
        $region75: #{tpu_custom_call.1} parent=59 // pred_region
          %s467 = smul.u32 32, %s24
          %p468 = scmp.lt.s32.totalorder %s467, 63
          %s469 = scalar_select %p468, %s467, 63
          %s470 = smul.addr %s469, 8
          %s471 = scalar_lea.vmem %s5, %s470
          %s472 = smul.u32 32, %s24
        $region76: #{tpu_custom_call.1} parent=59 // pred_fallthru
          _
      $region60: #{tpu_custom_call.1} parent=5 // pred_fallthru
        _
      %p473 = scmp.le.s32.totalorder 1, %s24
      %p474 = scmp.lt.s32.totalorder %s24, 3
      %p475 = pnand %p473, %p474
      %p476 = pneg %p475
      // Predicated region
      $region77: #{tpu_custom_call.1} parent=5 // pred_check
        _
      $region78: #{tpu_custom_call.1} parent=5 // pred_check_branch
        %478 = sbr.rel (%p475) target = $region80
      $region79: #{tpu_custom_call.1} parent=5 // pred_region
        %s479 = ssub.s32 %s24, 1
        %s480 = smul.u32 16, %s29
        %p481 = scmp.lt.s32.totalorder %s480, 31
        %s482 = scalar_select %p481, %s480, 31
        %s483 = smul.addr %s482, 8
        %s484 = scalar_lea.vmem %s0, %s483
        %p485 = pneg %p50
        %p486 = pneg %p47
        %s487 = smul.u32 32, %s29
        %p488 = scmp.lt.s32.totalorder %s487, 63
        %s489 = scalar_select %p488, %s487, 63
        %s490 = smul.addr %s489, 8
        %s491 = scalar_lea.vmem %s1, %s490
        %p492 = pneg %p76
        %p493 = pneg %p73
        %p494 = pneg %p97
        %p495 = pneg %p94
        %s496 = smul.u32 32, %s29
        %p497 = scmp.lt.s32.totalorder %s496, 63
        %s498 = scalar_select %p497, %s496, 63
        %s499 = smul.addr %s498, 8
        %s500 = scalar_lea.vmem %s3, %s499
        %p501 = pneg %p123
        %p502 = pneg %p120
        %p503 = pneg %p144
        %p504 = pneg %p141
        %s505 = smul.u32 32, %s29
        %p506 = scmp.lt.s32.totalorder %s505, 63
        %s507 = scalar_select %p506, %s505, 63
        %s508 = smul.addr %s507, 8
        %s509 = scalar_lea.vmem %s5, %s508
        %p510 = pneg %p170
        %p511 = pneg %p167
        %p512 = pneg %p191
        %p513 = pneg %p188
        %p514 = pneg %p212
        %p515 = pneg %p209
        %p516 = pneg %p233
        %p517 = pneg %p230
        %p518 = pneg %p254
        %p519 = pneg %p251
        %p520 = pneg %p275
        %p521 = pneg %p272
        %p522 = pneg %p296
        %p523 = pneg %p293
        %p524 = pneg %p317
        %p525 = pneg %p314
        %p526 = pneg %p338
        %p527 = pneg %p335
        %p528 = pneg %p359
        %p529 = pneg %p356
        %p530 = pneg %p385
        %p531 = pneg %p382
        %s532 = sand.u32 %s372, 1
        %s533 = scalar_lea.sflag [#allocation3], %s532
        %s534 = sand.u32 %s372, 1
        %s535 = smul.addr %s534, 128
        %s536 = scalar_lea.vmem [#allocation2], %s535
        %s537 = smul.u32 16, %s29
        %p538 = scmp.lt.s32.totalorder %s537, 31
        %s539 = scalar_select %p538, %s537, 31
        %s540 = smul.addr %s539, 8
        %s541 = scalar_lea.vmem %s0, %s540
        %s542 = smul.u32 16, %s29
        %s543 = smul.u32 32, %s29
        %p544 = scmp.lt.s32.totalorder %s543, 63
        %s545 = scalar_select %p544, %s543, 63
        %s546 = smul.addr %s545, 8
        %s547 = scalar_lea.vmem %s1, %s546
        %s548 = smul.u32 32, %s29
        %s549 = smul.u32 32, %s29
        %p550 = scmp.lt.s32.totalorder %s549, 63
        %s551 = scalar_select %p550, %s549, 63
        %s552 = smul.addr %s551, 8
        %s553 = scalar_lea.vmem %s3, %s552
        %s554 = smul.u32 32, %s29
        %s555 = smul.u32 32, %s29
        %p556 = scmp.lt.s32.totalorder %s555, 63
        %s557 = scalar_select %p556, %s555, 63
        %s558 = smul.addr %s557, 8
        %s559 = scalar_lea.vmem %s5, %s558
        %s560 = smul.u32 32, %s29
        %s561 = smul.u32 16, %s29
        %v563 = vld [vmem:[%s541] sm:$0xff]
        %v564 = vld [vmem:[%s541 + $0x8] sm:$0xff]
        %v565 = vld [vmem:[%s541 + $0x10] sm:$0xff]
        %v566 = vld [vmem:[%s541 + $0x18] sm:$0xff]
        %v567 = vld [vmem:[%s541 + $0x20] sm:$0xff]
        %v568 = vld [vmem:[%s541 + $0x28] sm:$0xff]
        %v569 = vld [vmem:[%s541 + $0x30] sm:$0xff]
        %v570 = vld [vmem:[%s541 + $0x38] sm:$0xff]
        %v571 = vld [vmem:[%s541 + $0x40] sm:$0xff]
        %v572 = vld [vmem:[%s541 + $0x48] sm:$0xff]
        %v573 = vld [vmem:[%s541 + $0x50] sm:$0xff]
        %v574 = vld [vmem:[%s541 + $0x58] sm:$0xff]
        %v575 = vld [vmem:[%s541 + $0x60] sm:$0xff]
        %v576 = vld [vmem:[%s541 + $0x68] sm:$0xff]
        %v577 = vld [vmem:[%s541 + $0x70] sm:$0xff]
        %v578 = vld [vmem:[%s541 + $0x78] sm:$0xff]
        %v579 = vld [vmem:[%s7] sm:$0xf]
        %v580 = vld [vmem:[%s7 + $0x4] sm:$0xf]
        %v581 = vld [vmem:[%s7 + $0x8] sm:$0xf]
        %v582 = vld [vmem:[%s7 + $0xc] sm:$0xf]
        %v583 = vld [vmem:[%s7 + $0x10] sm:$0xf]
        %v584 = vld [vmem:[%s7 + $0x14] sm:$0xf]
        %v585 = vld [vmem:[%s7 + $0x18] sm:$0xf]
        %v586 = vld [vmem:[%s7 + $0x1c] sm:$0xf]
        %v587 = vld [vmem:[%s7 + $0x20] sm:$0xf]
        %v588 = vld [vmem:[%s7 + $0x24] sm:$0xf]
        %v589 = vld [vmem:[%s7 + $0x28] sm:$0xf]
        %v590 = vld [vmem:[%s7 + $0x2c] sm:$0xf]
        %v591 = vld [vmem:[%s7 + $0x30] sm:$0xf]
        %v592 = vld [vmem:[%s7 + $0x34] sm:$0xf]
        %v593 = vld [vmem:[%s7 + $0x38] sm:$0xf]
        %v594 = vld [vmem:[%s7 + $0x3c] sm:$0xf]
        %v595 = vpack.c.bf16 %v564, %v563
        %v596 = vpack.c.bf16 %v566, %v565
        %v597 = vpack.c.bf16 %v568, %v567
        %v598 = vpack.c.bf16 %v570, %v569
        %v599 = vpack.c.bf16 %v572, %v571
        %v600 = vpack.c.bf16 %v574, %v573
        %v601 = vpack.c.bf16 %v576, %v575
        %v602 = vpack.c.bf16 %v578, %v577
        %v603 = vld [vmem:[%s8] sm:$0x1]
        %v605 = vlaneseq
        %v606 = vshrl.u32 %v605, 7
        %v607 = vsub.s32 0, %v606
        %v608 = vrot.slane %v603, %v607
        %v626 = vunpack.c.l.b16 %v579
        %v627 = vunpack.c.l.b16 %v580
        %v628 = vunpack.c.l.b16 %v581
        %v629 = vunpack.c.l.b16 %v582
        %v630 = vunpack.c.l.b16 %v583
        %v631 = vunpack.c.l.b16 %v584
        %v632 = vunpack.c.l.b16 %v585
        %v633 = vunpack.c.l.b16 %v586
        %v634 = vunpack.c.l.b16 %v587
        %v635 = vunpack.c.l.b16 %v588
        %v636 = vunpack.c.l.b16 %v589
        %v637 = vunpack.c.l.b16 %v590
        %v638 = vunpack.c.l.b16 %v591
        %v639 = vunpack.c.l.b16 %v592
        %v640 = vunpack.c.l.b16 %v593
        %v641 = vunpack.c.l.b16 %v594
        %v642 = vpack.c.b16 %v627, %v626
        %v643 = vpack.c.b16 %v629, %v628
        %v644 = vpack.c.b16 %v631, %v630
        %v645 = vpack.c.b16 %v633, %v632
        %v646 = vpack.c.b16 %v635, %v634
        %v647 = vpack.c.b16 %v637, %v636
        %v648 = vpack.c.b16 %v639, %v638
        %v649 = vpack.c.b16 %v641, %v640
        %658 = vmatprep.subr.bf16.mxu0 0
        %659 = vmatpush1.bf16.msra.mxu0 %v642
        %660 = vmatprep.subr.bf16.mxu0 0
        %661 = vmatpush1.bf16.msra.mxu0 %v643
        %662 = vmatprep.subr.bf16.mxu0 0
        %663 = vmatpush1.bf16.msra.mxu0 %v644
        %664 = vmatprep.subr.bf16.mxu0 0
        %665 = vmatpush1.bf16.msra.mxu0 %v645
        %666 = vmatprep.subr.bf16.mxu0 0
        %667 = vmatpush1.bf16.msra.mxu0 %v646
        %668 = vmatprep.subr.bf16.mxu0 0
        %669 = vmatpush1.bf16.msra.mxu0 %v647
        %670 = vmatprep.subr.bf16.mxu0 0
        %671 = vmatpush1.bf16.msra.mxu0 %v648
        %672 = vmatprep.subr.bf16.mxu0 0
        %673 = vmatpush1.bf16.msra.mxu0 %v649
        %674 = vmatprep.subr.bf16.mxu0 0
        %675 = vmatpush1.bf16.msra.mxu0 0
        %676 = vmatprep.subr.bf16.mxu0 0
        %677 = vmatpush1.bf16.msra.mxu0 0
        %678 = vmatprep.subr.bf16.mxu0 0
        %679 = vmatpush1.bf16.msra.mxu0 0
        %680 = vmatprep.subr.bf16.mxu0 0
        %681 = vmatpush1.bf16.msra.mxu0 0
        %682 = vmatprep.subr.bf16.mxu0 0
        %683 = vmatpush1.bf16.msra.mxu0 0
        %684 = vmatprep.subr.bf16.mxu0 0
        %685 = vmatpush1.bf16.msra.mxu0 0
        %686 = vmatprep.subr.bf16.mxu0 0
        %687 = vmatpush1.bf16.msra.mxu0 0
        %688 = vmatprep.subr.bf16.mxu0 0
        %689 = vmatpush1.bf16.msra.mxu0 0
        %690 = vmatprep.mubr.bf16.mxu0 0
        %691 = vmatmul.mubr.bf16.gmra.mrb[0].mxu0 %v595
        %v692 = vpop.f32.mrb[0].mxu0
        %v693 = vadd.f32 %v608, %v692
        %v694 = vpop.f32.mrb[0].mxu0
        %v695 = vpop.f32.mrb[0].mxu0
        %v696 = vadd.f32 %v608, %v695
        %v697 = vpop.f32.mrb[0].mxu0
        %698 = vmatprep.mubr.bf16.mxu0 0
        %699 = vmatmul.mubr.bf16.gmra.mrb[0].mxu0 %v596
        %v700 = vpop.f32.mrb[0].mxu0
        %v701 = vadd.f32 %v608, %v700
        %v702 = vpop.f32.mrb[0].mxu0
        %v703 = vpop.f32.mrb[0].mxu0
        %v704 = vadd.f32 %v608, %v703
        %v705 = vpop.f32.mrb[0].mxu0
        %706 = vmatprep.mubr.bf16.mxu0 0
        %707 = vmatmul.mubr.bf16.gmra.mrb[0].mxu0 %v597
        %v708 = vpop.f32.mrb[0].mxu0
        %v709 = vadd.f32 %v608, %v708
        %v710 = vpop.f32.mrb[0].mxu0
        %v711 = vpop.f32.mrb[0].mxu0
        %v712 = vadd.f32 %v608, %v711
        %v713 = vpop.f32.mrb[0].mxu0
        %714 = vmatprep.mubr.bf16.mxu0 0
        %715 = vmatmul.mubr.bf16.gmra.mrb[0].mxu0 %v598
        %v716 = vpop.f32.mrb[0].mxu0
        %v717 = vadd.f32 %v608, %v716
        %v718 = vpop.f32.mrb[0].mxu0
        %v719 = vpop.f32.mrb[0].mxu0
        %v720 = vadd.f32 %v608, %v719
        %v721 = vpop.f32.mrb[0].mxu0
        %722 = vmatprep.mubr.bf16.mxu0 0
        %723 = vmatmul.mubr.bf16.gmra.mrb[0].mxu0 %v599
        %v724 = vpop.f32.mrb[0].mxu0
        %v725 = vadd.f32 %v608, %v724
        %v726 = vpop.f32.mrb[0].mxu0
        %v727 = vpop.f32.mrb[0].mxu0
        %v728 = vadd.f32 %v608, %v727
        %v729 = vpop.f32.mrb[0].mxu0
        %730 = vmatprep.mubr.bf16.mxu0 0
        %731 = vmatmul.mubr.bf16.gmra.mrb[0].mxu0 %v600
        %v732 = vpop.f32.mrb[0].mxu0
        %v733 = vadd.f32 %v608, %v732
        %v734 = vpop.f32.mrb[0].mxu0
        %v735 = vpop.f32.mrb[0].mxu0
        %v736 = vadd.f32 %v608, %v735
        %v737 = vpop.f32.mrb[0].mxu0
        %738 = vmatprep.mubr.bf16.mxu0 0
        %739 = vmatmul.mubr.bf16.gmra.mrb[0].mxu0 %v601
        %v740 = vpop.f32.mrb[0].mxu0
        %v741 = vadd.f32 %v608, %v740
        %v742 = vpop.f32.mrb[0].mxu0
        %v743 = vpop.f32.mrb[0].mxu0
        %v744 = vadd.f32 %v608, %v743
        %v745 = vpop.f32.mrb[0].mxu0
        %746 = vmatprep.mubr.bf16.mxu0 0
        %747 = vmatmul.mubr.bf16.gmra.mrb[0].mxu0 %v602
        %v748 = vpop.f32.mrb[0].mxu0
        %v749 = vadd.f32 %v608, %v748
        %v750 = vpop.f32.mrb[0].mxu0
        %v751 = vpop.f32.mrb[0].mxu0
        %v752 = vadd.f32 %v608, %v751
        %v753 = vpop.f32.mrb[0].mxu0
        %754 = vdwg.mxu0
        %v755 = vmax.f32 %v693, 0.0
        %v756 = vmax.f32 %v696, 0.0
        %v757 = vmax.f32 %v701, 0.0
        %v758 = vmax.f32 %v704, 0.0
        %v759 = vmax.f32 %v709, 0.0
        %v760 = vmax.f32 %v712, 0.0
        %v761 = vmax.f32 %v717, 0.0
        %v762 = vmax.f32 %v720, 0.0
        %v763 = vmax.f32 %v725, 0.0
        %v764 = vmax.f32 %v728, 0.0
        %v765 = vmax.f32 %v733, 0.0
        %v766 = vmax.f32 %v736, 0.0
        %v767 = vmax.f32 %v741, 0.0
        %v768 = vmax.f32 %v744, 0.0
        %v769 = vmax.f32 %v749, 0.0
        %v770 = vmax.f32 %v752, 0.0
        %v771 = vld [vmem:[%s9] sm:$0xf]
        %v772 = vld [vmem:[%s9 + $0x4] sm:$0xf]
        %v773 = vld [vmem:[%s9 + $0x8] sm:$0xf]
        %v774 = vld [vmem:[%s9 + $0xc] sm:$0xf]
        %v775 = vld [vmem:[%s9 + $0x10] sm:$0xf]
        %v776 = vld [vmem:[%s9 + $0x14] sm:$0xf]
        %v777 = vld [vmem:[%s9 + $0x18] sm:$0xf]
        %v778 = vld [vmem:[%s9 + $0x1c] sm:$0xf]
        %v779 = vld [vmem:[%s9 + $0x20] sm:$0xf]
        %v780 = vld [vmem:[%s9 + $0x24] sm:$0xf]
        %v781 = vld [vmem:[%s9 + $0x28] sm:$0xf]
        %v782 = vld [vmem:[%s9 + $0x2c] sm:$0xf]
        %v783 = vld [vmem:[%s9 + $0x30] sm:$0xf]
        %v784 = vld [vmem:[%s9 + $0x34] sm:$0xf]
        %v785 = vld [vmem:[%s9 + $0x38] sm:$0xf]
        %v786 = vld [vmem:[%s9 + $0x3c] sm:$0xf]
        %v787 = vpack.c.bf16 %v756, %v755
        %v788 = vpack.c.bf16 %v758, %v757
        %v789 = vpack.c.bf16 %v760, %v759
        %v790 = vpack.c.bf16 %v762, %v761
        %v791 = vpack.c.bf16 %v764, %v763
        %v792 = vpack.c.bf16 %v766, %v765
        %v793 = vpack.c.bf16 %v768, %v767
        %v794 = vpack.c.bf16 %v770, %v769
        %v795 = vld [vmem:[%s10] sm:$0x1]
        %v797 = vlaneseq
        %v798 = vshrl.u32 %v797, 7
        %v799 = vsub.s32 0, %v798
        %v800 = vrot.slane %v795, %v799
        %v818 = vunpack.c.l.b16 %v771
        %v819 = vunpack.c.l.b16 %v772
        %v820 = vunpack.c.l.b16 %v773
        %v821 = vunpack.c.l.b16 %v774
        %v822 = vunpack.c.l.b16 %v775
        %v823 = vunpack.c.l.b16 %v776
        %v824 = vunpack.c.l.b16 %v777
        %v825 = vunpack.c.l.b16 %v778
        %v826 = vunpack.c.l.b16 %v779
        %v827 = vunpack.c.l.b16 %v780
        %v828 = vunpack.c.l.b16 %v781
        %v829 = vunpack.c.l.b16 %v782
        %v830 = vunpack.c.l.b16 %v783
        %v831 = vunpack.c.l.b16 %v784
        %v832 = vunpack.c.l.b16 %v785
        %v833 = vunpack.c.l.b16 %v786
        %v834 = vpack.c.b16 %v819, %v818
        %v835 = vpack.c.b16 %v821, %v820
        %v836 = vpack.c.b16 %v823, %v822
        %v837 = vpack.c.b16 %v825, %v824
        %v838 = vpack.c.b16 %v827, %v826
        %v839 = vpack.c.b16 %v829, %v828
        %v840 = vpack.c.b16 %v831, %v830
        %v841 = vpack.c.b16 %v833, %v832
        %850 = vmatprep.subr.bf16.mxu0 0
        %851 = vmatpush1.bf16.msra.mxu0 %v834
        %852 = vmatprep.subr.bf16.mxu0 0
        %853 = vmatpush1.bf16.msra.mxu0 %v835
        %854 = vmatprep.subr.bf16.mxu0 0
        %855 = vmatpush1.bf16.msra.mxu0 %v836
        %856 = vmatprep.subr.bf16.mxu0 0
        %857 = vmatpush1.bf16.msra.mxu0 %v837
        %858 = vmatprep.subr.bf16.mxu0 0
        %859 = vmatpush1.bf16.msra.mxu0 %v838
        %860 = vmatprep.subr.bf16.mxu0 0
        %861 = vmatpush1.bf16.msra.mxu0 %v839
        %862 = vmatprep.subr.bf16.mxu0 0
        %863 = vmatpush1.bf16.msra.mxu0 %v840
        %864 = vmatprep.subr.bf16.mxu0 0
        %865 = vmatpush1.bf16.msra.mxu0 %v841
        %866 = vmatprep.subr.bf16.mxu0 0
        %867 = vmatpush1.bf16.msra.mxu0 0
        %868 = vmatprep.subr.bf16.mxu0 0
        %869 = vmatpush1.bf16.msra.mxu0 0
        %870 = vmatprep.subr.bf16.mxu0 0
        %871 = vmatpush1.bf16.msra.mxu0 0
        %872 = vmatprep.subr.bf16.mxu0 0
        %873 = vmatpush1.bf16.msra.mxu0 0
        %874 = vmatprep.subr.bf16.mxu0 0
        %875 = vmatpush1.bf16.msra.mxu0 0
        %876 = vmatprep.subr.bf16.mxu0 0
        %877 = vmatpush1.bf16.msra.mxu0 0
        %878 = vmatprep.subr.bf16.mxu0 0
        %879 = vmatpush1.bf16.msra.mxu0 0
        %880 = vmatprep.subr.bf16.mxu0 0
        %881 = vmatpush1.bf16.msra.mxu0 0
        %882 = vmatprep.mubr.bf16.mxu0 0
        %883 = vmatmul.mubr.bf16.gmra.mrb[0].mxu0 %v787
        %v884 = vpop.f32.mrb[0].mxu0
        %v885 = vadd.f32 %v800, %v884
        %v886 = vpop.f32.mrb[0].mxu0
        %v887 = vpop.f32.mrb[0].mxu0
        %v888 = vadd.f32 %v800, %v887
        %v889 = vpop.f32.mrb[0].mxu0
        %890 = vmatprep.mubr.bf16.mxu0 0
        %891 = vmatmul.mubr.bf16.gmra.mrb[0].mxu0 %v788
        %v892 = vpop.f32.mrb[0].mxu0
        %v893 = vadd.f32 %v800, %v892
        %v894 = vpop.f32.mrb[0].mxu0
        %v895 = vpop.f32.mrb[0].mxu0
        %v896 = vadd.f32 %v800, %v895
        %v897 = vpop.f32.mrb[0].mxu0
        %898 = vmatprep.mubr.bf16.mxu0 0
        %899 = vmatmul.mubr.bf16.gmra.mrb[0].mxu0 %v789
        %v900 = vpop.f32.mrb[0].mxu0
        %v901 = vadd.f32 %v800, %v900
        %v902 = vpop.f32.mrb[0].mxu0
        %v903 = vpop.f32.mrb[0].mxu0
        %v904 = vadd.f32 %v800, %v903
        %v905 = vpop.f32.mrb[0].mxu0
        %906 = vmatprep.mubr.bf16.mxu0 0
        %907 = vmatmul.mubr.bf16.gmra.mrb[0].mxu0 %v790
        %v908 = vpop.f32.mrb[0].mxu0
        %v909 = vadd.f32 %v800, %v908
        %v910 = vpop.f32.mrb[0].mxu0
        %v911 = vpop.f32.mrb[0].mxu0
        %v912 = vadd.f32 %v800, %v911
        %v913 = vpop.f32.mrb[0].mxu0
        %914 = vmatprep.mubr.bf16.mxu0 0
        %915 = vmatmul.mubr.bf16.gmra.mrb[0].mxu0 %v791
        %v916 = vpop.f32.mrb[0].mxu0
        %v917 = vadd.f32 %v800, %v916
        %v918 = vpop.f32.mrb[0].mxu0
        %v919 = vpop.f32.mrb[0].mxu0
        %v920 = vadd.f32 %v800, %v919
        %v921 = vpop.f32.mrb[0].mxu0
        %922 = vmatprep.mubr.bf16.mxu0 0
        %923 = vmatmul.mubr.bf16.gmra.mrb[0].mxu0 %v792
        %v924 = vpop.f32.mrb[0].mxu0
        %v925 = vadd.f32 %v800, %v924
        %v926 = vpop.f32.mrb[0].mxu0
        %v927 = vpop.f32.mrb[0].mxu0
        %v928 = vadd.f32 %v800, %v927
        %v929 = vpop.f32.mrb[0].mxu0
        %930 = vmatprep.mubr.bf16.mxu0 0
        %931 = vmatmul.mubr.bf16.gmra.mrb[0].mxu0 %v793
        %v932 = vpop.f32.mrb[0].mxu0
        %v933 = vadd.f32 %v800, %v932
        %v934 = vpop.f32.mrb[0].mxu0
        %v935 = vpop.f32.mrb[0].mxu0
        %v936 = vadd.f32 %v800, %v935
        %v937 = vpop.f32.mrb[0].mxu0
        %938 = vmatprep.mubr.bf16.mxu0 0
        %939 = vmatmul.mubr.bf16.gmra.mrb[0].mxu0 %v794
        %v940 = vpop.f32.mrb[0].mxu0
        %v941 = vadd.f32 %v800, %v940
        %v942 = vpop.f32.mrb[0].mxu0
        %v943 = vpop.f32.mrb[0].mxu0
        %v944 = vadd.f32 %v800, %v943
        %v945 = vpop.f32.mrb[0].mxu0
        %946 = vdwg.mxu0
        %v947 = vmax.f32 %v885, 0.0
        %v948 = vmax.f32 %v888, 0.0
        %v949 = vmax.f32 %v893, 0.0
        %v950 = vmax.f32 %v896, 0.0
        %v951 = vmax.f32 %v901, 0.0
        %v952 = vmax.f32 %v904, 0.0
        %v953 = vmax.f32 %v909, 0.0
        %v954 = vmax.f32 %v912, 0.0
        %v955 = vmax.f32 %v917, 0.0
        %v956 = vmax.f32 %v920, 0.0
        %v957 = vmax.f32 %v925, 0.0
        %v958 = vmax.f32 %v928, 0.0
        %v959 = vmax.f32 %v933, 0.0
        %v960 = vmax.f32 %v936, 0.0
        %v961 = vmax.f32 %v941, 0.0
        %v962 = vmax.f32 %v944, 0.0
        %v963 = vld [vmem:[%s547] sm:$0xff]
        %v964 = vld [vmem:[%s547 + $0x8] sm:$0xff]
        %v965 = vld [vmem:[%s547 + $0x10] sm:$0xff]
        %v966 = vld [vmem:[%s547 + $0x18] sm:$0xff]
        %v967 = vld [vmem:[%s547 + $0x20] sm:$0xff]
        %v968 = vld [vmem:[%s547 + $0x28] sm:$0xff]
        %v969 = vld [vmem:[%s547 + $0x30] sm:$0xff]
        %v970 = vld [vmem:[%s547 + $0x38] sm:$0xff]
        %v971 = vld [vmem:[%s547 + $0x40] sm:$0xff]
        %v972 = vld [vmem:[%s547 + $0x48] sm:$0xff]
        %v973 = vld [vmem:[%s547 + $0x50] sm:$0xff]
        %v974 = vld [vmem:[%s547 + $0x58] sm:$0xff]
        %v975 = vld [vmem:[%s547 + $0x60] sm:$0xff]
        %v976 = vld [vmem:[%s547 + $0x68] sm:$0xff]
        %v977 = vld [vmem:[%s547 + $0x70] sm:$0xff]
        %v978 = vld [vmem:[%s547 + $0x78] sm:$0xff]
        %v979 = vld [vmem:[%s547 + $0x80] sm:$0xff]
        %v980 = vld [vmem:[%s547 + $0x88] sm:$0xff]
        %v981 = vld [vmem:[%s547 + $0x90] sm:$0xff]
        %v982 = vld [vmem:[%s547 + $0x98] sm:$0xff]
        %v983 = vld [vmem:[%s547 + $0xa0] sm:$0xff]
        %v984 = vld [vmem:[%s547 + $0xa8] sm:$0xff]
        %v985 = vld [vmem:[%s547 + $0xb0] sm:$0xff]
        %v986 = vld [vmem:[%s547 + $0xb8] sm:$0xff]
        %v987 = vld [vmem:[%s547 + $0xc0] sm:$0xff]
        %v988 = vld [vmem:[%s547 + $0xc8] sm:$0xff]
        %v989 = vld [vmem:[%s547 + $0xd0] sm:$0xff]
        %v990 = vld [vmem:[%s547 + $0xd8] sm:$0xff]
        %v991 = vld [vmem:[%s547 + $0xe0] sm:$0xff]
        %v992 = vld [vmem:[%s547 + $0xe8] sm:$0xff]
        %v993 = vld [vmem:[%s547 + $0xf0] sm:$0xff]
        %v994 = vld [vmem:[%s547 + $0xf8] sm:$0xff]
        %v995 = vld [vmem:[%s2] sm:$0xff]
        %v996 = vld [vmem:[%s2 + $0x8] sm:$0xff]
        %v997 = vld [vmem:[%s2 + $0x10] sm:$0xff]
        %v998 = vld [vmem:[%s2 + $0x18] sm:$0xff]
        %v999 = vld [vmem:[%s2 + $0x20] sm:$0xff]
        %v1000 = vld [vmem:[%s2 + $0x28] sm:$0xff]
        %v1001 = vld [vmem:[%s2 + $0x30] sm:$0xff]
        %v1002 = vld [vmem:[%s2 + $0x38] sm:$0xff]
        %v1003 = vld [vmem:[%s2 + $0x40] sm:$0xff]
        %v1004 = vld [vmem:[%s2 + $0x48] sm:$0xff]
        %v1005 = vld [vmem:[%s2 + $0x50] sm:$0xff]
        %v1006 = vld [vmem:[%s2 + $0x58] sm:$0xff]
        %v1007 = vld [vmem:[%s2 + $0x60] sm:$0xff]
        %v1008 = vld [vmem:[%s2 + $0x68] sm:$0xff]
        %v1009 = vld [vmem:[%s2 + $0x70] sm:$0xff]
        %v1010 = vld [vmem:[%s2 + $0x78] sm:$0xff]
        %v1011 = vlaneseq
        %v1012 = vand.u32 %v1011, 127
        %1013 = vset.pattern.permute.xlu0 0
        %1014 = vperm.xlu0 %1013, %v963
        %v1015 = vpop.permute.xlu0 %1014
        %1016 = vset.pattern.permute.xlu0 0
        %1017 = vperm.xlu0 %1016, %v964
        %v1018 = vpop.permute.xlu0 %1017
        %1019 = vset.pattern.permute.xlu0 0
        %1020 = vperm.xlu0 %1019, %v965
        %v1021 = vpop.permute.xlu0 %1020
        %1022 = vset.pattern.permute.xlu0 0
        %1023 = vperm.xlu0 %1022, %v966
        %v1024 = vpop.permute.xlu0 %1023
        %1025 = vset.pattern.permute.xlu0 0
        %1026 = vperm.xlu0 %1025, %v967
        %v1027 = vpop.permute.xlu0 %1026
        %1028 = vset.pattern.permute.xlu0 0
        %1029 = vperm.xlu0 %1028, %v968
        %v1030 = vpop.permute.xlu0 %1029
        %1031 = vset.pattern.permute.xlu0 0
        %1032 = vperm.xlu0 %1031, %v969
        %v1033 = vpop.permute.xlu0 %1032
        %1034 = vset.pattern.permute.xlu0 0
        %1035 = vperm.xlu0 %1034, %v970
        %v1036 = vpop.permute.xlu0 %1035
        %1037 = vset.pattern.permute.xlu0 0
        %1038 = vperm.xlu0 %1037, %v971
        %v1039 = vpop.permute.xlu0 %1038
        %1040 = vset.pattern.permute.xlu0 0
        %1041 = vperm.xlu0 %1040, %v972
        %v1042 = vpop.permute.xlu0 %1041
        %1043 = vset.pattern.permute.xlu0 0
        %1044 = vperm.xlu0 %1043, %v973
        %v1045 = vpop.permute.xlu0 %1044
        %1046 = vset.pattern.permute.xlu0 0
        %1047 = vperm.xlu0 %1046, %v974
        %v1048 = vpop.permute.xlu0 %1047
        %1049 = vset.pattern.permute.xlu0 0
        %1050 = vperm.xlu0 %1049, %v975
        %v1051 = vpop.permute.xlu0 %1050
        %1052 = vset.pattern.permute.xlu0 0
        %1053 = vperm.xlu0 %1052, %v976
        %v1054 = vpop.permute.xlu0 %1053
        %1055 = vset.pattern.permute.xlu0 0
        %1056 = vperm.xlu0 %1055, %v977
        %v1057 = vpop.permute.xlu0 %1056
        %1058 = vset.pattern.permute.xlu0 0
        %1059 = vperm.xlu0 %1058, %v978
        %v1060 = vpop.permute.xlu0 %1059
        %1061 = vset.pattern.permute.xlu0 0
        %1062 = vperm.xlu0 %1061, %v979
        %v1063 = vpop.permute.xlu0 %1062
        %1064 = vset.pattern.permute.xlu0 0
        %1065 = vperm.xlu0 %1064, %v980
        %v1066 = vpop.permute.xlu0 %1065
        %1067 = vset.pattern.permute.xlu0 0
        %1068 = vperm.xlu0 %1067, %v981
        %v1069 = vpop.permute.xlu0 %1068
        %1070 = vset.pattern.permute.xlu0 0
        %1071 = vperm.xlu0 %1070, %v982
        %v1072 = vpop.permute.xlu0 %1071
        %1073 = vset.pattern.permute.xlu0 0
        %1074 = vperm.xlu0 %1073, %v983
        %v1075 = vpop.permute.xlu0 %1074
        %1076 = vset.pattern.permute.xlu0 0
        %1077 = vperm.xlu0 %1076, %v984
        %v1078 = vpop.permute.xlu0 %1077
        %1079 = vset.pattern.permute.xlu0 0
        %1080 = vperm.xlu0 %1079, %v985
        %v1081 = vpop.permute.xlu0 %1080
        %1082 = vset.pattern.permute.xlu0 0
        %1083 = vperm.xlu0 %1082, %v986
        %v1084 = vpop.permute.xlu0 %1083
        %1085 = vset.pattern.permute.xlu0 0
        %1086 = vperm.xlu0 %1085, %v987
        %v1087 = vpop.permute.xlu0 %1086
        %1088 = vset.pattern.permute.xlu0 0
        %1089 = vperm.xlu0 %1088, %v988
        %v1090 = vpop.permute.xlu0 %1089
        %1091 = vset.pattern.permute.xlu0 0
        %1092 = vperm.xlu0 %1091, %v989
        %v1093 = vpop.permute.xlu0 %1092
        %1094 = vset.pattern.permute.xlu0 0
        %1095 = vperm.xlu0 %1094, %v990
        %v1096 = vpop.permute.xlu0 %1095
        %1097 = vset.pattern.permute.xlu0 0
        %1098 = vperm.xlu0 %1097, %v991
        %v1099 = vpop.permute.xlu0 %1098
        %1100 = vset.pattern.permute.xlu0 0
        %1101 = vperm.xlu0 %1100, %v992
        %v1102 = vpop.permute.xlu0 %1101
        %1103 = vset.pattern.permute.xlu0 0
        %1104 = vperm.xlu0 %1103, %v993
        %v1105 = vpop.permute.xlu0 %1104
        %1106 = vset.pattern.permute.xlu0 0
        %1107 = vperm.xlu0 %1106, %v994
        %v1108 = vpop.permute.xlu0 %1107
        %vm1109 = vcmp.eq.s32.totalorder %v1015, %v1012
        %vm1110 = vcmp.eq.s32.totalorder %v1018, %v1012
        %vm1111 = vcmp.eq.s32.totalorder %v1021, %v1012
        %vm1112 = vcmp.eq.s32.totalorder %v1024, %v1012
        %vm1113 = vcmp.eq.s32.totalorder %v1027, %v1012
        %vm1114 = vcmp.eq.s32.totalorder %v1030, %v1012
        %vm1115 = vcmp.eq.s32.totalorder %v1033, %v1012
        %vm1116 = vcmp.eq.s32.totalorder %v1036, %v1012
        %vm1117 = vcmp.eq.s32.totalorder %v1039, %v1012
        %vm1118 = vcmp.eq.s32.totalorder %v1042, %v1012
        %vm1119 = vcmp.eq.s32.totalorder %v1045, %v1012
        %vm1120 = vcmp.eq.s32.totalorder %v1048, %v1012
        %vm1121 = vcmp.eq.s32.totalorder %v1051, %v1012
        %vm1122 = vcmp.eq.s32.totalorder %v1054, %v1012
        %vm1123 = vcmp.eq.s32.totalorder %v1057, %v1012
        %vm1124 = vcmp.eq.s32.totalorder %v1060, %v1012
        %vm1125 = vcmp.eq.s32.totalorder %v1063, %v1012
        %vm1126 = vcmp.eq.s32.totalorder %v1066, %v1012
        %vm1127 = vcmp.eq.s32.totalorder %v1069, %v1012
        %vm1128 = vcmp.eq.s32.totalorder %v1072, %v1012
        %vm1129 = vcmp.eq.s32.totalorder %v1075, %v1012
        %vm1130 = vcmp.eq.s32.totalorder %v1078, %v1012
        %vm1131 = vcmp.eq.s32.totalorder %v1081, %v1012
        %vm1132 = vcmp.eq.s32.totalorder %v1084, %v1012
        %vm1133 = vcmp.eq.s32.totalorder %v1087, %v1012
        %vm1134 = vcmp.eq.s32.totalorder %v1090, %v1012
        %vm1135 = vcmp.eq.s32.totalorder %v1093, %v1012
        %vm1136 = vcmp.eq.s32.totalorder %v1096, %v1012
        %vm1137 = vcmp.eq.s32.totalorder %v1099, %v1012
        %vm1138 = vcmp.eq.s32.totalorder %v1102, %v1012
        %vm1139 = vcmp.eq.s32.totalorder %v1105, %v1012
        %vm1140 = vcmp.eq.s32.totalorder %v1108, %v1012
        %v1141 = vsel %vm1109, 1, 0
        %v1142 = vsel %vm1110, 1, 0
        %v1143 = vsel %vm1111, 1, 0
        %v1144 = vsel %vm1112, 1, 0
        %v1145 = vsel %vm1113, 1, 0
        %v1146 = vsel %vm1114, 1, 0
        %v1147 = vsel %vm1115, 1, 0
        %v1148 = vsel %vm1116, 1, 0
        %v1149 = vsel %vm1117, 1, 0
        %v1150 = vsel %vm1118, 1, 0
        %v1151 = vsel %vm1119, 1, 0
        %v1152 = vsel %vm1120, 1, 0
        %v1153 = vsel %vm1121, 1, 0
        %v1154 = vsel %vm1122, 1, 0
        %v1155 = vsel %vm1123, 1, 0
        %v1156 = vsel %vm1124, 1, 0
        %v1157 = vsel %vm1125, 1, 0
        %v1158 = vsel %vm1126, 1, 0
        %v1159 = vsel %vm1127, 1, 0
        %v1160 = vsel %vm1128, 1, 0
        %v1161 = vsel %vm1129, 1, 0
        %v1162 = vsel %vm1130, 1, 0
        %v1163 = vsel %vm1131, 1, 0
        %v1164 = vsel %vm1132, 1, 0
        %v1165 = vsel %vm1133, 1, 0
        %v1166 = vsel %vm1134, 1, 0
        %v1167 = vsel %vm1135, 1, 0
        %v1168 = vsel %vm1136, 1, 0
        %v1169 = vsel %vm1137, 1, 0
        %v1170 = vsel %vm1138, 1, 0
        %v1171 = vsel %vm1139, 1, 0
        %v1172 = vsel %vm1140, 1, 0
        %v1173 = vcvt.s32.f32 %v1141
        %v1174 = vcvt.s32.f32 %v1142
        %v1175 = vcvt.s32.f32 %v1143
        %v1176 = vcvt.s32.f32 %v1144
        %v1177 = vcvt.s32.f32 %v1145
        %v1178 = vcvt.s32.f32 %v1146
        %v1179 = vcvt.s32.f32 %v1147
        %v1180 = vcvt.s32.f32 %v1148
        %v1181 = vcvt.s32.f32 %v1149
        %v1182 = vcvt.s32.f32 %v1150
        %v1183 = vcvt.s32.f32 %v1151
        %v1184 = vcvt.s32.f32 %v1152
        %v1185 = vcvt.s32.f32 %v1153
        %v1186 = vcvt.s32.f32 %v1154
        %v1187 = vcvt.s32.f32 %v1155
        %v1188 = vcvt.s32.f32 %v1156
        %v1189 = vcvt.s32.f32 %v1157
        %v1190 = vcvt.s32.f32 %v1158
        %v1191 = vcvt.s32.f32 %v1159
        %v1192 = vcvt.s32.f32 %v1160
        %v1193 = vcvt.s32.f32 %v1161
        %v1194 = vcvt.s32.f32 %v1162
        %v1195 = vcvt.s32.f32 %v1163
        %v1196 = vcvt.s32.f32 %v1164
        %v1197 = vcvt.s32.f32 %v1165
        %v1198 = vcvt.s32.f32 %v1166
        %v1199 = vcvt.s32.f32 %v1167
        %v1200 = vcvt.s32.f32 %v1168
        %v1201 = vcvt.s32.f32 %v1169
        %v1202 = vcvt.s32.f32 %v1170
        %v1203 = vcvt.s32.f32 %v1171
        %v1204 = vcvt.s32.f32 %v1172
        %1205 = vmatprep.subr.mxu0 0.0
        %1206 = vmatpush1.msra.mxu0 %v995
        %1207 = vmatprep.subr.mxu0 0.0
        %1208 = vmatpush1.msra.mxu0 %v996
        %1209 = vmatprep.subr.mxu0 0.0
        %1210 = vmatpush1.msra.mxu0 %v997
        %1211 = vmatprep.subr.mxu0 0.0
        %1212 = vmatpush1.msra.mxu0 %v998
        %1213 = vmatprep.subr.mxu0 0.0
        %1214 = vmatpush1.msra.mxu0 %v999
        %1215 = vmatprep.subr.mxu0 0.0
        %1216 = vmatpush1.msra.mxu0 %v1000
        %1217 = vmatprep.subr.mxu0 0.0
        %1218 = vmatpush1.msra.mxu0 %v1001
        %1219 = vmatprep.subr.mxu0 0.0
        %1220 = vmatpush1.msra.mxu0 %v1002
        %1221 = vmatprep.subr.mxu0 0.0
        %1222 = vmatpush1.msra.mxu0 %v1003
        %1223 = vmatprep.subr.mxu0 0.0
        %1224 = vmatpush1.msra.mxu0 %v1004
        %1225 = vmatprep.subr.mxu0 0.0
        %1226 = vmatpush1.msra.mxu0 %v1005
        %1227 = vmatprep.subr.mxu0 0.0
        %1228 = vmatpush1.msra.mxu0 %v1006
        %1229 = vmatprep.subr.mxu0 0.0
        %1230 = vmatpush1.msra.mxu0 %v1007
        %1231 = vmatprep.subr.mxu0 0.0
        %1232 = vmatpush1.msra.mxu0 %v1008
        %1233 = vmatprep.subr.mxu0 0.0
        %1234 = vmatpush1.msra.mxu0 %v1009
        %1235 = vmatprep.subr.mxu0 0.0
        %1236 = vmatpush1.msra.mxu0 %v1010
        %1237 = vmatprep.subr.mxu0 0.0
        %1238 = vmatpush1.msra.mxu0 0.0
        %1239 = vmatprep.subr.mxu0 0.0
        %1240 = vmatpush1.msra.mxu0 0.0
        %1241 = vmatprep.subr.mxu0 0.0
        %1242 = vmatpush1.msra.mxu0 0.0
        %1243 = vmatprep.subr.mxu0 0.0
        %1244 = vmatpush1.msra.mxu0 0.0
        %1245 = vmatprep.subr.mxu0 0.0
        %1246 = vmatpush1.msra.mxu0 0.0
        %1247 = vmatprep.subr.mxu0 0.0
        %1248 = vmatpush1.msra.mxu0 0.0
        %1249 = vmatprep.subr.mxu0 0.0
        %1250 = vmatpush1.msra.mxu0 0.0
        %1251 = vmatprep.subr.mxu0 0.0
        %1252 = vmatpush1.msra.mxu0 0.0
        %1253 = vmatprep.subr.mxu0 0.0
        %1254 = vmatpush1.msra.mxu0 0.0
        %1255 = vmatprep.subr.mxu0 0.0
        %1256 = vmatpush1.msra.mxu0 0.0
        %1257 = vmatprep.subr.mxu0 0.0
        %1258 = vmatpush1.msra.mxu0 0.0
        %1259 = vmatprep.subr.mxu0 0.0
        %1260 = vmatpush1.msra.mxu0 0.0
        %1261 = vmatprep.subr.mxu0 0.0
        %1262 = vmatpush1.msra.mxu0 0.0
        %1263 = vmatprep.subr.mxu0 0.0
        %1264 = vmatpush1.msra.mxu0 0.0
        %1265 = vmatprep.subr.mxu0 0.0
        %1266 = vmatpush1.msra.mxu0 0.0
        %1267 = vmatprep.subr.mxu0 0.0
        %1268 = vmatpush1.msra.mxu0 0.0
        %1269 = vmatprep.mubr.f32.mxu0 0.0
        %1270 = vmatmul.mubr.f32.gmra.mrb[0].mxu0 %v1173
        %v1271 = vpop.f32.mrb[0].mxu0
        %v1272 = vadd.f32 0.0, %v1271
        %v1273 = vpop.f32.mrb[0].mxu0
        %1274 = vmatprep.mubr.f32.mxu0 0.0
        %1275 = vmatmul.mubr.f32.gmra.mrb[0].mxu0 %v1174
        %v1276 = vpop.f32.mrb[0].mxu0
        %v1277 = vadd.f32 0.0, %v1276
        %v1278 = vpop.f32.mrb[0].mxu0
        %1279 = vmatprep.mubr.f32.mxu0 0.0
        %1280 = vmatmul.mubr.f32.gmra.mrb[0].mxu0 %v1175
        %v1281 = vpop.f32.mrb[0].mxu0
        %v1282 = vadd.f32 0.0, %v1281
        %v1283 = vpop.f32.mrb[0].mxu0
        %1284 = vmatprep.mubr.f32.mxu0 0.0
        %1285 = vmatmul.mubr.f32.gmra.mrb[0].mxu0 %v1176
        %v1286 = vpop.f32.mrb[0].mxu0
        %v1287 = vadd.f32 0.0, %v1286
        %v1288 = vpop.f32.mrb[0].mxu0
        %1289 = vmatprep.mubr.f32.mxu0 0.0
        %1290 = vmatmul.mubr.f32.gmra.mrb[0].mxu0 %v1177
        %v1291 = vpop.f32.mrb[0].mxu0
        %v1292 = vadd.f32 0.0, %v1291
        %v1293 = vpop.f32.mrb[0].mxu0
        %1294 = vmatprep.mubr.f32.mxu0 0.0
        %1295 = vmatmul.mubr.f32.gmra.mrb[0].mxu0 %v1178
        %v1296 = vpop.f32.mrb[0].mxu0
        %v1297 = vadd.f32 0.0, %v1296
        %v1298 = vpop.f32.mrb[0].mxu0
        %1299 = vmatprep.mubr.f32.mxu0 0.0
        %1300 = vmatmul.mubr.f32.gmra.mrb[0].mxu0 %v1179
        %v1301 = vpop.f32.mrb[0].mxu0
        %v1302 = vadd.f32 0.0, %v1301
        %v1303 = vpop.f32.mrb[0].mxu0
        %1304 = vmatprep.mubr.f32.mxu0 0.0
        %1305 = vmatmul.mubr.f32.gmra.mrb[0].mxu0 %v1180
        %v1306 = vpop.f32.mrb[0].mxu0
        %v1307 = vadd.f32 0.0, %v1306
        %v1308 = vpop.f32.mrb[0].mxu0
        %1309 = vmatprep.mubr.f32.mxu0 0.0
        %1310 = vmatmul.mubr.f32.gmra.mrb[0].mxu0 %v1181
        %v1311 = vpop.f32.mrb[0].mxu0
        %v1312 = vadd.f32 0.0, %v1311
        %v1313 = vpop.f32.mrb[0].mxu0
        %1314 = vmatprep.mubr.f32.mxu0 0.0
        %1315 = vmatmul.mubr.f32.gmra.mrb[0].mxu0 %v1182
        %v1316 = vpop.f32.mrb[0].mxu0
        %v1317 = vadd.f32 0.0, %v1316
        %v1318 = vpop.f32.mrb[0].mxu0
        %1319 = vmatprep.mubr.f32.mxu0 0.0
        %1320 = vmatmul.mubr.f32.gmra.mrb[0].mxu0 %v1183
        %v1321 = vpop.f32.mrb[0].mxu0
        %v1322 = vadd.f32 0.0, %v1321
        %v1323 = vpop.f32.mrb[0].mxu0
        %1324 = vmatprep.mubr.f32.mxu0 0.0
        %1325 = vmatmul.mubr.f32.gmra.mrb[0].mxu0 %v1184
        %v1326 = vpop.f32.mrb[0].mxu0
        %v1327 = vadd.f32 0.0, %v1326
        %v1328 = vpop.f32.mrb[0].mxu0
        %1329 = vmatprep.mubr.f32.mxu0 0.0
        %1330 = vmatmul.mubr.f32.gmra.mrb[0].mxu0 %v1185
        %v1331 = vpop.f32.mrb[0].mxu0
        %v1332 = vadd.f32 0.0, %v1331
        %v1333 = vpop.f32.mrb[0].mxu0
        %1334 = vmatprep.mubr.f32.mxu0 0.0
        %1335 = vmatmul.mubr.f32.gmra.mrb[0].mxu0 %v1186
        %v1336 = vpop.f32.mrb[0].mxu0
        %v1337 = vadd.f32 0.0, %v1336
        %v1338 = vpop.f32.mrb[0].mxu0
        %1339 = vmatprep.mubr.f32.mxu0 0.0
        %1340 = vmatmul.mubr.f32.gmra.mrb[0].mxu0 %v1187
        %v1341 = vpop.f32.mrb[0].mxu0
        %v1342 = vadd.f32 0.0, %v1341
        %v1343 = vpop.f32.mrb[0].mxu0
        %1344 = vmatprep.mubr.f32.mxu0 0.0
        %1345 = vmatmul.mubr.f32.gmra.mrb[0].mxu0 %v1188
        %v1346 = vpop.f32.mrb[0].mxu0
        %v1347 = vadd.f32 0.0, %v1346
        %v1348 = vpop.f32.mrb[0].mxu0
        %1349 = vmatprep.mubr.f32.mxu0 0.0
        %1350 = vmatmul.mubr.f32.gmra.mrb[0].mxu0 %v1189
        %v1351 = vpop.f32.mrb[0].mxu0
        %v1352 = vadd.f32 0.0, %v1351
        %v1353 = vpop.f32.mrb[0].mxu0
        %1354 = vmatprep.mubr.f32.mxu0 0.0
        %1355 = vmatmul.mubr.f32.gmra.mrb[0].mxu0 %v1190
        %v1356 = vpop.f32.mrb[0].mxu0
        %v1357 = vadd.f32 0.0, %v1356
        %v1358 = vpop.f32.mrb[0].mxu0
        %1359 = vmatprep.mubr.f32.mxu0 0.0
        %1360 = vmatmul.mubr.f32.gmra.mrb[0].mxu0 %v1191
        %v1361 = vpop.f32.mrb[0].mxu0
        %v1362 = vadd.f32 0.0, %v1361
        %v1363 = vpop.f32.mrb[0].mxu0
        %1364 = vmatprep.mubr.f32.mxu0 0.0
        %1365 = vmatmul.mubr.f32.gmra.mrb[0].mxu0 %v1192
        %v1366 = vpop.f32.mrb[0].mxu0
        %v1367 = vadd.f32 0.0, %v1366
        %v1368 = vpop.f32.mrb[0].mxu0
        %1369 = vmatprep.mubr.f32.mxu0 0.0
        %1370 = vmatmul.mubr.f32.gmra.mrb[0].mxu0 %v1193
        %v1371 = vpop.f32.mrb[0].mxu0
        %v1372 = vadd.f32 0.0, %v1371
        %v1373 = vpop.f32.mrb[0].mxu0
        %1374 = vmatprep.mubr.f32.mxu0 0.0
        %1375 = vmatmul.mubr.f32.gmra.mrb[0].mxu0 %v1194
        %v1376 = vpop.f32.mrb[0].mxu0
        %v1377 = vadd.f32 0.0, %v1376
        %v1378 = vpop.f32.mrb[0].mxu0
        %1379 = vmatprep.mubr.f32.mxu0 0.0
        %1380 = vmatmul.mubr.f32.gmra.mrb[0].mxu0 %v1195
        %v1381 = vpop.f32.mrb[0].mxu0
        %v1382 = vadd.f32 0.0, %v1381
        %v1383 = vpop.f32.mrb[0].mxu0
        %1384 = vmatprep.mubr.f32.mxu0 0.0
        %1385 = vmatmul.mubr.f32.gmra.mrb[0].mxu0 %v1196
        %v1386 = vpop.f32.mrb[0].mxu0
        %v1387 = vadd.f32 0.0, %v1386
        %v1388 = vpop.f32.mrb[0].mxu0
        %1389 = vmatprep.mubr.f32.mxu0 0.0
        %1390 = vmatmul.mubr.f32.gmra.mrb[0].mxu0 %v1197
        %v1391 = vpop.f32.mrb[0].mxu0
        %v1392 = vadd.f32 0.0, %v1391
        %v1393 = vpop.f32.mrb[0].mxu0
        %1394 = vmatprep.mubr.f32.mxu0 0.0
        %1395 = vmatmul.mubr.f32.gmra.mrb[0].mxu0 %v1198
        %v1396 = vpop.f32.mrb[0].mxu0
        %v1397 = vadd.f32 0.0, %v1396
        %v1398 = vpop.f32.mrb[0].mxu0
        %1399 = vmatprep.mubr.f32.mxu0 0.0
        %1400 = vmatmul.mubr.f32.gmra.mrb[0].mxu0 %v1199
        %v1401 = vpop.f32.mrb[0].mxu0
        %v1402 = vadd.f32 0.0, %v1401
        %v1403 = vpop.f32.mrb[0].mxu0
        %1404 = vmatprep.mubr.f32.mxu0 0.0
        %1405 = vmatmul.mubr.f32.gmra.mrb[0].mxu0 %v1200
        %v1406 = vpop.f32.mrb[0].mxu0
        %v1407 = vadd.f32 0.0, %v1406
        %v1408 = vpop.f32.mrb[0].mxu0
        %1409 = vmatprep.mubr.f32.mxu0 0.0
        %1410 = vmatmul.mubr.f32.gmra.mrb[0].mxu0 %v1201
        %v1411 = vpop.f32.mrb[0].mxu0
        %v1412 = vadd.f32 0.0, %v1411
        %v1413 = vpop.f32.mrb[0].mxu0
        %1414 = vmatprep.mubr.f32.mxu0 0.0
        %1415 = vmatmul.mubr.f32.gmra.mrb[0].mxu0 %v1202
        %v1416 = vpop.f32.mrb[0].mxu0
        %v1417 = vadd.f32 0.0, %v1416
        %v1418 = vpop.f32.mrb[0].mxu0
        %1419 = vmatprep.mubr.f32.mxu0 0.0
        %1420 = vmatmul.mubr.f32.gmra.mrb[0].mxu0 %v1203
        %v1421 = vpop.f32.mrb[0].mxu0
        %v1422 = vadd.f32 0.0, %v1421
        %v1423 = vpop.f32.mrb[0].mxu0
        %1424 = vmatprep.mubr.f32.mxu0 0.0
        %1425 = vmatmul.mubr.f32.gmra.mrb[0].mxu0 %v1204
        %v1426 = vpop.f32.mrb[0].mxu0
        %v1427 = vadd.f32 0.0, %v1426
        %v1428 = vpop.f32.mrb[0].mxu0
        %1429 = vdwg.mxu0
        %v1430 = vlaneseq
        %v1431 = vshrl.u32 %v1430, 7
        %v1432 = vadd.s32 %v1431, 8
        %v1433 = vadd.s32 %v1431, 16
        %v1434 = vadd.s32 %v1431, 24
        %v1435 = vadd.s32 %v1431, 32
        %v1436 = vadd.s32 %v1431, 40
        %v1437 = vadd.s32 %v1431, 48
        %v1438 = vadd.s32 %v1431, 56
        %v1439 = vadd.s32 %v1431, 64
        %v1440 = vadd.s32 %v1431, 72
        %v1441 = vadd.s32 %v1431, 80
        %v1442 = vadd.s32 %v1431, 88
        %v1443 = vadd.s32 %v1431, 96
        %v1444 = vadd.s32 %v1431, 104
        %v1445 = vadd.s32 %v1431, 112
        %v1446 = vadd.s32 %v1431, 120
        %v1447 = vadd.s32 %v1012, 128
        %v1448 = vmul.u32 %v1431, 2
        %v1449 = vmul.u32 %v1432, 2
        %v1450 = vmul.u32 %v1433, 2
        %v1451 = vmul.u32 %v1434, 2
        %v1452 = vmul.u32 %v1435, 2
        %v1453 = vmul.u32 %v1436, 2
        %v1454 = vmul.u32 %v1437, 2
        %v1455 = vmul.u32 %v1438, 2
        %v1456 = vmul.u32 %v1439, 2
        %v1457 = vmul.u32 %v1440, 2
        %v1458 = vmul.u32 %v1441, 2
        %v1459 = vmul.u32 %v1442, 2
        %v1460 = vmul.u32 %v1443, 2
        %v1461 = vmul.u32 %v1444, 2
        %v1462 = vmul.u32 %v1445, 2
        %v1463 = vmul.u32 %v1446, 2
        %vm1464 = vcmp.ge.s32.totalorder %v1012, %v1448
        %vm1465 = vcmp.ge.s32.totalorder %v1447, %v1448
        %vm1466 = vcmp.ge.s32.totalorder %v1012, %v1449
        %vm1467 = vcmp.ge.s32.totalorder %v1447, %v1449
        %vm1468 = vcmp.ge.s32.totalorder %v1012, %v1450
        %vm1469 = vcmp.ge.s32.totalorder %v1447, %v1450
        %vm1470 = vcmp.ge.s32.totalorder %v1012, %v1451
        %vm1471 = vcmp.ge.s32.totalorder %v1447, %v1451
        %vm1472 = vcmp.ge.s32.totalorder %v1012, %v1452
        %vm1473 = vcmp.ge.s32.totalorder %v1447, %v1452
        %vm1474 = vcmp.ge.s32.totalorder %v1012, %v1453
        %vm1475 = vcmp.ge.s32.totalorder %v1447, %v1453
        %vm1476 = vcmp.ge.s32.totalorder %v1012, %v1454
        %vm1477 = vcmp.ge.s32.totalorder %v1447, %v1454
        %vm1478 = vcmp.ge.s32.totalorder %v1012, %v1455
        %vm1479 = vcmp.ge.s32.totalorder %v1447, %v1455
        %vm1480 = vcmp.ge.s32.totalorder %v1012, %v1456
        %vm1481 = vcmp.ge.s32.totalorder %v1447, %v1456
        %vm1482 = vcmp.ge.s32.totalorder %v1012, %v1457
        %vm1483 = vcmp.ge.s32.totalorder %v1447, %v1457
        %vm1484 = vcmp.ge.s32.totalorder %v1012, %v1458
        %vm1485 = vcmp.ge.s32.totalorder %v1447, %v1458
        %vm1486 = vcmp.ge.s32.totalorder %v1012, %v1459
        %vm1487 = vcmp.ge.s32.totalorder %v1447, %v1459
        %vm1488 = vcmp.ge.s32.totalorder %v1012, %v1460
        %vm1489 = vcmp.ge.s32.totalorder %v1447, %v1460
        %vm1490 = vcmp.ge.s32.totalorder %v1012, %v1461
        %vm1491 = vcmp.ge.s32.totalorder %v1447, %v1461
        %vm1492 = vcmp.ge.s32.totalorder %v1012, %v1462
        %vm1493 = vcmp.ge.s32.totalorder %v1447, %v1462
        %vm1494 = vcmp.ge.s32.totalorder %v1012, %v1463
        %vm1495 = vcmp.ge.s32.totalorder %v1447, %v1463
        %v1496 = vadd.s32 %v1448, 2
        %v1497 = vadd.s32 %v1449, 2
        %v1498 = vadd.s32 %v1450, 2
        %v1499 = vadd.s32 %v1451, 2
        %v1500 = vadd.s32 %v1452, 2
        %v1501 = vadd.s32 %v1453, 2
        %v1502 = vadd.s32 %v1454, 2
        %v1503 = vadd.s32 %v1455, 2
        %v1504 = vadd.s32 %v1456, 2
        %v1505 = vadd.s32 %v1457, 2
        %v1506 = vadd.s32 %v1458, 2
        %v1507 = vadd.s32 %v1459, 2
        %v1508 = vadd.s32 %v1460, 2
        %v1509 = vadd.s32 %v1461, 2
        %v1510 = vadd.s32 %v1462, 2
        %v1511 = vadd.s32 %v1463, 2
        %vm1512 = vcmp.lt.s32.totalorder %v1012, %v1496
        %vm1513 = vcmp.lt.s32.totalorder %v1447, %v1496
        %vm1514 = vcmp.lt.s32.totalorder %v1012, %v1497
        %vm1515 = vcmp.lt.s32.totalorder %v1447, %v1497
        %vm1516 = vcmp.lt.s32.totalorder %v1012, %v1498
        %vm1517 = vcmp.lt.s32.totalorder %v1447, %v1498
        %vm1518 = vcmp.lt.s32.totalorder %v1012, %v1499
        %vm1519 = vcmp.lt.s32.totalorder %v1447, %v1499
        %vm1520 = vcmp.lt.s32.totalorder %v1012, %v1500
        %vm1521 = vcmp.lt.s32.totalorder %v1447, %v1500
        %vm1522 = vcmp.lt.s32.totalorder %v1012, %v1501
        %vm1523 = vcmp.lt.s32.totalorder %v1447, %v1501
        %vm1524 = vcmp.lt.s32.totalorder %v1012, %v1502
        %vm1525 = vcmp.lt.s32.totalorder %v1447, %v1502
        %vm1526 = vcmp.lt.s32.totalorder %v1012, %v1503
        %vm1527 = vcmp.lt.s32.totalorder %v1447, %v1503
        %vm1528 = vcmp.lt.s32.totalorder %v1012, %v1504
        %vm1529 = vcmp.lt.s32.totalorder %v1447, %v1504
        %vm1530 = vcmp.lt.s32.totalorder %v1012, %v1505
        %vm1531 = vcmp.lt.s32.totalorder %v1447, %v1505
        %vm1532 = vcmp.lt.s32.totalorder %v1012, %v1506
        %vm1533 = vcmp.lt.s32.totalorder %v1447, %v1506
        %vm1534 = vcmp.lt.s32.totalorder %v1012, %v1507
        %vm1535 = vcmp.lt.s32.totalorder %v1447, %v1507
        %vm1536 = vcmp.lt.s32.totalorder %v1012, %v1508
        %vm1537 = vcmp.lt.s32.totalorder %v1447, %v1508
        %vm1538 = vcmp.lt.s32.totalorder %v1012, %v1509
        %vm1539 = vcmp.lt.s32.totalorder %v1447, %v1509
        %vm1540 = vcmp.lt.s32.totalorder %v1012, %v1510
        %vm1541 = vcmp.lt.s32.totalorder %v1447, %v1510
        %vm1542 = vcmp.lt.s32.totalorder %v1012, %v1511
        %vm1543 = vcmp.lt.s32.totalorder %v1447, %v1511
        %vm1544 = vmand %vm1464, %vm1512
        %vm1545 = vmand %vm1465, %vm1513
        %vm1546 = vmand %vm1466, %vm1514
        %vm1547 = vmand %vm1467, %vm1515
        %vm1548 = vmand %vm1468, %vm1516
        %vm1549 = vmand %vm1469, %vm1517
        %vm1550 = vmand %vm1470, %vm1518
        %vm1551 = vmand %vm1471, %vm1519
        %vm1552 = vmand %vm1472, %vm1520
        %vm1553 = vmand %vm1473, %vm1521
        %vm1554 = vmand %vm1474, %vm1522
        %vm1555 = vmand %vm1475, %vm1523
        %vm1556 = vmand %vm1476, %vm1524
        %vm1557 = vmand %vm1477, %vm1525
        %vm1558 = vmand %vm1478, %vm1526
        %vm1559 = vmand %vm1479, %vm1527
        %vm1560 = vmand %vm1480, %vm1528
        %vm1561 = vmand %vm1481, %vm1529
        %vm1562 = vmand %vm1482, %vm1530
        %vm1563 = vmand %vm1483, %vm1531
        %vm1564 = vmand %vm1484, %vm1532
        %vm1565 = vmand %vm1485, %vm1533
        %vm1566 = vmand %vm1486, %vm1534
        %vm1567 = vmand %vm1487, %vm1535
        %vm1568 = vmand %vm1488, %vm1536
        %vm1569 = vmand %vm1489, %vm1537
        %vm1570 = vmand %vm1490, %vm1538
        %vm1571 = vmand %vm1491, %vm1539
        %vm1572 = vmand %vm1492, %vm1540
        %vm1573 = vmand %vm1493, %vm1541
        %vm1574 = vmand %vm1494, %vm1542
        %vm1575 = vmand %vm1495, %vm1543
        %v1576 = vsel %vm1544, 1, 0
        %v1577 = vsel %vm1545, 1, 0
        %v1578 = vsel %vm1546, 1, 0
        %v1579 = vsel %vm1547, 1, 0
        %v1580 = vsel %vm1548, 1, 0
        %v1581 = vsel %vm1549, 1, 0
        %v1582 = vsel %vm1550, 1, 0
        %v1583 = vsel %vm1551, 1, 0
        %v1584 = vsel %vm1552, 1, 0
        %v1585 = vsel %vm1553, 1, 0
        %v1586 = vsel %vm1554, 1, 0
        %v1587 = vsel %vm1555, 1, 0
        %v1588 = vsel %vm1556, 1, 0
        %v1589 = vsel %vm1557, 1, 0
        %v1590 = vsel %vm1558, 1, 0
        %v1591 = vsel %vm1559, 1, 0
        %v1592 = vsel %vm1560, 1, 0
        %v1593 = vsel %vm1561, 1, 0
        %v1594 = vsel %vm1562, 1, 0
        %v1595 = vsel %vm1563, 1, 0
        %v1596 = vsel %vm1564, 1, 0
        %v1597 = vsel %vm1565, 1, 0
        %v1598 = vsel %vm1566, 1, 0
        %v1599 = vsel %vm1567, 1, 0
        %v1600 = vsel %vm1568, 1, 0
        %v1601 = vsel %vm1569, 1, 0
        %v1602 = vsel %vm1570, 1, 0
        %v1603 = vsel %vm1571, 1, 0
        %v1604 = vsel %vm1572, 1, 0
        %v1605 = vsel %vm1573, 1, 0
        %v1606 = vsel %vm1574, 1, 0
        %v1607 = vsel %vm1575, 1, 0
        %v1608 = vcvt.s32.f32 %v1576
        %v1609 = vcvt.s32.f32 %v1577
        %v1610 = vcvt.s32.f32 %v1578
        %v1611 = vcvt.s32.f32 %v1579
        %v1612 = vcvt.s32.f32 %v1580
        %v1613 = vcvt.s32.f32 %v1581
        %v1614 = vcvt.s32.f32 %v1582
        %v1615 = vcvt.s32.f32 %v1583
        %v1616 = vcvt.s32.f32 %v1584
        %v1617 = vcvt.s32.f32 %v1585
        %v1618 = vcvt.s32.f32 %v1586
        %v1619 = vcvt.s32.f32 %v1587
        %v1620 = vcvt.s32.f32 %v1588
        %v1621 = vcvt.s32.f32 %v1589
        %v1622 = vcvt.s32.f32 %v1590
        %v1623 = vcvt.s32.f32 %v1591
        %v1624 = vcvt.s32.f32 %v1592
        %v1625 = vcvt.s32.f32 %v1593
        %v1626 = vcvt.s32.f32 %v1594
        %v1627 = vcvt.s32.f32 %v1595
        %v1628 = vcvt.s32.f32 %v1596
        %v1629 = vcvt.s32.f32 %v1597
        %v1630 = vcvt.s32.f32 %v1598
        %v1631 = vcvt.s32.f32 %v1599
        %v1632 = vcvt.s32.f32 %v1600
        %v1633 = vcvt.s32.f32 %v1601
        %v1634 = vcvt.s32.f32 %v1602
        %v1635 = vcvt.s32.f32 %v1603
        %v1636 = vcvt.s32.f32 %v1604
        %v1637 = vcvt.s32.f32 %v1605
        %v1638 = vcvt.s32.f32 %v1606
        %v1639 = vcvt.s32.f32 %v1607
        %1640 = vmatprep.subr.mxu0 0.0
        %1641 = vmatpush1.msra.mxu0 %v1272
        %1642 = vmatprep.subr.mxu0 0.0
        %1643 = vmatpush1.msra.mxu0 %v1277
        %1644 = vmatprep.subr.mxu0 0.0
        %1645 = vmatpush1.msra.mxu0 %v1282
        %1646 = vmatprep.subr.mxu0 0.0
        %1647 = vmatpush1.msra.mxu0 %v1287
        %1648 = vmatprep.subr.mxu0 0.0
        %1649 = vmatpush1.msra.mxu0 %v1292
        %1650 = vmatprep.subr.mxu0 0.0
        %1651 = vmatpush1.msra.mxu0 %v1297
        %1652 = vmatprep.subr.mxu0 0.0
        %1653 = vmatpush1.msra.mxu0 %v1302
        %1654 = vmatprep.subr.mxu0 0.0
        %1655 = vmatpush1.msra.mxu0 %v1307
        %1656 = vmatprep.subr.mxu0 0.0
        %1657 = vmatpush1.msra.mxu0 %v1312
        %1658 = vmatprep.subr.mxu0 0.0
        %1659 = vmatpush1.msra.mxu0 %v1317
        %1660 = vmatprep.subr.mxu0 0.0
        %1661 = vmatpush1.msra.mxu0 %v1322
        %1662 = vmatprep.subr.mxu0 0.0
        %1663 = vmatpush1.msra.mxu0 %v1327
        %1664 = vmatprep.subr.mxu0 0.0
        %1665 = vmatpush1.msra.mxu0 %v1332
        %1666 = vmatprep.subr.mxu0 0.0
        %1667 = vmatpush1.msra.mxu0 %v1337
        %1668 = vmatprep.subr.mxu0 0.0
        %1669 = vmatpush1.msra.mxu0 %v1342
        %1670 = vmatprep.subr.mxu0 0.0
        %1671 = vmatpush1.msra.mxu0 %v1347
        %1672 = vmatprep.subr.mxu0 0.0
        %1673 = vmatpush1.msra.mxu0 %v1352
        %1674 = vmatprep.subr.mxu0 0.0
        %1675 = vmatpush1.msra.mxu0 %v1357
        %1676 = vmatprep.subr.mxu0 0.0
        %1677 = vmatpush1.msra.mxu0 %v1362
        %1678 = vmatprep.subr.mxu0 0.0
        %1679 = vmatpush1.msra.mxu0 %v1367
        %1680 = vmatprep.subr.mxu0 0.0
        %1681 = vmatpush1.msra.mxu0 %v1372
        %1682 = vmatprep.subr.mxu0 0.0
        %1683 = vmatpush1.msra.mxu0 %v1377
        %1684 = vmatprep.subr.mxu0 0.0
        %1685 = vmatpush1.msra.mxu0 %v1382
        %1686 = vmatprep.subr.mxu0 0.0
        %1687 = vmatpush1.msra.mxu0 %v1387
        %1688 = vmatprep.subr.mxu0 0.0
        %1689 = vmatpush1.msra.mxu0 %v1392
        %1690 = vmatprep.subr.mxu0 0.0
        %1691 = vmatpush1.msra.mxu0 %v1397
        %1692 = vmatprep.subr.mxu0 0.0
        %1693 = vmatpush1.msra.mxu0 %v1402
        %1694 = vmatprep.subr.mxu0 0.0
        %1695 = vmatpush1.msra.mxu0 %v1407
        %1696 = vmatprep.subr.mxu0 0.0
        %1697 = vmatpush1.msra.mxu0 %v1412
        %1698 = vmatprep.subr.mxu0 0.0
        %1699 = vmatpush1.msra.mxu0 %v1417
        %1700 = vmatprep.subr.mxu0 0.0
        %1701 = vmatpush1.msra.mxu0 %v1422
        %1702 = vmatprep.subr.mxu0 0.0
        %1703 = vmatpush1.msra.mxu0 %v1427
        %1704 = vmatprep.mubr.f32.mxu0 %v1609
        %1705 = vmatmul.mubr.f32.gmra.mrb[0].mxu0 %v1608
        %v1706 = vpop.f32.mrb[0].mxu0
        %v1707 = vadd.f32 0.0, %v1706
        %v1708 = vpop.f32.mrb[0].mxu0
        %1709 = vmatprep.mubr.f32.mxu0 %v1611
        %1710 = vmatmul.mubr.f32.gmra.mrb[0].mxu0 %v1610
        %v1711 = vpop.f32.mrb[0].mxu0
        %v1712 = vadd.f32 0.0, %v1711
        %v1713 = vpop.f32.mrb[0].mxu0
        %1714 = vmatprep.mubr.f32.mxu0 %v1613
        %1715 = vmatmul.mubr.f32.gmra.mrb[0].mxu0 %v1612
        %v1716 = vpop.f32.mrb[0].mxu0
        %v1717 = vadd.f32 0.0, %v1716
        %v1718 = vpop.f32.mrb[0].mxu0
        %1719 = vmatprep.mubr.f32.mxu0 %v1615
        %1720 = vmatmul.mubr.f32.gmra.mrb[0].mxu0 %v1614
        %v1721 = vpop.f32.mrb[0].mxu0
        %v1722 = vadd.f32 0.0, %v1721
        %v1723 = vpop.f32.mrb[0].mxu0
        %1724 = vmatprep.mubr.f32.mxu0 %v1617
        %1725 = vmatmul.mubr.f32.gmra.mrb[0].mxu0 %v1616
        %v1726 = vpop.f32.mrb[0].mxu0
        %v1727 = vadd.f32 0.0, %v1726
        %v1728 = vpop.f32.mrb[0].mxu0
        %1729 = vmatprep.mubr.f32.mxu0 %v1619
        %1730 = vmatmul.mubr.f32.gmra.mrb[0].mxu0 %v1618
        %v1731 = vpop.f32.mrb[0].mxu0
        %v1732 = vadd.f32 0.0, %v1731
        %v1733 = vpop.f32.mrb[0].mxu0
        %1734 = vmatprep.mubr.f32.mxu0 %v1621
        %1735 = vmatmul.mubr.f32.gmra.mrb[0].mxu0 %v1620
        %v1736 = vpop.f32.mrb[0].mxu0
        %v1737 = vadd.f32 0.0, %v1736
        %v1738 = vpop.f32.mrb[0].mxu0
        %1739 = vmatprep.mubr.f32.mxu0 %v1623
        %1740 = vmatmul.mubr.f32.gmra.mrb[0].mxu0 %v1622
        %v1741 = vpop.f32.mrb[0].mxu0
        %v1742 = vadd.f32 0.0, %v1741
        %v1743 = vpop.f32.mrb[0].mxu0
        %1744 = vmatprep.mubr.f32.mxu0 %v1625
        %1745 = vmatmul.mubr.f32.gmra.mrb[0].mxu0 %v1624
        %v1746 = vpop.f32.mrb[0].mxu0
        %v1747 = vadd.f32 0.0, %v1746
        %v1748 = vpop.f32.mrb[0].mxu0
        %1749 = vmatprep.mubr.f32.mxu0 %v1627
        %1750 = vmatmul.mubr.f32.gmra.mrb[0].mxu0 %v1626
        %v1751 = vpop.f32.mrb[0].mxu0
        %v1752 = vadd.f32 0.0, %v1751
        %v1753 = vpop.f32.mrb[0].mxu0
        %1754 = vmatprep.mubr.f32.mxu0 %v1629
        %1755 = vmatmul.mubr.f32.gmra.mrb[0].mxu0 %v1628
        %v1756 = vpop.f32.mrb[0].mxu0
        %v1757 = vadd.f32 0.0, %v1756
        %v1758 = vpop.f32.mrb[0].mxu0
        %1759 = vmatprep.mubr.f32.mxu0 %v1631
        %1760 = vmatmul.mubr.f32.gmra.mrb[0].mxu0 %v1630
        %v1761 = vpop.f32.mrb[0].mxu0
        %v1762 = vadd.f32 0.0, %v1761
        %v1763 = vpop.f32.mrb[0].mxu0
        %1764 = vmatprep.mubr.f32.mxu0 %v1633
        %1765 = vmatmul.mubr.f32.gmra.mrb[0].mxu0 %v1632
        %v1766 = vpop.f32.mrb[0].mxu0
        %v1767 = vadd.f32 0.0, %v1766
        %v1768 = vpop.f32.mrb[0].mxu0
        %1769 = vmatprep.mubr.f32.mxu0 %v1635
        %1770 = vmatmul.mubr.f32.gmra.mrb[0].mxu0 %v1634
        %v1771 = vpop.f32.mrb[0].mxu0
        %v1772 = vadd.f32 0.0, %v1771
        %v1773 = vpop.f32.mrb[0].mxu0
        %1774 = vmatprep.mubr.f32.mxu0 %v1637
        %1775 = vmatmul.mubr.f32.gmra.mrb[0].mxu0 %v1636
        %v1776 = vpop.f32.mrb[0].mxu0
        %v1777 = vadd.f32 0.0, %v1776
        %v1778 = vpop.f32.mrb[0].mxu0
        %1779 = vmatprep.mubr.f32.mxu0 %v1639
        %1780 = vmatmul.mubr.f32.gmra.mrb[0].mxu0 %v1638
        %v1781 = vpop.f32.mrb[0].mxu0
        %v1782 = vadd.f32 0.0, %v1781
        %v1783 = vpop.f32.mrb[0].mxu0
        %1784 = vdwg.mxu0
        %v1785 = vld [vmem:[%s553] sm:$0xff]
        %v1786 = vld [vmem:[%s553 + $0x8] sm:$0xff]
        %v1787 = vld [vmem:[%s553 + $0x10] sm:$0xff]
        %v1788 = vld [vmem:[%s553 + $0x18] sm:$0xff]
        %v1789 = vld [vmem:[%s553 + $0x20] sm:$0xff]
        %v1790 = vld [vmem:[%s553 + $0x28] sm:$0xff]
        %v1791 = vld [vmem:[%s553 + $0x30] sm:$0xff]
        %v1792 = vld [vmem:[%s553 + $0x38] sm:$0xff]
        %v1793 = vld [vmem:[%s553 + $0x40] sm:$0xff]
        %v1794 = vld [vmem:[%s553 + $0x48] sm:$0xff]
        %v1795 = vld [vmem:[%s553 + $0x50] sm:$0xff]
        %v1796 = vld [vmem:[%s553 + $0x58] sm:$0xff]
        %v1797 = vld [vmem:[%s553 + $0x60] sm:$0xff]
        %v1798 = vld [vmem:[%s553 + $0x68] sm:$0xff]
        %v1799 = vld [vmem:[%s553 + $0x70] sm:$0xff]
        %v1800 = vld [vmem:[%s553 + $0x78] sm:$0xff]
        %v1801 = vld [vmem:[%s553 + $0x80] sm:$0xff]
        %v1802 = vld [vmem:[%s553 + $0x88] sm:$0xff]
        %v1803 = vld [vmem:[%s553 + $0x90] sm:$0xff]
        %v1804 = vld [vmem:[%s553 + $0x98] sm:$0xff]
        %v1805 = vld [vmem:[%s553 + $0xa0] sm:$0xff]
        %v1806 = vld [vmem:[%s553 + $0xa8] sm:$0xff]
        %v1807 = vld [vmem:[%s553 + $0xb0] sm:$0xff]
        %v1808 = vld [vmem:[%s553 + $0xb8] sm:$0xff]
        %v1809 = vld [vmem:[%s553 + $0xc0] sm:$0xff]
        %v1810 = vld [vmem:[%s553 + $0xc8] sm:$0xff]
        %v1811 = vld [vmem:[%s553 + $0xd0] sm:$0xff]
        %v1812 = vld [vmem:[%s553 + $0xd8] sm:$0xff]
        %v1813 = vld [vmem:[%s553 + $0xe0] sm:$0xff]
        %v1814 = vld [vmem:[%s553 + $0xe8] sm:$0xff]
        %v1815 = vld [vmem:[%s553 + $0xf0] sm:$0xff]
        %v1816 = vld [vmem:[%s553 + $0xf8] sm:$0xff]
        %v1817 = vld [vmem:[%s4] sm:$0xff]
        %v1818 = vld [vmem:[%s4 + $0x8] sm:$0xff]
        %v1819 = vld [vmem:[%s4 + $0x10] sm:$0xff]
        %v1820 = vld [vmem:[%s4 + $0x18] sm:$0xff]
        %v1821 = vld [vmem:[%s4 + $0x20] sm:$0xff]
        %v1822 = vld [vmem:[%s4 + $0x28] sm:$0xff]
        %v1823 = vld [vmem:[%s4 + $0x30] sm:$0xff]
        %v1824 = vld [vmem:[%s4 + $0x38] sm:$0xff]
        %v1825 = vld [vmem:[%s4 + $0x40] sm:$0xff]
        %v1826 = vld [vmem:[%s4 + $0x48] sm:$0xff]
        %v1827 = vld [vmem:[%s4 + $0x50] sm:$0xff]
        %v1828 = vld [vmem:[%s4 + $0x58] sm:$0xff]
        %v1829 = vld [vmem:[%s4 + $0x60] sm:$0xff]
        %v1830 = vld [vmem:[%s4 + $0x68] sm:$0xff]
        %v1831 = vld [vmem:[%s4 + $0x70] sm:$0xff]
        %v1832 = vld [vmem:[%s4 + $0x78] sm:$0xff]
        %1833 = vset.pattern.permute.xlu0 0
        %1834 = vperm.xlu0 %1833, %v1785
        %v1835 = vpop.permute.xlu0 %1834
        %1836 = vset.pattern.permute.xlu0 0
        %1837 = vperm.xlu0 %1836, %v1786
        %v1838 = vpop.permute.xlu0 %1837
        %1839 = vset.pattern.permute.xlu0 0
        %1840 = vperm.xlu0 %1839, %v1787
        %v1841 = vpop.permute.xlu0 %1840
        %1842 = vset.pattern.permute.xlu0 0
        %1843 = vperm.xlu0 %1842, %v1788
        %v1844 = vpop.permute.xlu0 %1843
        %1845 = vset.pattern.permute.xlu0 0
        %1846 = vperm.xlu0 %1845, %v1789
        %v1847 = vpop.permute.xlu0 %1846
        %1848 = vset.pattern.permute.xlu0 0
        %1849 = vperm.xlu0 %1848, %v1790
        %v1850 = vpop.permute.xlu0 %1849
        %1851 = vset.pattern.permute.xlu0 0
        %1852 = vperm.xlu0 %1851, %v1791
        %v1853 = vpop.permute.xlu0 %1852
        %1854 = vset.pattern.permute.xlu0 0
        %1855 = vperm.xlu0 %1854, %v1792
        %v1856 = vpop.permute.xlu0 %1855
        %1857 = vset.pattern.permute.xlu0 0
        %1858 = vperm.xlu0 %1857, %v1793
        %v1859 = vpop.permute.xlu0 %1858
        %1860 = vset.pattern.permute.xlu0 0
        %1861 = vperm.xlu0 %1860, %v1794
        %v1862 = vpop.permute.xlu0 %1861
        %1863 = vset.pattern.permute.xlu0 0
        %1864 = vperm.xlu0 %1863, %v1795
        %v1865 = vpop.permute.xlu0 %1864
        %1866 = vset.pattern.permute.xlu0 0
        %1867 = vperm.xlu0 %1866, %v1796
        %v1868 = vpop.permute.xlu0 %1867
        %1869 = vset.pattern.permute.xlu0 0
        %1870 = vperm.xlu0 %1869, %v1797
        %v1871 = vpop.permute.xlu0 %1870
        %1872 = vset.pattern.permute.xlu0 0
        %1873 = vperm.xlu0 %1872, %v1798
        %v1874 = vpop.permute.xlu0 %1873
        %1875 = vset.pattern.permute.xlu0 0
        %1876 = vperm.xlu0 %1875, %v1799
        %v1877 = vpop.permute.xlu0 %1876
        %1878 = vset.pattern.permute.xlu0 0
        %1879 = vperm.xlu0 %1878, %v1800
        %v1880 = vpop.permute.xlu0 %1879
        %1881 = vset.pattern.permute.xlu0 0
        %1882 = vperm.xlu0 %1881, %v1801
        %v1883 = vpop.permute.xlu0 %1882
        %1884 = vset.pattern.permute.xlu0 0
        %1885 = vperm.xlu0 %1884, %v1802
        %v1886 = vpop.permute.xlu0 %1885
        %1887 = vset.pattern.permute.xlu0 0
        %1888 = vperm.xlu0 %1887, %v1803
        %v1889 = vpop.permute.xlu0 %1888
        %1890 = vset.pattern.permute.xlu0 0
        %1891 = vperm.xlu0 %1890, %v1804
        %v1892 = vpop.permute.xlu0 %1891
        %1893 = vset.pattern.permute.xlu0 0
        %1894 = vperm.xlu0 %1893, %v1805
        %v1895 = vpop.permute.xlu0 %1894
        %1896 = vset.pattern.permute.xlu0 0
        %1897 = vperm.xlu0 %1896, %v1806
        %v1898 = vpop.permute.xlu0 %1897
        %1899 = vset.pattern.permute.xlu0 0
        %1900 = vperm.xlu0 %1899, %v1807
        %v1901 = vpop.permute.xlu0 %1900
        %1902 = vset.pattern.permute.xlu0 0
        %1903 = vperm.xlu0 %1902, %v1808
        %v1904 = vpop.permute.xlu0 %1903
        %1905 = vset.pattern.permute.xlu0 0
        %1906 = vperm.xlu0 %1905, %v1809
        %v1907 = vpop.permute.xlu0 %1906
        %1908 = vset.pattern.permute.xlu0 0
        %1909 = vperm.xlu0 %1908, %v1810
        %v1910 = vpop.permute.xlu0 %1909
        %1911 = vset.pattern.permute.xlu0 0
        %1912 = vperm.xlu0 %1911, %v1811
        %v1913 = vpop.permute.xlu0 %1912
        %1914 = vset.pattern.permute.xlu0 0
        %1915 = vperm.xlu0 %1914, %v1812
        %v1916 = vpop.permute.xlu0 %1915
        %1917 = vset.pattern.permute.xlu0 0
        %1918 = vperm.xlu0 %1917, %v1813
        %v1919 = vpop.permute.xlu0 %1918
        %1920 = vset.pattern.permute.xlu0 0
        %1921 = vperm.xlu0 %1920, %v1814
        %v1922 = vpop.permute.xlu0 %1921
        %1923 = vset.pattern.permute.xlu0 0
        %1924 = vperm.xlu0 %1923, %v1815
        %v1925 = vpop.permute.xlu0 %1924
        %1926 = vset.pattern.permute.xlu0 0
        %1927 = vperm.xlu0 %1926, %v1816
        %v1928 = vpop.permute.xlu0 %1927
        %vm1929 = vcmp.eq.s32.totalorder %v1835, %v1012
        %vm1930 = vcmp.eq.s32.totalorder %v1838, %v1012
        %vm1931 = vcmp.eq.s32.totalorder %v1841, %v1012
        %vm1932 = vcmp.eq.s32.totalorder %v1844, %v1012
        %vm1933 = vcmp.eq.s32.totalorder %v1847, %v1012
        %vm1934 = vcmp.eq.s32.totalorder %v1850, %v1012
        %vm1935 = vcmp.eq.s32.totalorder %v1853, %v1012
        %vm1936 = vcmp.eq.s32.totalorder %v1856, %v1012
        %vm1937 = vcmp.eq.s32.totalorder %v1859, %v1012
        %vm1938 = vcmp.eq.s32.totalorder %v1862, %v1012
        %vm1939 = vcmp.eq.s32.totalorder %v1865, %v1012
        %vm1940 = vcmp.eq.s32.totalorder %v1868, %v1012
        %vm1941 = vcmp.eq.s32.totalorder %v1871, %v1012
        %vm1942 = vcmp.eq.s32.totalorder %v1874, %v1012
        %vm1943 = vcmp.eq.s32.totalorder %v1877, %v1012
        %vm1944 = vcmp.eq.s32.totalorder %v1880, %v1012
        %vm1945 = vcmp.eq.s32.totalorder %v1883, %v1012
        %vm1946 = vcmp.eq.s32.totalorder %v1886, %v1012
        %vm1947 = vcmp.eq.s32.totalorder %v1889, %v1012
        %vm1948 = vcmp.eq.s32.totalorder %v1892, %v1012
        %vm1949 = vcmp.eq.s32.totalorder %v1895, %v1012
        %vm1950 = vcmp.eq.s32.totalorder %v1898, %v1012
        %vm1951 = vcmp.eq.s32.totalorder %v1901, %v1012
        %vm1952 = vcmp.eq.s32.totalorder %v1904, %v1012
        %vm1953 = vcmp.eq.s32.totalorder %v1907, %v1012
        %vm1954 = vcmp.eq.s32.totalorder %v1910, %v1012
        %vm1955 = vcmp.eq.s32.totalorder %v1913, %v1012
        %vm1956 = vcmp.eq.s32.totalorder %v1916, %v1012
        %vm1957 = vcmp.eq.s32.totalorder %v1919, %v1012
        %vm1958 = vcmp.eq.s32.totalorder %v1922, %v1012
        %vm1959 = vcmp.eq.s32.totalorder %v1925, %v1012
        %vm1960 = vcmp.eq.s32.totalorder %v1928, %v1012
        %v1961 = vsel %vm1929, 1, 0
        %v1962 = vsel %vm1930, 1, 0
        %v1963 = vsel %vm1931, 1, 0
        %v1964 = vsel %vm1932, 1, 0
        %v1965 = vsel %vm1933, 1, 0
        %v1966 = vsel %vm1934, 1, 0
        %v1967 = vsel %vm1935, 1, 0
        %v1968 = vsel %vm1936, 1, 0
        %v1969 = vsel %vm1937, 1, 0
        %v1970 = vsel %vm1938, 1, 0
        %v1971 = vsel %vm1939, 1, 0
        %v1972 = vsel %vm1940, 1, 0
        %v1973 = vsel %vm1941, 1, 0
        %v1974 = vsel %vm1942, 1, 0
        %v1975 = vsel %vm1943, 1, 0
        %v1976 = vsel %vm1944, 1, 0
        %v1977 = vsel %vm1945, 1, 0
        %v1978 = vsel %vm1946, 1, 0
        %v1979 = vsel %vm1947, 1, 0
        %v1980 = vsel %vm1948, 1, 0
        %v1981 = vsel %vm1949, 1, 0
        %v1982 = vsel %vm1950, 1, 0
        %v1983 = vsel %vm1951, 1, 0
        %v1984 = vsel %vm1952, 1, 0
        %v1985 = vsel %vm1953, 1, 0
        %v1986 = vsel %vm1954, 1, 0
        %v1987 = vsel %vm1955, 1, 0
        %v1988 = vsel %vm1956, 1, 0
        %v1989 = vsel %vm1957, 1, 0
        %v1990 = vsel %vm1958, 1, 0
        %v1991 = vsel %vm1959, 1, 0
        %v1992 = vsel %vm1960, 1, 0
        %v1993 = vcvt.s32.f32 %v1961
        %v1994 = vcvt.s32.f32 %v1962
        %v1995 = vcvt.s32.f32 %v1963
        %v1996 = vcvt.s32.f32 %v1964
        %v1997 = vcvt.s32.f32 %v1965
        %v1998 = vcvt.s32.f32 %v1966
        %v1999 = vcvt.s32.f32 %v1967
        %v2000 = vcvt.s32.f32 %v1968
        %v2001 = vcvt.s32.f32 %v1969
        %v2002 = vcvt.s32.f32 %v1970
        %v2003 = vcvt.s32.f32 %v1971
        %v2004 = vcvt.s32.f32 %v1972
        %v2005 = vcvt.s32.f32 %v1973
        %v2006 = vcvt.s32.f32 %v1974
        %v2007 = vcvt.s32.f32 %v1975
        %v2008 = vcvt.s32.f32 %v1976
        %v2009 = vcvt.s32.f32 %v1977
        %v2010 = vcvt.s32.f32 %v1978
        %v2011 = vcvt.s32.f32 %v1979
        %v2012 = vcvt.s32.f32 %v1980
        %v2013 = vcvt.s32.f32 %v1981
        %v2014 = vcvt.s32.f32 %v1982
        %v2015 = vcvt.s32.f32 %v1983
        %v2016 = vcvt.s32.f32 %v1984
        %v2017 = vcvt.s32.f32 %v1985
        %v2018 = vcvt.s32.f32 %v1986
        %v2019 = vcvt.s32.f32 %v1987
        %v2020 = vcvt.s32.f32 %v1988
        %v2021 = vcvt.s32.f32 %v1989
        %v2022 = vcvt.s32.f32 %v1990
        %v2023 = vcvt.s32.f32 %v1991
        %v2024 = vcvt.s32.f32 %v1992
        %2025 = vmatprep.subr.mxu0 0.0
        %2026 = vmatpush1.msra.mxu0 %v1817
        %2027 = vmatprep.subr.mxu0 0.0
        %2028 = vmatpush1.msra.mxu0 %v1818
        %2029 = vmatprep.subr.mxu0 0.0
        %2030 = vmatpush1.msra.mxu0 %v1819
        %2031 = vmatprep.subr.mxu0 0.0
        %2032 = vmatpush1.msra.mxu0 %v1820
        %2033 = vmatprep.subr.mxu0 0.0
        %2034 = vmatpush1.msra.mxu0 %v1821
        %2035 = vmatprep.subr.mxu0 0.0
        %2036 = vmatpush1.msra.mxu0 %v1822
        %2037 = vmatprep.subr.mxu0 0.0
        %2038 = vmatpush1.msra.mxu0 %v1823
        %2039 = vmatprep.subr.mxu0 0.0
        %2040 = vmatpush1.msra.mxu0 %v1824
        %2041 = vmatprep.subr.mxu0 0.0
        %2042 = vmatpush1.msra.mxu0 %v1825
        %2043 = vmatprep.subr.mxu0 0.0
        %2044 = vmatpush1.msra.mxu0 %v1826
        %2045 = vmatprep.subr.mxu0 0.0
        %2046 = vmatpush1.msra.mxu0 %v1827
        %2047 = vmatprep.subr.mxu0 0.0
        %2048 = vmatpush1.msra.mxu0 %v1828
        %2049 = vmatprep.subr.mxu0 0.0
        %2050 = vmatpush1.msra.mxu0 %v1829
        %2051 = vmatprep.subr.mxu0 0.0
        %2052 = vmatpush1.msra.mxu0 %v1830
        %2053 = vmatprep.subr.mxu0 0.0
        %2054 = vmatpush1.msra.mxu0 %v1831
        %2055 = vmatprep.subr.mxu0 0.0
        %2056 = vmatpush1.msra.mxu0 %v1832
        %2057 = vmatprep.subr.mxu0 0.0
        %2058 = vmatpush1.msra.mxu0 0.0
        %2059 = vmatprep.subr.mxu0 0.0
        %2060 = vmatpush1.msra.mxu0 0.0
        %2061 = vmatprep.subr.mxu0 0.0
        %2062 = vmatpush1.msra.mxu0 0.0
        %2063 = vmatprep.subr.mxu0 0.0
        %2064 = vmatpush1.msra.mxu0 0.0
        %2065 = vmatprep.subr.mxu0 0.0
        %2066 = vmatpush1.msra.mxu0 0.0
        %2067 = vmatprep.subr.mxu0 0.0
        %2068 = vmatpush1.msra.mxu0 0.0
        %2069 = vmatprep.subr.mxu0 0.0
        %2070 = vmatpush1.msra.mxu0 0.0
        %2071 = vmatprep.subr.mxu0 0.0
        %2072 = vmatpush1.msra.mxu0 0.0
        %2073 = vmatprep.subr.mxu0 0.0
        %2074 = vmatpush1.msra.mxu0 0.0
        %2075 = vmatprep.subr.mxu0 0.0
        %2076 = vmatpush1.msra.mxu0 0.0
        %2077 = vmatprep.subr.mxu0 0.0
        %2078 = vmatpush1.msra.mxu0 0.0
        %2079 = vmatprep.subr.mxu0 0.0
        %2080 = vmatpush1.msra.mxu0 0.0
        %2081 = vmatprep.subr.mxu0 0.0
        %2082 = vmatpush1.msra.mxu0 0.0
        %2083 = vmatprep.subr.mxu0 0.0
        %2084 = vmatpush1.msra.mxu0 0.0
        %2085 = vmatprep.subr.mxu0 0.0
        %2086 = vmatpush1.msra.mxu0 0.0
        %2087 = vmatprep.subr.mxu0 0.0
        %2088 = vmatpush1.msra.mxu0 0.0
        %2089 = vmatprep.mubr.f32.mxu0 0.0
        %2090 = vmatmul.mubr.f32.gmra.mrb[0].mxu0 %v1993
        %v2091 = vpop.f32.mrb[0].mxu0
        %v2092 = vadd.f32 0.0, %v2091
        %v2093 = vpop.f32.mrb[0].mxu0
        %2094 = vmatprep.mubr.f32.mxu0 0.0
        %2095 = vmatmul.mubr.f32.gmra.mrb[0].mxu0 %v1994
        %v2096 = vpop.f32.mrb[0].mxu0
        %v2097 = vadd.f32 0.0, %v2096
        %v2098 = vpop.f32.mrb[0].mxu0
        %2099 = vmatprep.mubr.f32.mxu0 0.0
        %2100 = vmatmul.mubr.f32.gmra.mrb[0].mxu0 %v1995
        %v2101 = vpop.f32.mrb[0].mxu0
        %v2102 = vadd.f32 0.0, %v2101
        %v2103 = vpop.f32.mrb[0].mxu0
        %2104 = vmatprep.mubr.f32.mxu0 0.0
        %2105 = vmatmul.mubr.f32.gmra.mrb[0].mxu0 %v1996
        %v2106 = vpop.f32.mrb[0].mxu0
        %v2107 = vadd.f32 0.0, %v2106
        %v2108 = vpop.f32.mrb[0].mxu0
        %2109 = vmatprep.mubr.f32.mxu0 0.0
        %2110 = vmatmul.mubr.f32.gmra.mrb[0].mxu0 %v1997
        %v2111 = vpop.f32.mrb[0].mxu0
        %v2112 = vadd.f32 0.0, %v2111
        %v2113 = vpop.f32.mrb[0].mxu0
        %2114 = vmatprep.mubr.f32.mxu0 0.0
        %2115 = vmatmul.mubr.f32.gmra.mrb[0].mxu0 %v1998
        %v2116 = vpop.f32.mrb[0].mxu0
        %v2117 = vadd.f32 0.0, %v2116
        %v2118 = vpop.f32.mrb[0].mxu0
        %2119 = vmatprep.mubr.f32.mxu0 0.0
        %2120 = vmatmul.mubr.f32.gmra.mrb[0].mxu0 %v1999
        %v2121 = vpop.f32.mrb[0].mxu0
        %v2122 = vadd.f32 0.0, %v2121
        %v2123 = vpop.f32.mrb[0].mxu0
        %2124 = vmatprep.mubr.f32.mxu0 0.0
        %2125 = vmatmul.mubr.f32.gmra.mrb[0].mxu0 %v2000
        %v2126 = vpop.f32.mrb[0].mxu0
        %v2127 = vadd.f32 0.0, %v2126
        %v2128 = vpop.f32.mrb[0].mxu0
        %2129 = vmatprep.mubr.f32.mxu0 0.0
        %2130 = vmatmul.mubr.f32.gmra.mrb[0].mxu0 %v2001
        %v2131 = vpop.f32.mrb[0].mxu0
        %v2132 = vadd.f32 0.0, %v2131
        %v2133 = vpop.f32.mrb[0].mxu0
        %2134 = vmatprep.mubr.f32.mxu0 0.0
        %2135 = vmatmul.mubr.f32.gmra.mrb[0].mxu0 %v2002
        %v2136 = vpop.f32.mrb[0].mxu0
        %v2137 = vadd.f32 0.0, %v2136
        %v2138 = vpop.f32.mrb[0].mxu0
        %2139 = vmatprep.mubr.f32.mxu0 0.0
        %2140 = vmatmul.mubr.f32.gmra.mrb[0].mxu0 %v2003
        %v2141 = vpop.f32.mrb[0].mxu0
        %v2142 = vadd.f32 0.0, %v2141
        %v2143 = vpop.f32.mrb[0].mxu0
        %2144 = vmatprep.mubr.f32.mxu0 0.0
        %2145 = vmatmul.mubr.f32.gmra.mrb[0].mxu0 %v2004
        %v2146 = vpop.f32.mrb[0].mxu0
        %v2147 = vadd.f32 0.0, %v2146
        %v2148 = vpop.f32.mrb[0].mxu0
        %2149 = vmatprep.mubr.f32.mxu0 0.0
        %2150 = vmatmul.mubr.f32.gmra.mrb[0].mxu0 %v2005
        %v2151 = vpop.f32.mrb[0].mxu0
        %v2152 = vadd.f32 0.0, %v2151
        %v2153 = vpop.f32.mrb[0].mxu0
        %2154 = vmatprep.mubr.f32.mxu0 0.0
        %2155 = vmatmul.mubr.f32.gmra.mrb[0].mxu0 %v2006
        %v2156 = vpop.f32.mrb[0].mxu0
        %v2157 = vadd.f32 0.0, %v2156
        %v2158 = vpop.f32.mrb[0].mxu0
        %2159 = vmatprep.mubr.f32.mxu0 0.0
        %2160 = vmatmul.mubr.f32.gmra.mrb[0].mxu0 %v2007
        %v2161 = vpop.f32.mrb[0].mxu0
        %v2162 = vadd.f32 0.0, %v2161
        %v2163 = vpop.f32.mrb[0].mxu0
        %2164 = vmatprep.mubr.f32.mxu0 0.0
        %2165 = vmatmul.mubr.f32.gmra.mrb[0].mxu0 %v2008
        %v2166 = vpop.f32.mrb[0].mxu0
        %v2167 = vadd.f32 0.0, %v2166
        %v2168 = vpop.f32.mrb[0].mxu0
        %2169 = vmatprep.mubr.f32.mxu0 0.0
        %2170 = vmatmul.mubr.f32.gmra.mrb[0].mxu0 %v2009
        %v2171 = vpop.f32.mrb[0].mxu0
        %v2172 = vadd.f32 0.0, %v2171
        %v2173 = vpop.f32.mrb[0].mxu0
        %2174 = vmatprep.mubr.f32.mxu0 0.0
        %2175 = vmatmul.mubr.f32.gmra.mrb[0].mxu0 %v2010
        %v2176 = vpop.f32.mrb[0].mxu0
        %v2177 = vadd.f32 0.0, %v2176
        %v2178 = vpop.f32.mrb[0].mxu0
        %2179 = vmatprep.mubr.f32.mxu0 0.0
        %2180 = vmatmul.mubr.f32.gmra.mrb[0].mxu0 %v2011
        %v2181 = vpop.f32.mrb[0].mxu0
        %v2182 = vadd.f32 0.0, %v2181
        %v2183 = vpop.f32.mrb[0].mxu0
        %2184 = vmatprep.mubr.f32.mxu0 0.0
        %2185 = vmatmul.mubr.f32.gmra.mrb[0].mxu0 %v2012
        %v2186 = vpop.f32.mrb[0].mxu0
        %v2187 = vadd.f32 0.0, %v2186
        %v2188 = vpop.f32.mrb[0].mxu0
        %2189 = vmatprep.mubr.f32.mxu0 0.0
        %2190 = vmatmul.mubr.f32.gmra.mrb[0].mxu0 %v2013
        %v2191 = vpop.f32.mrb[0].mxu0
        %v2192 = vadd.f32 0.0, %v2191
        %v2193 = vpop.f32.mrb[0].mxu0
        %2194 = vmatprep.mubr.f32.mxu0 0.0
        %2195 = vmatmul.mubr.f32.gmra.mrb[0].mxu0 %v2014
        %v2196 = vpop.f32.mrb[0].mxu0
        %v2197 = vadd.f32 0.0, %v2196
        %v2198 = vpop.f32.mrb[0].mxu0
        %2199 = vmatprep.mubr.f32.mxu0 0.0
        %2200 = vmatmul.mubr.f32.gmra.mrb[0].mxu0 %v2015
        %v2201 = vpop.f32.mrb[0].mxu0
        %v2202 = vadd.f32 0.0, %v2201
        %v2203 = vpop.f32.mrb[0].mxu0
        %2204 = vmatprep.mubr.f32.mxu0 0.0
        %2205 = vmatmul.mubr.f32.gmra.mrb[0].mxu0 %v2016
        %v2206 = vpop.f32.mrb[0].mxu0
        %v2207 = vadd.f32 0.0, %v2206
        %v2208 = vpop.f32.mrb[0].mxu0
        %2209 = vmatprep.mubr.f32.mxu0 0.0
        %2210 = vmatmul.mubr.f32.gmra.mrb[0].mxu0 %v2017
        %v2211 = vpop.f32.mrb[0].mxu0
        %v2212 = vadd.f32 0.0, %v2211
        %v2213 = vpop.f32.mrb[0].mxu0
        %2214 = vmatprep.mubr.f32.mxu0 0.0
        %2215 = vmatmul.mubr.f32.gmra.mrb[0].mxu0 %v2018
        %v2216 = vpop.f32.mrb[0].mxu0
        %v2217 = vadd.f32 0.0, %v2216
        %v2218 = vpop.f32.mrb[0].mxu0
        %2219 = vmatprep.mubr.f32.mxu0 0.0
        %2220 = vmatmul.mubr.f32.gmra.mrb[0].mxu0 %v2019
        %v2221 = vpop.f32.mrb[0].mxu0
        %v2222 = vadd.f32 0.0, %v2221
        %v2223 = vpop.f32.mrb[0].mxu0
        %2224 = vmatprep.mubr.f32.mxu0 0.0
        %2225 = vmatmul.mubr.f32.gmra.mrb[0].mxu0 %v2020
        %v2226 = vpop.f32.mrb[0].mxu0
        %v2227 = vadd.f32 0.0, %v2226
        %v2228 = vpop.f32.mrb[0].mxu0
        %2229 = vmatprep.mubr.f32.mxu0 0.0
        %2230 = vmatmul.mubr.f32.gmra.mrb[0].mxu0 %v2021
        %v2231 = vpop.f32.mrb[0].mxu0
        %v2232 = vadd.f32 0.0, %v2231
        %v2233 = vpop.f32.mrb[0].mxu0
        %2234 = vmatprep.mubr.f32.mxu0 0.0
        %2235 = vmatmul.mubr.f32.gmra.mrb[0].mxu0 %v2022
        %v2236 = vpop.f32.mrb[0].mxu0
        %v2237 = vadd.f32 0.0, %v2236
        %v2238 = vpop.f32.mrb[0].mxu0
        %2239 = vmatprep.mubr.f32.mxu0 0.0
        %2240 = vmatmul.mubr.f32.gmra.mrb[0].mxu0 %v2023
        %v2241 = vpop.f32.mrb[0].mxu0
        %v2242 = vadd.f32 0.0, %v2241
        %v2243 = vpop.f32.mrb[0].mxu0
        %2244 = vmatprep.mubr.f32.mxu0 0.0
        %2245 = vmatmul.mubr.f32.gmra.mrb[0].mxu0 %v2024
        %v2246 = vpop.f32.mrb[0].mxu0
        %v2247 = vadd.f32 0.0, %v2246
        %v2248 = vpop.f32.mrb[0].mxu0
        %2249 = vdwg.mxu0
        %2250 = vmatprep.subr.mxu0 0.0
        %2251 = vmatpush1.msra.mxu0 %v2092
        %2252 = vmatprep.subr.mxu0 0.0
        %2253 = vmatpush1.msra.mxu0 %v2097
        %2254 = vmatprep.subr.mxu0 0.0
        %2255 = vmatpush1.msra.mxu0 %v2102
        %2256 = vmatprep.subr.mxu0 0.0
        %2257 = vmatpush1.msra.mxu0 %v2107
        %2258 = vmatprep.subr.mxu0 0.0
        %2259 = vmatpush1.msra.mxu0 %v2112
        %2260 = vmatprep.subr.mxu0 0.0
        %2261 = vmatpush1.msra.mxu0 %v2117
        %2262 = vmatprep.subr.mxu0 0.0
        %2263 = vmatpush1.msra.mxu0 %v2122
        %2264 = vmatprep.subr.mxu0 0.0
        %2265 = vmatpush1.msra.mxu0 %v2127
        %2266 = vmatprep.subr.mxu0 0.0
        %2267 = vmatpush1.msra.mxu0 %v2132
        %2268 = vmatprep.subr.mxu0 0.0
        %2269 = vmatpush1.msra.mxu0 %v2137
        %2270 = vmatprep.subr.mxu0 0.0
        %2271 = vmatpush1.msra.mxu0 %v2142
        %2272 = vmatprep.subr.mxu0 0.0
        %2273 = vmatpush1.msra.mxu0 %v2147
        %2274 = vmatprep.subr.mxu0 0.0
        %2275 = vmatpush1.msra.mxu0 %v2152
        %2276 = vmatprep.subr.mxu0 0.0
        %2277 = vmatpush1.msra.mxu0 %v2157
        %2278 = vmatprep.subr.mxu0 0.0
        %2279 = vmatpush1.msra.mxu0 %v2162
        %2280 = vmatprep.subr.mxu0 0.0
        %2281 = vmatpush1.msra.mxu0 %v2167
        %2282 = vmatprep.subr.mxu0 0.0
        %2283 = vmatpush1.msra.mxu0 %v2172
        %2284 = vmatprep.subr.mxu0 0.0
        %2285 = vmatpush1.msra.mxu0 %v2177
        %2286 = vmatprep.subr.mxu0 0.0
        %2287 = vmatpush1.msra.mxu0 %v2182
        %2288 = vmatprep.subr.mxu0 0.0
        %2289 = vmatpush1.msra.mxu0 %v2187
        %2290 = vmatprep.subr.mxu0 0.0
        %2291 = vmatpush1.msra.mxu0 %v2192
        %2292 = vmatprep.subr.mxu0 0.0
        %2293 = vmatpush1.msra.mxu0 %v2197
        %2294 = vmatprep.subr.mxu0 0.0
        %2295 = vmatpush1.msra.mxu0 %v2202
        %2296 = vmatprep.subr.mxu0 0.0
        %2297 = vmatpush1.msra.mxu0 %v2207
        %2298 = vmatprep.subr.mxu0 0.0
        %2299 = vmatpush1.msra.mxu0 %v2212
        %2300 = vmatprep.subr.mxu0 0.0
        %2301 = vmatpush1.msra.mxu0 %v2217
        %2302 = vmatprep.subr.mxu0 0.0
        %2303 = vmatpush1.msra.mxu0 %v2222
        %2304 = vmatprep.subr.mxu0 0.0
        %2305 = vmatpush1.msra.mxu0 %v2227
        %2306 = vmatprep.subr.mxu0 0.0
        %2307 = vmatpush1.msra.mxu0 %v2232
        %2308 = vmatprep.subr.mxu0 0.0
        %2309 = vmatpush1.msra.mxu0 %v2237
        %2310 = vmatprep.subr.mxu0 0.0
        %2311 = vmatpush1.msra.mxu0 %v2242
        %2312 = vmatprep.subr.mxu0 0.0
        %2313 = vmatpush1.msra.mxu0 %v2247
        %2314 = vmatprep.mubr.f32.mxu0 %v1609
        %2315 = vmatmul.mubr.f32.gmra.mrb[0].mxu0 %v1608
        %v2316 = vpop.f32.mrb[0].mxu0
        %v2317 = vadd.f32 0.0, %v2316
        %v2318 = vpop.f32.mrb[0].mxu0
        %2319 = vmatprep.mubr.f32.mxu0 %v1611
        %2320 = vmatmul.mubr.f32.gmra.mrb[0].mxu0 %v1610
        %v2321 = vpop.f32.mrb[0].mxu0
        %v2322 = vadd.f32 0.0, %v2321
        %v2323 = vpop.f32.mrb[0].mxu0
        %2324 = vmatprep.mubr.f32.mxu0 %v1613
        %2325 = vmatmul.mubr.f32.gmra.mrb[0].mxu0 %v1612
        %v2326 = vpop.f32.mrb[0].mxu0
        %v2327 = vadd.f32 0.0, %v2326
        %v2328 = vpop.f32.mrb[0].mxu0
        %2329 = vmatprep.mubr.f32.mxu0 %v1615
        %2330 = vmatmul.mubr.f32.gmra.mrb[0].mxu0 %v1614
        %v2331 = vpop.f32.mrb[0].mxu0
        %v2332 = vadd.f32 0.0, %v2331
        %v2333 = vpop.f32.mrb[0].mxu0
        %2334 = vmatprep.mubr.f32.mxu0 %v1617
        %2335 = vmatmul.mubr.f32.gmra.mrb[0].mxu0 %v1616
        %v2336 = vpop.f32.mrb[0].mxu0
        %v2337 = vadd.f32 0.0, %v2336
        %v2338 = vpop.f32.mrb[0].mxu0
        %2339 = vmatprep.mubr.f32.mxu0 %v1619
        %2340 = vmatmul.mubr.f32.gmra.mrb[0].mxu0 %v1618
        %v2341 = vpop.f32.mrb[0].mxu0
        %v2342 = vadd.f32 0.0, %v2341
        %v2343 = vpop.f32.mrb[0].mxu0
        %2344 = vmatprep.mubr.f32.mxu0 %v1621
        %2345 = vmatmul.mubr.f32.gmra.mrb[0].mxu0 %v1620
        %v2346 = vpop.f32.mrb[0].mxu0
        %v2347 = vadd.f32 0.0, %v2346
        %v2348 = vpop.f32.mrb[0].mxu0
        %2349 = vmatprep.mubr.f32.mxu0 %v1623
        %2350 = vmatmul.mubr.f32.gmra.mrb[0].mxu0 %v1622
        %v2351 = vpop.f32.mrb[0].mxu0
        %v2352 = vadd.f32 0.0, %v2351
        %v2353 = vpop.f32.mrb[0].mxu0
        %2354 = vmatprep.mubr.f32.mxu0 %v1625
        %2355 = vmatmul.mubr.f32.gmra.mrb[0].mxu0 %v1624
        %v2356 = vpop.f32.mrb[0].mxu0
        %v2357 = vadd.f32 0.0, %v2356
        %v2358 = vpop.f32.mrb[0].mxu0
        %2359 = vmatprep.mubr.f32.mxu0 %v1627
        %2360 = vmatmul.mubr.f32.gmra.mrb[0].mxu0 %v1626
        %v2361 = vpop.f32.mrb[0].mxu0
        %v2362 = vadd.f32 0.0, %v2361
        %v2363 = vpop.f32.mrb[0].mxu0
        %2364 = vmatprep.mubr.f32.mxu0 %v1629
        %2365 = vmatmul.mubr.f32.gmra.mrb[0].mxu0 %v1628
        %v2366 = vpop.f32.mrb[0].mxu0
        %v2367 = vadd.f32 0.0, %v2366
        %v2368 = vpop.f32.mrb[0].mxu0
        %2369 = vmatprep.mubr.f32.mxu0 %v1631
        %2370 = vmatmul.mubr.f32.gmra.mrb[0].mxu0 %v1630
        %v2371 = vpop.f32.mrb[0].mxu0
        %v2372 = vadd.f32 0.0, %v2371
        %v2373 = vpop.f32.mrb[0].mxu0
        %2374 = vmatprep.mubr.f32.mxu0 %v1633
        %2375 = vmatmul.mubr.f32.gmra.mrb[0].mxu0 %v1632
        %v2376 = vpop.f32.mrb[0].mxu0
        %v2377 = vadd.f32 0.0, %v2376
        %v2378 = vpop.f32.mrb[0].mxu0
        %2379 = vmatprep.mubr.f32.mxu0 %v1635
        %2380 = vmatmul.mubr.f32.gmra.mrb[0].mxu0 %v1634
        %v2381 = vpop.f32.mrb[0].mxu0
        %v2382 = vadd.f32 0.0, %v2381
        %v2383 = vpop.f32.mrb[0].mxu0
        %2384 = vmatprep.mubr.f32.mxu0 %v1637
        %2385 = vmatmul.mubr.f32.gmra.mrb[0].mxu0 %v1636
        %v2386 = vpop.f32.mrb[0].mxu0
        %v2387 = vadd.f32 0.0, %v2386
        %v2388 = vpop.f32.mrb[0].mxu0
        %2389 = vmatprep.mubr.f32.mxu0 %v1639
        %2390 = vmatmul.mubr.f32.gmra.mrb[0].mxu0 %v1638
        %v2391 = vpop.f32.mrb[0].mxu0
        %v2392 = vadd.f32 0.0, %v2391
        %v2393 = vpop.f32.mrb[0].mxu0
        %2394 = vdwg.mxu0
        %v2395 = vld [vmem:[%s559] sm:$0xff]
        %v2396 = vld [vmem:[%s559 + $0x8] sm:$0xff]
        %v2397 = vld [vmem:[%s559 + $0x10] sm:$0xff]
        %v2398 = vld [vmem:[%s559 + $0x18] sm:$0xff]
        %v2399 = vld [vmem:[%s559 + $0x20] sm:$0xff]
        %v2400 = vld [vmem:[%s559 + $0x28] sm:$0xff]
        %v2401 = vld [vmem:[%s559 + $0x30] sm:$0xff]
        %v2402 = vld [vmem:[%s559 + $0x38] sm:$0xff]
        %v2403 = vld [vmem:[%s559 + $0x40] sm:$0xff]
        %v2404 = vld [vmem:[%s559 + $0x48] sm:$0xff]
        %v2405 = vld [vmem:[%s559 + $0x50] sm:$0xff]
        %v2406 = vld [vmem:[%s559 + $0x58] sm:$0xff]
        %v2407 = vld [vmem:[%s559 + $0x60] sm:$0xff]
        %v2408 = vld [vmem:[%s559 + $0x68] sm:$0xff]
        %v2409 = vld [vmem:[%s559 + $0x70] sm:$0xff]
        %v2410 = vld [vmem:[%s559 + $0x78] sm:$0xff]
        %v2411 = vld [vmem:[%s559 + $0x80] sm:$0xff]
        %v2412 = vld [vmem:[%s559 + $0x88] sm:$0xff]
        %v2413 = vld [vmem:[%s559 + $0x90] sm:$0xff]
        %v2414 = vld [vmem:[%s559 + $0x98] sm:$0xff]
        %v2415 = vld [vmem:[%s559 + $0xa0] sm:$0xff]
        %v2416 = vld [vmem:[%s559 + $0xa8] sm:$0xff]
        %v2417 = vld [vmem:[%s559 + $0xb0] sm:$0xff]
        %v2418 = vld [vmem:[%s559 + $0xb8] sm:$0xff]
        %v2419 = vld [vmem:[%s559 + $0xc0] sm:$0xff]
        %v2420 = vld [vmem:[%s559 + $0xc8] sm:$0xff]
        %v2421 = vld [vmem:[%s559 + $0xd0] sm:$0xff]
        %v2422 = vld [vmem:[%s559 + $0xd8] sm:$0xff]
        %v2423 = vld [vmem:[%s559 + $0xe0] sm:$0xff]
        %v2424 = vld [vmem:[%s559 + $0xe8] sm:$0xff]
        %v2425 = vld [vmem:[%s559 + $0xf0] sm:$0xff]
        %v2426 = vld [vmem:[%s559 + $0xf8] sm:$0xff]
        %v2427 = vld [vmem:[%s6] sm:$0xff]
        %v2428 = vld [vmem:[%s6 + $0x8] sm:$0xff]
        %v2429 = vld [vmem:[%s6 + $0x10] sm:$0xff]
        %v2430 = vld [vmem:[%s6 + $0x18] sm:$0xff]
        %v2431 = vld [vmem:[%s6 + $0x20] sm:$0xff]
        %v2432 = vld [vmem:[%s6 + $0x28] sm:$0xff]
        %v2433 = vld [vmem:[%s6 + $0x30] sm:$0xff]
        %v2434 = vld [vmem:[%s6 + $0x38] sm:$0xff]
        %v2435 = vld [vmem:[%s6 + $0x40] sm:$0xff]
        %v2436 = vld [vmem:[%s6 + $0x48] sm:$0xff]
        %v2437 = vld [vmem:[%s6 + $0x50] sm:$0xff]
        %v2438 = vld [vmem:[%s6 + $0x58] sm:$0xff]
        %v2439 = vld [vmem:[%s6 + $0x60] sm:$0xff]
        %v2440 = vld [vmem:[%s6 + $0x68] sm:$0xff]
        %v2441 = vld [vmem:[%s6 + $0x70] sm:$0xff]
        %v2442 = vld [vmem:[%s6 + $0x78] sm:$0xff]
        %2443 = vset.pattern.permute.xlu0 0
        %2444 = vperm.xlu0 %2443, %v2395
        %v2445 = vpop.permute.xlu0 %2444
        %2446 = vset.pattern.permute.xlu0 0
        %2447 = vperm.xlu0 %2446, %v2396
        %v2448 = vpop.permute.xlu0 %2447
        %2449 = vset.pattern.permute.xlu0 0
        %2450 = vperm.xlu0 %2449, %v2397
        %v2451 = vpop.permute.xlu0 %2450
        %2452 = vset.pattern.permute.xlu0 0
        %2453 = vperm.xlu0 %2452, %v2398
        %v2454 = vpop.permute.xlu0 %2453
        %2455 = vset.pattern.permute.xlu0 0
        %2456 = vperm.xlu0 %2455, %v2399
        %v2457 = vpop.permute.xlu0 %2456
        %2458 = vset.pattern.permute.xlu0 0
        %2459 = vperm.xlu0 %2458, %v2400
        %v2460 = vpop.permute.xlu0 %2459
        %2461 = vset.pattern.permute.xlu0 0
        %2462 = vperm.xlu0 %2461, %v2401
        %v2463 = vpop.permute.xlu0 %2462
        %2464 = vset.pattern.permute.xlu0 0
        %2465 = vperm.xlu0 %2464, %v2402
        %v2466 = vpop.permute.xlu0 %2465
        %2467 = vset.pattern.permute.xlu0 0
        %2468 = vperm.xlu0 %2467, %v2403
        %v2469 = vpop.permute.xlu0 %2468
        %2470 = vset.pattern.permute.xlu0 0
        %2471 = vperm.xlu0 %2470, %v2404
        %v2472 = vpop.permute.xlu0 %2471
        %2473 = vset.pattern.permute.xlu0 0
        %2474 = vperm.xlu0 %2473, %v2405
        %v2475 = vpop.permute.xlu0 %2474
        %2476 = vset.pattern.permute.xlu0 0
        %2477 = vperm.xlu0 %2476, %v2406
        %v2478 = vpop.permute.xlu0 %2477
        %2479 = vset.pattern.permute.xlu0 0
        %2480 = vperm.xlu0 %2479, %v2407
        %v2481 = vpop.permute.xlu0 %2480
        %2482 = vset.pattern.permute.xlu0 0
        %2483 = vperm.xlu0 %2482, %v2408
        %v2484 = vpop.permute.xlu0 %2483
        %2485 = vset.pattern.permute.xlu0 0
        %2486 = vperm.xlu0 %2485, %v2409
        %v2487 = vpop.permute.xlu0 %2486
        %2488 = vset.pattern.permute.xlu0 0
        %2489 = vperm.xlu0 %2488, %v2410
        %v2490 = vpop.permute.xlu0 %2489
        %2491 = vset.pattern.permute.xlu0 0
        %2492 = vperm.xlu0 %2491, %v2411
        %v2493 = vpop.permute.xlu0 %2492
        %2494 = vset.pattern.permute.xlu0 0
        %2495 = vperm.xlu0 %2494, %v2412
        %v2496 = vpop.permute.xlu0 %2495
        %2497 = vset.pattern.permute.xlu0 0
        %2498 = vperm.xlu0 %2497, %v2413
        %v2499 = vpop.permute.xlu0 %2498
        %2500 = vset.pattern.permute.xlu0 0
        %2501 = vperm.xlu0 %2500, %v2414
        %v2502 = vpop.permute.xlu0 %2501
        %2503 = vset.pattern.permute.xlu0 0
        %2504 = vperm.xlu0 %2503, %v2415
        %v2505 = vpop.permute.xlu0 %2504
        %2506 = vset.pattern.permute.xlu0 0
        %2507 = vperm.xlu0 %2506, %v2416
        %v2508 = vpop.permute.xlu0 %2507
        %2509 = vset.pattern.permute.xlu0 0
        %2510 = vperm.xlu0 %2509, %v2417
        %v2511 = vpop.permute.xlu0 %2510
        %2512 = vset.pattern.permute.xlu0 0
        %2513 = vperm.xlu0 %2512, %v2418
        %v2514 = vpop.permute.xlu0 %2513
        %2515 = vset.pattern.permute.xlu0 0
        %2516 = vperm.xlu0 %2515, %v2419
        %v2517 = vpop.permute.xlu0 %2516
        %2518 = vset.pattern.permute.xlu0 0
        %2519 = vperm.xlu0 %2518, %v2420
        %v2520 = vpop.permute.xlu0 %2519
        %2521 = vset.pattern.permute.xlu0 0
        %2522 = vperm.xlu0 %2521, %v2421
        %v2523 = vpop.permute.xlu0 %2522
        %2524 = vset.pattern.permute.xlu0 0
        %2525 = vperm.xlu0 %2524, %v2422
        %v2526 = vpop.permute.xlu0 %2525
        %2527 = vset.pattern.permute.xlu0 0
        %2528 = vperm.xlu0 %2527, %v2423
        %v2529 = vpop.permute.xlu0 %2528
        %2530 = vset.pattern.permute.xlu0 0
        %2531 = vperm.xlu0 %2530, %v2424
        %v2532 = vpop.permute.xlu0 %2531
        %2533 = vset.pattern.permute.xlu0 0
        %2534 = vperm.xlu0 %2533, %v2425
        %v2535 = vpop.permute.xlu0 %2534
        %2536 = vset.pattern.permute.xlu0 0
        %2537 = vperm.xlu0 %2536, %v2426
        %v2538 = vpop.permute.xlu0 %2537
        %vm2539 = vcmp.eq.s32.totalorder %v2445, %v1012
        %vm2540 = vcmp.eq.s32.totalorder %v2448, %v1012
        %vm2541 = vcmp.eq.s32.totalorder %v2451, %v1012
        %vm2542 = vcmp.eq.s32.totalorder %v2454, %v1012
        %vm2543 = vcmp.eq.s32.totalorder %v2457, %v1012
        %vm2544 = vcmp.eq.s32.totalorder %v2460, %v1012
        %vm2545 = vcmp.eq.s32.totalorder %v2463, %v1012
        %vm2546 = vcmp.eq.s32.totalorder %v2466, %v1012
        %vm2547 = vcmp.eq.s32.totalorder %v2469, %v1012
        %vm2548 = vcmp.eq.s32.totalorder %v2472, %v1012
        %vm2549 = vcmp.eq.s32.totalorder %v2475, %v1012
        %vm2550 = vcmp.eq.s32.totalorder %v2478, %v1012
        %vm2551 = vcmp.eq.s32.totalorder %v2481, %v1012
        %vm2552 = vcmp.eq.s32.totalorder %v2484, %v1012
        %vm2553 = vcmp.eq.s32.totalorder %v2487, %v1012
        %vm2554 = vcmp.eq.s32.totalorder %v2490, %v1012
        %vm2555 = vcmp.eq.s32.totalorder %v2493, %v1012
        %vm2556 = vcmp.eq.s32.totalorder %v2496, %v1012
        %vm2557 = vcmp.eq.s32.totalorder %v2499, %v1012
        %vm2558 = vcmp.eq.s32.totalorder %v2502, %v1012
        %vm2559 = vcmp.eq.s32.totalorder %v2505, %v1012
        %vm2560 = vcmp.eq.s32.totalorder %v2508, %v1012
        %vm2561 = vcmp.eq.s32.totalorder %v2511, %v1012
        %vm2562 = vcmp.eq.s32.totalorder %v2514, %v1012
        %vm2563 = vcmp.eq.s32.totalorder %v2517, %v1012
        %vm2564 = vcmp.eq.s32.totalorder %v2520, %v1012
        %vm2565 = vcmp.eq.s32.totalorder %v2523, %v1012
        %vm2566 = vcmp.eq.s32.totalorder %v2526, %v1012
        %vm2567 = vcmp.eq.s32.totalorder %v2529, %v1012
        %vm2568 = vcmp.eq.s32.totalorder %v2532, %v1012
        %vm2569 = vcmp.eq.s32.totalorder %v2535, %v1012
        %vm2570 = vcmp.eq.s32.totalorder %v2538, %v1012
        %v2571 = vsel %vm2539, 1, 0
        %v2572 = vsel %vm2540, 1, 0
        %v2573 = vsel %vm2541, 1, 0
        %v2574 = vsel %vm2542, 1, 0
        %v2575 = vsel %vm2543, 1, 0
        %v2576 = vsel %vm2544, 1, 0
        %v2577 = vsel %vm2545, 1, 0
        %v2578 = vsel %vm2546, 1, 0
        %v2579 = vsel %vm2547, 1, 0
        %v2580 = vsel %vm2548, 1, 0
        %v2581 = vsel %vm2549, 1, 0
        %v2582 = vsel %vm2550, 1, 0
        %v2583 = vsel %vm2551, 1, 0
        %v2584 = vsel %vm2552, 1, 0
        %v2585 = vsel %vm2553, 1, 0
        %v2586 = vsel %vm2554, 1, 0
        %v2587 = vsel %vm2555, 1, 0
        %v2588 = vsel %vm2556, 1, 0
        %v2589 = vsel %vm2557, 1, 0
        %v2590 = vsel %vm2558, 1, 0
        %v2591 = vsel %vm2559, 1, 0
        %v2592 = vsel %vm2560, 1, 0
        %v2593 = vsel %vm2561, 1, 0
        %v2594 = vsel %vm2562, 1, 0
        %v2595 = vsel %vm2563, 1, 0
        %v2596 = vsel %vm2564, 1, 0
        %v2597 = vsel %vm2565, 1, 0
        %v2598 = vsel %vm2566, 1, 0
        %v2599 = vsel %vm2567, 1, 0
        %v2600 = vsel %vm2568, 1, 0
        %v2601 = vsel %vm2569, 1, 0
        %v2602 = vsel %vm2570, 1, 0
        %v2603 = vcvt.s32.f32 %v2571
        %v2604 = vcvt.s32.f32 %v2572
        %v2605 = vcvt.s32.f32 %v2573
        %v2606 = vcvt.s32.f32 %v2574
        %v2607 = vcvt.s32.f32 %v2575
        %v2608 = vcvt.s32.f32 %v2576
        %v2609 = vcvt.s32.f32 %v2577
        %v2610 = vcvt.s32.f32 %v2578
        %v2611 = vcvt.s32.f32 %v2579
        %v2612 = vcvt.s32.f32 %v2580
        %v2613 = vcvt.s32.f32 %v2581
        %v2614 = vcvt.s32.f32 %v2582
        %v2615 = vcvt.s32.f32 %v2583
        %v2616 = vcvt.s32.f32 %v2584
        %v2617 = vcvt.s32.f32 %v2585
        %v2618 = vcvt.s32.f32 %v2586
        %v2619 = vcvt.s32.f32 %v2587
        %v2620 = vcvt.s32.f32 %v2588
        %v2621 = vcvt.s32.f32 %v2589
        %v2622 = vcvt.s32.f32 %v2590
        %v2623 = vcvt.s32.f32 %v2591
        %v2624 = vcvt.s32.f32 %v2592
        %v2625 = vcvt.s32.f32 %v2593
        %v2626 = vcvt.s32.f32 %v2594
        %v2627 = vcvt.s32.f32 %v2595
        %v2628 = vcvt.s32.f32 %v2596
        %v2629 = vcvt.s32.f32 %v2597
        %v2630 = vcvt.s32.f32 %v2598
        %v2631 = vcvt.s32.f32 %v2599
        %v2632 = vcvt.s32.f32 %v2600
        %v2633 = vcvt.s32.f32 %v2601
        %v2634 = vcvt.s32.f32 %v2602
        %2635 = vmatprep.subr.mxu0 0.0
        %2636 = vmatpush1.msra.mxu0 %v2427
        %2637 = vmatprep.subr.mxu0 0.0
        %2638 = vmatpush1.msra.mxu0 %v2428
        %2639 = vmatprep.subr.mxu0 0.0
        %2640 = vmatpush1.msra.mxu0 %v2429
        %2641 = vmatprep.subr.mxu0 0.0
        %2642 = vmatpush1.msra.mxu0 %v2430
        %2643 = vmatprep.subr.mxu0 0.0
        %2644 = vmatpush1.msra.mxu0 %v2431
        %2645 = vmatprep.subr.mxu0 0.0
        %2646 = vmatpush1.msra.mxu0 %v2432
        %2647 = vmatprep.subr.mxu0 0.0
        %2648 = vmatpush1.msra.mxu0 %v2433
        %2649 = vmatprep.subr.mxu0 0.0
        %2650 = vmatpush1.msra.mxu0 %v2434
        %2651 = vmatprep.subr.mxu0 0.0
        %2652 = vmatpush1.msra.mxu0 %v2435
        %2653 = vmatprep.subr.mxu0 0.0
        %2654 = vmatpush1.msra.mxu0 %v2436
        %2655 = vmatprep.subr.mxu0 0.0
        %2656 = vmatpush1.msra.mxu0 %v2437
        %2657 = vmatprep.subr.mxu0 0.0
        %2658 = vmatpush1.msra.mxu0 %v2438
        %2659 = vmatprep.subr.mxu0 0.0
        %2660 = vmatpush1.msra.mxu0 %v2439
        %2661 = vmatprep.subr.mxu0 0.0
        %2662 = vmatpush1.msra.mxu0 %v2440
        %2663 = vmatprep.subr.mxu0 0.0
        %2664 = vmatpush1.msra.mxu0 %v2441
        %2665 = vmatprep.subr.mxu0 0.0
        %2666 = vmatpush1.msra.mxu0 %v2442
        %2667 = vmatprep.subr.mxu0 0.0
        %2668 = vmatpush1.msra.mxu0 0.0
        %2669 = vmatprep.subr.mxu0 0.0
        %2670 = vmatpush1.msra.mxu0 0.0
        %2671 = vmatprep.subr.mxu0 0.0
        %2672 = vmatpush1.msra.mxu0 0.0
        %2673 = vmatprep.subr.mxu0 0.0
        %2674 = vmatpush1.msra.mxu0 0.0
        %2675 = vmatprep.subr.mxu0 0.0
        %2676 = vmatpush1.msra.mxu0 0.0
        %2677 = vmatprep.subr.mxu0 0.0
        %2678 = vmatpush1.msra.mxu0 0.0
        %2679 = vmatprep.subr.mxu0 0.0
        %2680 = vmatpush1.msra.mxu0 0.0
        %2681 = vmatprep.subr.mxu0 0.0
        %2682 = vmatpush1.msra.mxu0 0.0
        %2683 = vmatprep.subr.mxu0 0.0
        %2684 = vmatpush1.msra.mxu0 0.0
        %2685 = vmatprep.subr.mxu0 0.0
        %2686 = vmatpush1.msra.mxu0 0.0
        %2687 = vmatprep.subr.mxu0 0.0
        %2688 = vmatpush1.msra.mxu0 0.0
        %2689 = vmatprep.subr.mxu0 0.0
        %2690 = vmatpush1.msra.mxu0 0.0
        %2691 = vmatprep.subr.mxu0 0.0
        %2692 = vmatpush1.msra.mxu0 0.0
        %2693 = vmatprep.subr.mxu0 0.0
        %2694 = vmatpush1.msra.mxu0 0.0
        %2695 = vmatprep.subr.mxu0 0.0
        %2696 = vmatpush1.msra.mxu0 0.0
        %2697 = vmatprep.subr.mxu0 0.0
        %2698 = vmatpush1.msra.mxu0 0.0
        %2699 = vmatprep.mubr.f32.mxu0 0.0
        %2700 = vmatmul.mubr.f32.gmra.mrb[0].mxu0 %v2603
        %v2701 = vpop.f32.mrb[0].mxu0
        %v2702 = vadd.f32 0.0, %v2701
        %v2703 = vpop.f32.mrb[0].mxu0
        %2704 = vmatprep.mubr.f32.mxu0 0.0
        %2705 = vmatmul.mubr.f32.gmra.mrb[0].mxu0 %v2604
        %v2706 = vpop.f32.mrb[0].mxu0
        %v2707 = vadd.f32 0.0, %v2706
        %v2708 = vpop.f32.mrb[0].mxu0
        %2709 = vmatprep.mubr.f32.mxu0 0.0
        %2710 = vmatmul.mubr.f32.gmra.mrb[0].mxu0 %v2605
        %v2711 = vpop.f32.mrb[0].mxu0
        %v2712 = vadd.f32 0.0, %v2711
        %v2713 = vpop.f32.mrb[0].mxu0
        %2714 = vmatprep.mubr.f32.mxu0 0.0
        %2715 = vmatmul.mubr.f32.gmra.mrb[0].mxu0 %v2606
        %v2716 = vpop.f32.mrb[0].mxu0
        %v2717 = vadd.f32 0.0, %v2716
        %v2718 = vpop.f32.mrb[0].mxu0
        %2719 = vmatprep.mubr.f32.mxu0 0.0
        %2720 = vmatmul.mubr.f32.gmra.mrb[0].mxu0 %v2607
        %v2721 = vpop.f32.mrb[0].mxu0
        %v2722 = vadd.f32 0.0, %v2721
        %v2723 = vpop.f32.mrb[0].mxu0
        %2724 = vmatprep.mubr.f32.mxu0 0.0
        %2725 = vmatmul.mubr.f32.gmra.mrb[0].mxu0 %v2608
        %v2726 = vpop.f32.mrb[0].mxu0
        %v2727 = vadd.f32 0.0, %v2726
        %v2728 = vpop.f32.mrb[0].mxu0
        %2729 = vmatprep.mubr.f32.mxu0 0.0
        %2730 = vmatmul.mubr.f32.gmra.mrb[0].mxu0 %v2609
        %v2731 = vpop.f32.mrb[0].mxu0
        %v2732 = vadd.f32 0.0, %v2731
        %v2733 = vpop.f32.mrb[0].mxu0
        %2734 = vmatprep.mubr.f32.mxu0 0.0
        %2735 = vmatmul.mubr.f32.gmra.mrb[0].mxu0 %v2610
        %v2736 = vpop.f32.mrb[0].mxu0
        %v2737 = vadd.f32 0.0, %v2736
        %v2738 = vpop.f32.mrb[0].mxu0
        %2739 = vmatprep.mubr.f32.mxu0 0.0
        %2740 = vmatmul.mubr.f32.gmra.mrb[0].mxu0 %v2611
        %v2741 = vpop.f32.mrb[0].mxu0
        %v2742 = vadd.f32 0.0, %v2741
        %v2743 = vpop.f32.mrb[0].mxu0
        %2744 = vmatprep.mubr.f32.mxu0 0.0
        %2745 = vmatmul.mubr.f32.gmra.mrb[0].mxu0 %v2612
        %v2746 = vpop.f32.mrb[0].mxu0
        %v2747 = vadd.f32 0.0, %v2746
        %v2748 = vpop.f32.mrb[0].mxu0
        %2749 = vmatprep.mubr.f32.mxu0 0.0
        %2750 = vmatmul.mubr.f32.gmra.mrb[0].mxu0 %v2613
        %v2751 = vpop.f32.mrb[0].mxu0
        %v2752 = vadd.f32 0.0, %v2751
        %v2753 = vpop.f32.mrb[0].mxu0
        %2754 = vmatprep.mubr.f32.mxu0 0.0
        %2755 = vmatmul.mubr.f32.gmra.mrb[0].mxu0 %v2614
        %v2756 = vpop.f32.mrb[0].mxu0
        %v2757 = vadd.f32 0.0, %v2756
        %v2758 = vpop.f32.mrb[0].mxu0
        %2759 = vmatprep.mubr.f32.mxu0 0.0
        %2760 = vmatmul.mubr.f32.gmra.mrb[0].mxu0 %v2615
        %v2761 = vpop.f32.mrb[0].mxu0
        %v2762 = vadd.f32 0.0, %v2761
        %v2763 = vpop.f32.mrb[0].mxu0
        %2764 = vmatprep.mubr.f32.mxu0 0.0
        %2765 = vmatmul.mubr.f32.gmra.mrb[0].mxu0 %v2616
        %v2766 = vpop.f32.mrb[0].mxu0
        %v2767 = vadd.f32 0.0, %v2766
        %v2768 = vpop.f32.mrb[0].mxu0
        %2769 = vmatprep.mubr.f32.mxu0 0.0
        %2770 = vmatmul.mubr.f32.gmra.mrb[0].mxu0 %v2617
        %v2771 = vpop.f32.mrb[0].mxu0
        %v2772 = vadd.f32 0.0, %v2771
        %v2773 = vpop.f32.mrb[0].mxu0
        %2774 = vmatprep.mubr.f32.mxu0 0.0
        %2775 = vmatmul.mubr.f32.gmra.mrb[0].mxu0 %v2618
        %v2776 = vpop.f32.mrb[0].mxu0
        %v2777 = vadd.f32 0.0, %v2776
        %v2778 = vpop.f32.mrb[0].mxu0
        %2779 = vmatprep.mubr.f32.mxu0 0.0
        %2780 = vmatmul.mubr.f32.gmra.mrb[0].mxu0 %v2619
        %v2781 = vpop.f32.mrb[0].mxu0
        %v2782 = vadd.f32 0.0, %v2781
        %v2783 = vpop.f32.mrb[0].mxu0
        %2784 = vmatprep.mubr.f32.mxu0 0.0
        %2785 = vmatmul.mubr.f32.gmra.mrb[0].mxu0 %v2620
        %v2786 = vpop.f32.mrb[0].mxu0
        %v2787 = vadd.f32 0.0, %v2786
        %v2788 = vpop.f32.mrb[0].mxu0
        %2789 = vmatprep.mubr.f32.mxu0 0.0
        %2790 = vmatmul.mubr.f32.gmra.mrb[0].mxu0 %v2621
        %v2791 = vpop.f32.mrb[0].mxu0
        %v2792 = vadd.f32 0.0, %v2791
        %v2793 = vpop.f32.mrb[0].mxu0
        %2794 = vmatprep.mubr.f32.mxu0 0.0
        %2795 = vmatmul.mubr.f32.gmra.mrb[0].mxu0 %v2622
        %v2796 = vpop.f32.mrb[0].mxu0
        %v2797 = vadd.f32 0.0, %v2796
        %v2798 = vpop.f32.mrb[0].mxu0
        %2799 = vmatprep.mubr.f32.mxu0 0.0
        %2800 = vmatmul.mubr.f32.gmra.mrb[0].mxu0 %v2623
        %v2801 = vpop.f32.mrb[0].mxu0
        %v2802 = vadd.f32 0.0, %v2801
        %v2803 = vpop.f32.mrb[0].mxu0
        %2804 = vmatprep.mubr.f32.mxu0 0.0
        %2805 = vmatmul.mubr.f32.gmra.mrb[0].mxu0 %v2624
        %v2806 = vpop.f32.mrb[0].mxu0
        %v2807 = vadd.f32 0.0, %v2806
        %v2808 = vpop.f32.mrb[0].mxu0
        %2809 = vmatprep.mubr.f32.mxu0 0.0
        %2810 = vmatmul.mubr.f32.gmra.mrb[0].mxu0 %v2625
        %v2811 = vpop.f32.mrb[0].mxu0
        %v2812 = vadd.f32 0.0, %v2811
        %v2813 = vpop.f32.mrb[0].mxu0
        %2814 = vmatprep.mubr.f32.mxu0 0.0
        %2815 = vmatmul.mubr.f32.gmra.mrb[0].mxu0 %v2626
        %v2816 = vpop.f32.mrb[0].mxu0
        %v2817 = vadd.f32 0.0, %v2816
        %v2818 = vpop.f32.mrb[0].mxu0
        %2819 = vmatprep.mubr.f32.mxu0 0.0
        %2820 = vmatmul.mubr.f32.gmra.mrb[0].mxu0 %v2627
        %v2821 = vpop.f32.mrb[0].mxu0
        %v2822 = vadd.f32 0.0, %v2821
        %v2823 = vpop.f32.mrb[0].mxu0
        %2824 = vmatprep.mubr.f32.mxu0 0.0
        %2825 = vmatmul.mubr.f32.gmra.mrb[0].mxu0 %v2628
        %v2826 = vpop.f32.mrb[0].mxu0
        %v2827 = vadd.f32 0.0, %v2826
        %v2828 = vpop.f32.mrb[0].mxu0
        %2829 = vmatprep.mubr.f32.mxu0 0.0
        %2830 = vmatmul.mubr.f32.gmra.mrb[0].mxu0 %v2629
        %v2831 = vpop.f32.mrb[0].mxu0
        %v2832 = vadd.f32 0.0, %v2831
        %v2833 = vpop.f32.mrb[0].mxu0
        %2834 = vmatprep.mubr.f32.mxu0 0.0
        %2835 = vmatmul.mubr.f32.gmra.mrb[0].mxu0 %v2630
        %v2836 = vpop.f32.mrb[0].mxu0
        %v2837 = vadd.f32 0.0, %v2836
        %v2838 = vpop.f32.mrb[0].mxu0
        %2839 = vmatprep.mubr.f32.mxu0 0.0
        %2840 = vmatmul.mubr.f32.gmra.mrb[0].mxu0 %v2631
        %v2841 = vpop.f32.mrb[0].mxu0
        %v2842 = vadd.f32 0.0, %v2841
        %v2843 = vpop.f32.mrb[0].mxu0
        %2844 = vmatprep.mubr.f32.mxu0 0.0
        %2845 = vmatmul.mubr.f32.gmra.mrb[0].mxu0 %v2632
        %v2846 = vpop.f32.mrb[0].mxu0
        %v2847 = vadd.f32 0.0, %v2846
        %v2848 = vpop.f32.mrb[0].mxu0
        %2849 = vmatprep.mubr.f32.mxu0 0.0
        %2850 = vmatmul.mubr.f32.gmra.mrb[0].mxu0 %v2633
        %v2851 = vpop.f32.mrb[0].mxu0
        %v2852 = vadd.f32 0.0, %v2851
        %v2853 = vpop.f32.mrb[0].mxu0
        %2854 = vmatprep.mubr.f32.mxu0 0.0
        %2855 = vmatmul.mubr.f32.gmra.mrb[0].mxu0 %v2634
        %v2856 = vpop.f32.mrb[0].mxu0
        %v2857 = vadd.f32 0.0, %v2856
        %v2858 = vpop.f32.mrb[0].mxu0
        %2859 = vdwg.mxu0
        %2860 = vmatprep.subr.mxu0 0.0
        %2861 = vmatpush1.msra.mxu0 %v2702
        %2862 = vmatprep.subr.mxu0 0.0
        %2863 = vmatpush1.msra.mxu0 %v2707
        %2864 = vmatprep.subr.mxu0 0.0
        %2865 = vmatpush1.msra.mxu0 %v2712
        %2866 = vmatprep.subr.mxu0 0.0
        %2867 = vmatpush1.msra.mxu0 %v2717
        %2868 = vmatprep.subr.mxu0 0.0
        %2869 = vmatpush1.msra.mxu0 %v2722
        %2870 = vmatprep.subr.mxu0 0.0
        %2871 = vmatpush1.msra.mxu0 %v2727
        %2872 = vmatprep.subr.mxu0 0.0
        %2873 = vmatpush1.msra.mxu0 %v2732
        %2874 = vmatprep.subr.mxu0 0.0
        %2875 = vmatpush1.msra.mxu0 %v2737
        %2876 = vmatprep.subr.mxu0 0.0
        %2877 = vmatpush1.msra.mxu0 %v2742
        %2878 = vmatprep.subr.mxu0 0.0
        %2879 = vmatpush1.msra.mxu0 %v2747
        %2880 = vmatprep.subr.mxu0 0.0
        %2881 = vmatpush1.msra.mxu0 %v2752
        %2882 = vmatprep.subr.mxu0 0.0
        %2883 = vmatpush1.msra.mxu0 %v2757
        %2884 = vmatprep.subr.mxu0 0.0
        %2885 = vmatpush1.msra.mxu0 %v2762
        %2886 = vmatprep.subr.mxu0 0.0
        %2887 = vmatpush1.msra.mxu0 %v2767
        %2888 = vmatprep.subr.mxu0 0.0
        %2889 = vmatpush1.msra.mxu0 %v2772
        %2890 = vmatprep.subr.mxu0 0.0
        %2891 = vmatpush1.msra.mxu0 %v2777
        %2892 = vmatprep.subr.mxu0 0.0
        %2893 = vmatpush1.msra.mxu0 %v2782
        %2894 = vmatprep.subr.mxu0 0.0
        %2895 = vmatpush1.msra.mxu0 %v2787
        %2896 = vmatprep.subr.mxu0 0.0
        %2897 = vmatpush1.msra.mxu0 %v2792
        %2898 = vmatprep.subr.mxu0 0.0
        %2899 = vmatpush1.msra.mxu0 %v2797
        %2900 = vmatprep.subr.mxu0 0.0
        %2901 = vmatpush1.msra.mxu0 %v2802
        %2902 = vmatprep.subr.mxu0 0.0
        %2903 = vmatpush1.msra.mxu0 %v2807
        %2904 = vmatprep.subr.mxu0 0.0
        %2905 = vmatpush1.msra.mxu0 %v2812
        %2906 = vmatprep.subr.mxu0 0.0
        %2907 = vmatpush1.msra.mxu0 %v2817
        %2908 = vmatprep.subr.mxu0 0.0
        %2909 = vmatpush1.msra.mxu0 %v2822
        %2910 = vmatprep.subr.mxu0 0.0
        %2911 = vmatpush1.msra.mxu0 %v2827
        %2912 = vmatprep.subr.mxu0 0.0
        %2913 = vmatpush1.msra.mxu0 %v2832
        %2914 = vmatprep.subr.mxu0 0.0
        %2915 = vmatpush1.msra.mxu0 %v2837
        %2916 = vmatprep.subr.mxu0 0.0
        %2917 = vmatpush1.msra.mxu0 %v2842
        %2918 = vmatprep.subr.mxu0 0.0
        %2919 = vmatpush1.msra.mxu0 %v2847
        %2920 = vmatprep.subr.mxu0 0.0
        %2921 = vmatpush1.msra.mxu0 %v2852
        %2922 = vmatprep.subr.mxu0 0.0
        %2923 = vmatpush1.msra.mxu0 %v2857
        %2924 = vmatprep.mubr.f32.mxu0 %v1609
        %2925 = vmatmul.mubr.f32.gmra.mrb[0].mxu0 %v1608
        %v2926 = vpop.f32.mrb[0].mxu0
        %v2927 = vadd.f32 0.0, %v2926
        %v2928 = vpop.f32.mrb[0].mxu0
        %2929 = vmatprep.mubr.f32.mxu0 %v1611
        %2930 = vmatmul.mubr.f32.gmra.mrb[0].mxu0 %v1610
        %v2931 = vpop.f32.mrb[0].mxu0
        %v2932 = vadd.f32 0.0, %v2931
        %v2933 = vpop.f32.mrb[0].mxu0
        %2934 = vmatprep.mubr.f32.mxu0 %v1613
        %2935 = vmatmul.mubr.f32.gmra.mrb[0].mxu0 %v1612
        %v2936 = vpop.f32.mrb[0].mxu0
        %v2937 = vadd.f32 0.0, %v2936
        %v2938 = vpop.f32.mrb[0].mxu0
        %2939 = vmatprep.mubr.f32.mxu0 %v1615
        %2940 = vmatmul.mubr.f32.gmra.mrb[0].mxu0 %v1614
        %v2941 = vpop.f32.mrb[0].mxu0
        %v2942 = vadd.f32 0.0, %v2941
        %v2943 = vpop.f32.mrb[0].mxu0
        %2944 = vmatprep.mubr.f32.mxu0 %v1617
        %2945 = vmatmul.mubr.f32.gmra.mrb[0].mxu0 %v1616
        %v2946 = vpop.f32.mrb[0].mxu0
        %v2947 = vadd.f32 0.0, %v2946
        %v2948 = vpop.f32.mrb[0].mxu0
        %2949 = vmatprep.mubr.f32.mxu0 %v1619
        %2950 = vmatmul.mubr.f32.gmra.mrb[0].mxu0 %v1618
        %v2951 = vpop.f32.mrb[0].mxu0
        %v2952 = vadd.f32 0.0, %v2951
        %v2953 = vpop.f32.mrb[0].mxu0
        %2954 = vmatprep.mubr.f32.mxu0 %v1621
        %2955 = vmatmul.mubr.f32.gmra.mrb[0].mxu0 %v1620
        %v2956 = vpop.f32.mrb[0].mxu0
        %v2957 = vadd.f32 0.0, %v2956
        %v2958 = vpop.f32.mrb[0].mxu0
        %2959 = vmatprep.mubr.f32.mxu0 %v1623
        %2960 = vmatmul.mubr.f32.gmra.mrb[0].mxu0 %v1622
        %v2961 = vpop.f32.mrb[0].mxu0
        %v2962 = vadd.f32 0.0, %v2961
        %v2963 = vpop.f32.mrb[0].mxu0
        %2964 = vmatprep.mubr.f32.mxu0 %v1625
        %2965 = vmatmul.mubr.f32.gmra.mrb[0].mxu0 %v1624
        %v2966 = vpop.f32.mrb[0].mxu0
        %v2967 = vadd.f32 0.0, %v2966
        %v2968 = vpop.f32.mrb[0].mxu0
        %2969 = vmatprep.mubr.f32.mxu0 %v1627
        %2970 = vmatmul.mubr.f32.gmra.mrb[0].mxu0 %v1626
        %v2971 = vpop.f32.mrb[0].mxu0
        %v2972 = vadd.f32 0.0, %v2971
        %v2973 = vpop.f32.mrb[0].mxu0
        %2974 = vmatprep.mubr.f32.mxu0 %v1629
        %2975 = vmatmul.mubr.f32.gmra.mrb[0].mxu0 %v1628
        %v2976 = vpop.f32.mrb[0].mxu0
        %v2977 = vadd.f32 0.0, %v2976
        %v2978 = vpop.f32.mrb[0].mxu0
        %2979 = vmatprep.mubr.f32.mxu0 %v1631
        %2980 = vmatmul.mubr.f32.gmra.mrb[0].mxu0 %v1630
        %v2981 = vpop.f32.mrb[0].mxu0
        %v2982 = vadd.f32 0.0, %v2981
        %v2983 = vpop.f32.mrb[0].mxu0
        %2984 = vmatprep.mubr.f32.mxu0 %v1633
        %2985 = vmatmul.mubr.f32.gmra.mrb[0].mxu0 %v1632
        %v2986 = vpop.f32.mrb[0].mxu0
        %v2987 = vadd.f32 0.0, %v2986
        %v2988 = vpop.f32.mrb[0].mxu0
        %2989 = vmatprep.mubr.f32.mxu0 %v1635
        %2990 = vmatmul.mubr.f32.gmra.mrb[0].mxu0 %v1634
        %v2991 = vpop.f32.mrb[0].mxu0
        %v2992 = vadd.f32 0.0, %v2991
        %v2993 = vpop.f32.mrb[0].mxu0
        %2994 = vmatprep.mubr.f32.mxu0 %v1637
        %2995 = vmatmul.mubr.f32.gmra.mrb[0].mxu0 %v1636
        %v2996 = vpop.f32.mrb[0].mxu0
        %v2997 = vadd.f32 0.0, %v2996
        %v2998 = vpop.f32.mrb[0].mxu0
        %2999 = vmatprep.mubr.f32.mxu0 %v1639
        %3000 = vmatmul.mubr.f32.gmra.mrb[0].mxu0 %v1638
        %v3001 = vpop.f32.mrb[0].mxu0
        %v3002 = vadd.f32 0.0, %v3001
        %v3003 = vpop.f32.mrb[0].mxu0
        %3004 = vdwg.mxu0
        %v3005 = vmul.f32 %v1707, %v947
        %v3006 = vmul.f32 %v1712, %v948
        %v3007 = vmul.f32 %v1717, %v949
        %v3008 = vmul.f32 %v1722, %v950
        %v3009 = vmul.f32 %v1727, %v951
        %v3010 = vmul.f32 %v1732, %v952
        %v3011 = vmul.f32 %v1737, %v953
        %v3012 = vmul.f32 %v1742, %v954
        %v3013 = vmul.f32 %v1747, %v955
        %v3014 = vmul.f32 %v1752, %v956
        %v3015 = vmul.f32 %v1757, %v957
        %v3016 = vmul.f32 %v1762, %v958
        %v3017 = vmul.f32 %v1767, %v959
        %v3018 = vmul.f32 %v1772, %v960
        %v3019 = vmul.f32 %v1777, %v961
        %v3020 = vmul.f32 %v1782, %v962
        %3021 = vadd.xlane.f32.xlu0 %v3005
        %v3022 = vpop.xlane.xlu0 %3021
        %3023 = vadd.xlane.f32.xlu0 %v3006
        %v3024 = vpop.xlane.xlu0 %3023
        %3025 = vadd.xlane.f32.xlu0 %v3007
        %v3026 = vpop.xlane.xlu0 %3025
        %3027 = vadd.xlane.f32.xlu0 %v3008
        %v3028 = vpop.xlane.xlu0 %3027
        %3029 = vadd.xlane.f32.xlu0 %v3009
        %v3030 = vpop.xlane.xlu0 %3029
        %3031 = vadd.xlane.f32.xlu0 %v3010
        %v3032 = vpop.xlane.xlu0 %3031
        %3033 = vadd.xlane.f32.xlu0 %v3011
        %v3034 = vpop.xlane.xlu0 %3033
        %3035 = vadd.xlane.f32.xlu0 %v3012
        %v3036 = vpop.xlane.xlu0 %3035
        %3037 = vadd.xlane.f32.xlu0 %v3013
        %v3038 = vpop.xlane.xlu0 %3037
        %3039 = vadd.xlane.f32.xlu0 %v3014
        %v3040 = vpop.xlane.xlu0 %3039
        %3041 = vadd.xlane.f32.xlu0 %v3015
        %v3042 = vpop.xlane.xlu0 %3041
        %3043 = vadd.xlane.f32.xlu0 %v3016
        %v3044 = vpop.xlane.xlu0 %3043
        %3045 = vadd.xlane.f32.xlu0 %v3017
        %v3046 = vpop.xlane.xlu0 %3045
        %3047 = vadd.xlane.f32.xlu0 %v3018
        %v3048 = vpop.xlane.xlu0 %3047
        %3049 = vadd.xlane.f32.xlu0 %v3019
        %v3050 = vpop.xlane.xlu0 %3049
        %3051 = vadd.xlane.f32.xlu0 %v3020
        %v3052 = vpop.xlane.xlu0 %3051
        %v3053 = vmul.f32 %v2317, %v947
        %v3054 = vmul.f32 %v2322, %v948
        %v3055 = vmul.f32 %v2327, %v949
        %v3056 = vmul.f32 %v2332, %v950
        %v3057 = vmul.f32 %v2337, %v951
        %v3058 = vmul.f32 %v2342, %v952
        %v3059 = vmul.f32 %v2347, %v953
        %v3060 = vmul.f32 %v2352, %v954
        %v3061 = vmul.f32 %v2357, %v955
        %v3062 = vmul.f32 %v2362, %v956
        %v3063 = vmul.f32 %v2367, %v957
        %v3064 = vmul.f32 %v2372, %v958
        %v3065 = vmul.f32 %v2377, %v959
        %v3066 = vmul.f32 %v2382, %v960
        %v3067 = vmul.f32 %v2387, %v961
        %v3068 = vmul.f32 %v2392, %v962
        %3069 = vadd.xlane.f32.xlu0 %v3053
        %v3070 = vpop.xlane.xlu0 %3069
        %3071 = vadd.xlane.f32.xlu0 %v3054
        %v3072 = vpop.xlane.xlu0 %3071
        %3073 = vadd.xlane.f32.xlu0 %v3055
        %v3074 = vpop.xlane.xlu0 %3073
        %3075 = vadd.xlane.f32.xlu0 %v3056
        %v3076 = vpop.xlane.xlu0 %3075
        %3077 = vadd.xlane.f32.xlu0 %v3057
        %v3078 = vpop.xlane.xlu0 %3077
        %3079 = vadd.xlane.f32.xlu0 %v3058
        %v3080 = vpop.xlane.xlu0 %3079
        %3081 = vadd.xlane.f32.xlu0 %v3059
        %v3082 = vpop.xlane.xlu0 %3081
        %3083 = vadd.xlane.f32.xlu0 %v3060
        %v3084 = vpop.xlane.xlu0 %3083
        %3085 = vadd.xlane.f32.xlu0 %v3061
        %v3086 = vpop.xlane.xlu0 %3085
        %3087 = vadd.xlane.f32.xlu0 %v3062
        %v3088 = vpop.xlane.xlu0 %3087
        %3089 = vadd.xlane.f32.xlu0 %v3063
        %v3090 = vpop.xlane.xlu0 %3089
        %3091 = vadd.xlane.f32.xlu0 %v3064
        %v3092 = vpop.xlane.xlu0 %3091
        %3093 = vadd.xlane.f32.xlu0 %v3065
        %v3094 = vpop.xlane.xlu0 %3093
        %3095 = vadd.xlane.f32.xlu0 %v3066
        %v3096 = vpop.xlane.xlu0 %3095
        %3097 = vadd.xlane.f32.xlu0 %v3067
        %v3098 = vpop.xlane.xlu0 %3097
        %3099 = vadd.xlane.f32.xlu0 %v3068
        %v3100 = vpop.xlane.xlu0 %3099
        %v3101 = vmul.f32 %v2317, %v1707
        %v3102 = vmul.f32 %v2322, %v1712
        %v3103 = vmul.f32 %v2327, %v1717
        %v3104 = vmul.f32 %v2332, %v1722
        %v3105 = vmul.f32 %v2337, %v1727
        %v3106 = vmul.f32 %v2342, %v1732
        %v3107 = vmul.f32 %v2347, %v1737
        %v3108 = vmul.f32 %v2352, %v1742
        %v3109 = vmul.f32 %v2357, %v1747
        %v3110 = vmul.f32 %v2362, %v1752
        %v3111 = vmul.f32 %v2367, %v1757
        %v3112 = vmul.f32 %v2372, %v1762
        %v3113 = vmul.f32 %v2377, %v1767
        %v3114 = vmul.f32 %v2382, %v1772
        %v3115 = vmul.f32 %v2387, %v1777
        %v3116 = vmul.f32 %v2392, %v1782
        %3117 = vadd.xlane.f32.xlu0 %v3101
        %v3118 = vpop.xlane.xlu0 %3117
        %3119 = vadd.xlane.f32.xlu0 %v3102
        %v3120 = vpop.xlane.xlu0 %3119
        %3121 = vadd.xlane.f32.xlu0 %v3103
        %v3122 = vpop.xlane.xlu0 %3121
        %3123 = vadd.xlane.f32.xlu0 %v3104
        %v3124 = vpop.xlane.xlu0 %3123
        %3125 = vadd.xlane.f32.xlu0 %v3105
        %v3126 = vpop.xlane.xlu0 %3125
        %3127 = vadd.xlane.f32.xlu0 %v3106
        %v3128 = vpop.xlane.xlu0 %3127
        %3129 = vadd.xlane.f32.xlu0 %v3107
        %v3130 = vpop.xlane.xlu0 %3129
        %3131 = vadd.xlane.f32.xlu0 %v3108
        %v3132 = vpop.xlane.xlu0 %3131
        %3133 = vadd.xlane.f32.xlu0 %v3109
        %v3134 = vpop.xlane.xlu0 %3133
        %3135 = vadd.xlane.f32.xlu0 %v3110
        %v3136 = vpop.xlane.xlu0 %3135
        %3137 = vadd.xlane.f32.xlu0 %v3111
        %v3138 = vpop.xlane.xlu0 %3137
        %3139 = vadd.xlane.f32.xlu0 %v3112
        %v3140 = vpop.xlane.xlu0 %3139
        %3141 = vadd.xlane.f32.xlu0 %v3113
        %v3142 = vpop.xlane.xlu0 %3141
        %3143 = vadd.xlane.f32.xlu0 %v3114
        %v3144 = vpop.xlane.xlu0 %3143
        %3145 = vadd.xlane.f32.xlu0 %v3115
        %v3146 = vpop.xlane.xlu0 %3145
        %3147 = vadd.xlane.f32.xlu0 %v3116
        %v3148 = vpop.xlane.xlu0 %3147
        %v3149 = vmul.f32 %v2927, %v947
        %v3150 = vmul.f32 %v2932, %v948
        %v3151 = vmul.f32 %v2937, %v949
        %v3152 = vmul.f32 %v2942, %v950
        %v3153 = vmul.f32 %v2947, %v951
        %v3154 = vmul.f32 %v2952, %v952
        %v3155 = vmul.f32 %v2957, %v953
        %v3156 = vmul.f32 %v2962, %v954
        %v3157 = vmul.f32 %v2967, %v955
        %v3158 = vmul.f32 %v2972, %v956
        %v3159 = vmul.f32 %v2977, %v957
        %v3160 = vmul.f32 %v2982, %v958
        %v3161 = vmul.f32 %v2987, %v959
        %v3162 = vmul.f32 %v2992, %v960
        %v3163 = vmul.f32 %v2997, %v961
        %v3164 = vmul.f32 %v3002, %v962
        %3165 = vadd.xlane.f32.xlu0 %v3149
        %v3166 = vpop.xlane.xlu0 %3165
        %3167 = vadd.xlane.f32.xlu0 %v3150
        %v3168 = vpop.xlane.xlu0 %3167
        %3169 = vadd.xlane.f32.xlu0 %v3151
        %v3170 = vpop.xlane.xlu0 %3169
        %3171 = vadd.xlane.f32.xlu0 %v3152
        %v3172 = vpop.xlane.xlu0 %3171
        %3173 = vadd.xlane.f32.xlu0 %v3153
        %v3174 = vpop.xlane.xlu0 %3173
        %3175 = vadd.xlane.f32.xlu0 %v3154
        %v3176 = vpop.xlane.xlu0 %3175
        %3177 = vadd.xlane.f32.xlu0 %v3155
        %v3178 = vpop.xlane.xlu0 %3177
        %3179 = vadd.xlane.f32.xlu0 %v3156
        %v3180 = vpop.xlane.xlu0 %3179
        %3181 = vadd.xlane.f32.xlu0 %v3157
        %v3182 = vpop.xlane.xlu0 %3181
        %3183 = vadd.xlane.f32.xlu0 %v3158
        %v3184 = vpop.xlane.xlu0 %3183
        %3185 = vadd.xlane.f32.xlu0 %v3159
        %v3186 = vpop.xlane.xlu0 %3185
        %3187 = vadd.xlane.f32.xlu0 %v3160
        %v3188 = vpop.xlane.xlu0 %3187
        %3189 = vadd.xlane.f32.xlu0 %v3161
        %v3190 = vpop.xlane.xlu0 %3189
        %3191 = vadd.xlane.f32.xlu0 %v3162
        %v3192 = vpop.xlane.xlu0 %3191
        %3193 = vadd.xlane.f32.xlu0 %v3163
        %v3194 = vpop.xlane.xlu0 %3193
        %3195 = vadd.xlane.f32.xlu0 %v3164
        %v3196 = vpop.xlane.xlu0 %3195
        %v3197 = vmul.f32 %v2927, %v1707
        %v3198 = vmul.f32 %v2932, %v1712
        %v3199 = vmul.f32 %v2937, %v1717
        %v3200 = vmul.f32 %v2942, %v1722
        %v3201 = vmul.f32 %v2947, %v1727
        %v3202 = vmul.f32 %v2952, %v1732
        %v3203 = vmul.f32 %v2957, %v1737
        %v3204 = vmul.f32 %v2962, %v1742
        %v3205 = vmul.f32 %v2967, %v1747
        %v3206 = vmul.f32 %v2972, %v1752
        %v3207 = vmul.f32 %v2977, %v1757
        %v3208 = vmul.f32 %v2982, %v1762
        %v3209 = vmul.f32 %v2987, %v1767
        %v3210 = vmul.f32 %v2992, %v1772
        %v3211 = vmul.f32 %v2997, %v1777
        %v3212 = vmul.f32 %v3002, %v1782
        %3213 = vadd.xlane.f32.xlu0 %v3197
        %v3214 = vpop.xlane.xlu0 %3213
        %3215 = vadd.xlane.f32.xlu0 %v3198
        %v3216 = vpop.xlane.xlu0 %3215
        %3217 = vadd.xlane.f32.xlu0 %v3199
        %v3218 = vpop.xlane.xlu0 %3217
        %3219 = vadd.xlane.f32.xlu0 %v3200
        %v3220 = vpop.xlane.xlu0 %3219
        %3221 = vadd.xlane.f32.xlu0 %v3201
        %v3222 = vpop.xlane.xlu0 %3221
        %3223 = vadd.xlane.f32.xlu0 %v3202
        %v3224 = vpop.xlane.xlu0 %3223
        %3225 = vadd.xlane.f32.xlu0 %v3203
        %v3226 = vpop.xlane.xlu0 %3225
        %3227 = vadd.xlane.f32.xlu0 %v3204
        %v3228 = vpop.xlane.xlu0 %3227
        %3229 = vadd.xlane.f32.xlu0 %v3205
        %v3230 = vpop.xlane.xlu0 %3229
        %3231 = vadd.xlane.f32.xlu0 %v3206
        %v3232 = vpop.xlane.xlu0 %3231
        %3233 = vadd.xlane.f32.xlu0 %v3207
        %v3234 = vpop.xlane.xlu0 %3233
        %3235 = vadd.xlane.f32.xlu0 %v3208
        %v3236 = vpop.xlane.xlu0 %3235
        %3237 = vadd.xlane.f32.xlu0 %v3209
        %v3238 = vpop.xlane.xlu0 %3237
        %3239 = vadd.xlane.f32.xlu0 %v3210
        %v3240 = vpop.xlane.xlu0 %3239
        %3241 = vadd.xlane.f32.xlu0 %v3211
        %v3242 = vpop.xlane.xlu0 %3241
        %3243 = vadd.xlane.f32.xlu0 %v3212
        %v3244 = vpop.xlane.xlu0 %3243
        %v3245 = vmul.f32 %v2927, %v2317
        %v3246 = vmul.f32 %v2932, %v2322
        %v3247 = vmul.f32 %v2937, %v2327
        %v3248 = vmul.f32 %v2942, %v2332
        %v3249 = vmul.f32 %v2947, %v2337
        %v3250 = vmul.f32 %v2952, %v2342
        %v3251 = vmul.f32 %v2957, %v2347
        %v3252 = vmul.f32 %v2962, %v2352
        %v3253 = vmul.f32 %v2967, %v2357
        %v3254 = vmul.f32 %v2972, %v2362
        %v3255 = vmul.f32 %v2977, %v2367
        %v3256 = vmul.f32 %v2982, %v2372
        %v3257 = vmul.f32 %v2987, %v2377
        %v3258 = vmul.f32 %v2992, %v2382
        %v3259 = vmul.f32 %v2997, %v2387
        %v3260 = vmul.f32 %v3002, %v2392
        %3261 = vadd.xlane.f32.xlu0 %v3245
        %v3262 = vpop.xlane.xlu0 %3261
        %3263 = vadd.xlane.f32.xlu0 %v3246
        %v3264 = vpop.xlane.xlu0 %3263
        %3265 = vadd.xlane.f32.xlu0 %v3247
        %v3266 = vpop.xlane.xlu0 %3265
        %3267 = vadd.xlane.f32.xlu0 %v3248
        %v3268 = vpop.xlane.xlu0 %3267
        %3269 = vadd.xlane.f32.xlu0 %v3249
        %v3270 = vpop.xlane.xlu0 %3269
        %3271 = vadd.xlane.f32.xlu0 %v3250
        %v3272 = vpop.xlane.xlu0 %3271
        %3273 = vadd.xlane.f32.xlu0 %v3251
        %v3274 = vpop.xlane.xlu0 %3273
        %3275 = vadd.xlane.f32.xlu0 %v3252
        %v3276 = vpop.xlane.xlu0 %3275
        %3277 = vadd.xlane.f32.xlu0 %v3253
        %v3278 = vpop.xlane.xlu0 %3277
        %3279 = vadd.xlane.f32.xlu0 %v3254
        %v3280 = vpop.xlane.xlu0 %3279
        %3281 = vadd.xlane.f32.xlu0 %v3255
        %v3282 = vpop.xlane.xlu0 %3281
        %3283 = vadd.xlane.f32.xlu0 %v3256
        %v3284 = vpop.xlane.xlu0 %3283
        %3285 = vadd.xlane.f32.xlu0 %v3257
        %v3286 = vpop.xlane.xlu0 %3285
        %3287 = vadd.xlane.f32.xlu0 %v3258
        %v3288 = vpop.xlane.xlu0 %3287
        %3289 = vadd.xlane.f32.xlu0 %v3259
        %v3290 = vpop.xlane.xlu0 %3289
        %3291 = vadd.xlane.f32.xlu0 %v3260
        %v3292 = vpop.xlane.xlu0 %3291
        %vm3293 = vcmask 7168
        %v3294 = vsel %vm3293, %v3022, %v3070
        %v3295 = vsel %vm3293, %v3024, %v3072
        %v3296 = vsel %vm3293, %v3026, %v3074
        %v3297 = vsel %vm3293, %v3028, %v3076
        %v3298 = vsel %vm3293, %v3030, %v3078
        %v3299 = vsel %vm3293, %v3032, %v3080
        %v3300 = vsel %vm3293, %v3034, %v3082
        %v3301 = vsel %vm3293, %v3036, %v3084
        %v3302 = vsel %vm3293, %v3038, %v3086
        %v3303 = vsel %vm3293, %v3040, %v3088
        %v3304 = vsel %vm3293, %v3042, %v3090
        %v3305 = vsel %vm3293, %v3044, %v3092
        %v3306 = vsel %vm3293, %v3046, %v3094
        %v3307 = vsel %vm3293, %v3048, %v3096
        %v3308 = vsel %vm3293, %v3050, %v3098
        %v3309 = vsel %vm3293, %v3052, %v3100
        %vm3310 = vcmask 15360
        %v3311 = vsel %vm3310, %v3294, %v3118
        %v3312 = vsel %vm3310, %v3295, %v3120
        %v3313 = vsel %vm3310, %v3296, %v3122
        %v3314 = vsel %vm3310, %v3297, %v3124
        %v3315 = vsel %vm3310, %v3298, %v3126
        %v3316 = vsel %vm3310, %v3299, %v3128
        %v3317 = vsel %vm3310, %v3300, %v3130
        %v3318 = vsel %vm3310, %v3301, %v3132
        %v3319 = vsel %vm3310, %v3302, %v3134
        %v3320 = vsel %vm3310, %v3303, %v3136
        %v3321 = vsel %vm3310, %v3304, %v3138
        %v3322 = vsel %vm3310, %v3305, %v3140
        %v3323 = vsel %vm3310, %v3306, %v3142
        %v3324 = vsel %vm3310, %v3307, %v3144
        %v3325 = vsel %vm3310, %v3308, %v3146
        %v3326 = vsel %vm3310, %v3309, %v3148
        %vm3327 = vcmask 23552
        %v3328 = vsel %vm3327, %v3311, %v3166
        %v3329 = vsel %vm3327, %v3312, %v3168
        %v3330 = vsel %vm3327, %v3313, %v3170
        %v3331 = vsel %vm3327, %v3314, %v3172
        %v3332 = vsel %vm3327, %v3315, %v3174
        %v3333 = vsel %vm3327, %v3316, %v3176
        %v3334 = vsel %vm3327, %v3317, %v3178
        %v3335 = vsel %vm3327, %v3318, %v3180
        %v3336 = vsel %vm3327, %v3319, %v3182
        %v3337 = vsel %vm3327, %v3320, %v3184
        %v3338 = vsel %vm3327, %v3321, %v3186
        %v3339 = vsel %vm3327, %v3322, %v3188
        %v3340 = vsel %vm3327, %v3323, %v3190
        %v3341 = vsel %vm3327, %v3324, %v3192
        %v3342 = vsel %vm3327, %v3325, %v3194
        %v3343 = vsel %vm3327, %v3326, %v3196
        %vm3344 = vcmask 31744
        %v3345 = vsel %vm3344, %v3328, %v3214
        %v3346 = vsel %vm3344, %v3329, %v3216
        %v3347 = vsel %vm3344, %v3330, %v3218
        %v3348 = vsel %vm3344, %v3331, %v3220
        %v3349 = vsel %vm3344, %v3332, %v3222
        %v3350 = vsel %vm3344, %v3333, %v3224
        %v3351 = vsel %vm3344, %v3334, %v3226
        %v3352 = vsel %vm3344, %v3335, %v3228
        %v3353 = vsel %vm3344, %v3336, %v3230
        %v3354 = vsel %vm3344, %v3337, %v3232
        %v3355 = vsel %vm3344, %v3338, %v3234
        %v3356 = vsel %vm3344, %v3339, %v3236
        %v3357 = vsel %vm3344, %v3340, %v3238
        %v3358 = vsel %vm3344, %v3341, %v3240
        %v3359 = vsel %vm3344, %v3342, %v3242
        %v3360 = vsel %vm3344, %v3343, %v3244
        %vm3361 = vcmask 39936
        %v3362 = vsel %vm3361, %v3345, %v3262
        %v3363 = vsel %vm3361, %v3346, %v3264
        %v3364 = vsel %vm3361, %v3347, %v3266
        %v3365 = vsel %vm3361, %v3348, %v3268
        %v3366 = vsel %vm3361, %v3349, %v3270
        %v3367 = vsel %vm3361, %v3350, %v3272
        %v3368 = vsel %vm3361, %v3351, %v3274
        %v3369 = vsel %vm3361, %v3352, %v3276
        %v3370 = vsel %vm3361, %v3353, %v3278
        %v3371 = vsel %vm3361, %v3354, %v3280
        %v3372 = vsel %vm3361, %v3355, %v3282
        %v3373 = vsel %vm3361, %v3356, %v3284
        %v3374 = vsel %vm3361, %v3357, %v3286
        %v3375 = vsel %vm3361, %v3358, %v3288
        %v3376 = vsel %vm3361, %v3359, %v3290
        %v3377 = vsel %vm3361, %v3360, %v3292
        %vm3378 = vcmask 48128
        %v3379 = vsel %vm3378, %v3362, 0.0
        %v3380 = vsel %vm3378, %v3363, 0.0
        %v3381 = vsel %vm3378, %v3364, 0.0
        %v3382 = vsel %vm3378, %v3365, 0.0
        %v3383 = vsel %vm3378, %v3366, 0.0
        %v3384 = vsel %vm3378, %v3367, 0.0
        %v3385 = vsel %vm3378, %v3368, 0.0
        %v3386 = vsel %vm3378, %v3369, 0.0
        %v3387 = vsel %vm3378, %v3370, 0.0
        %v3388 = vsel %vm3378, %v3371, 0.0
        %v3389 = vsel %vm3378, %v3372, 0.0
        %v3390 = vsel %vm3378, %v3373, 0.0
        %v3391 = vsel %vm3378, %v3374, 0.0
        %v3392 = vsel %vm3378, %v3375, 0.0
        %v3393 = vsel %vm3378, %v3376, 0.0
        %v3394 = vsel %vm3378, %v3377, 0.0
        %v3395 = vld [vmem:[%s11] sm:$0xf]
        %v3396 = vld [vmem:[%s11 + $0x4] sm:$0xf]
        %v3397 = vld [vmem:[%s11 + $0x8] sm:$0xf]
        %v3398 = vld [vmem:[%s11 + $0xc] sm:$0xf]
        %v3399 = vld [vmem:[%s11 + $0x10] sm:$0xf]
        %v3400 = vld [vmem:[%s11 + $0x14] sm:$0xf]
        %v3401 = vld [vmem:[%s11 + $0x18] sm:$0xf]
        %v3402 = vld [vmem:[%s11 + $0x1c] sm:$0xf]
        %v3403 = vld [vmem:[%s11 + $0x20] sm:$0xf]
        %v3404 = vld [vmem:[%s11 + $0x24] sm:$0xf]
        %v3405 = vld [vmem:[%s11 + $0x28] sm:$0xf]
        %v3406 = vld [vmem:[%s11 + $0x2c] sm:$0xf]
        %v3407 = vld [vmem:[%s11 + $0x30] sm:$0xf]
        %v3408 = vld [vmem:[%s11 + $0x34] sm:$0xf]
        %v3409 = vld [vmem:[%s11 + $0x38] sm:$0xf]
        %v3410 = vld [vmem:[%s11 + $0x3c] sm:$0xf]
        %v3411 = vld [vmem:[%s11 + $0x40] sm:$0xf]
        %v3412 = vld [vmem:[%s11 + $0x44] sm:$0xf]
        %v3413 = vld [vmem:[%s11 + $0x48] sm:$0xf]
        %v3414 = vld [vmem:[%s11 + $0x4c] sm:$0xf]
        %v3415 = vld [vmem:[%s11 + $0x50] sm:$0xf]
        %v3416 = vld [vmem:[%s11 + $0x54] sm:$0xf]
        %v3417 = vld [vmem:[%s11 + $0x58] sm:$0xf]
        %v3418 = vld [vmem:[%s11 + $0x5c] sm:$0xf]
        %v3419 = vld [vmem:[%s11 + $0x60] sm:$0xf]
        %v3420 = vld [vmem:[%s11 + $0x64] sm:$0xf]
        %v3421 = vld [vmem:[%s11 + $0x68] sm:$0xf]
        %v3422 = vld [vmem:[%s11 + $0x6c] sm:$0xf]
        %v3423 = vld [vmem:[%s11 + $0x70] sm:$0xf]
        %v3424 = vld [vmem:[%s11 + $0x74] sm:$0xf]
        %v3425 = vld [vmem:[%s11 + $0x78] sm:$0xf]
        %v3426 = vld [vmem:[%s11 + $0x7c] sm:$0xf]
        %v3427 = vpack.c.bf16 %v948, %v947
        %v3428 = vpack.c.bf16 %v3380, %v3379
        %v3429 = vpack.c.bf16 %v950, %v949
        %v3430 = vpack.c.bf16 %v3382, %v3381
        %v3431 = vpack.c.bf16 %v952, %v951
        %v3432 = vpack.c.bf16 %v3384, %v3383
        %v3433 = vpack.c.bf16 %v954, %v953
        %v3434 = vpack.c.bf16 %v3386, %v3385
        %v3435 = vpack.c.bf16 %v956, %v955
        %v3436 = vpack.c.bf16 %v3388, %v3387
        %v3437 = vpack.c.bf16 %v958, %v957
        %v3438 = vpack.c.bf16 %v3390, %v3389
        %v3439 = vpack.c.bf16 %v960, %v959
        %v3440 = vpack.c.bf16 %v3392, %v3391
        %v3441 = vpack.c.bf16 %v962, %v961
        %v3442 = vpack.c.bf16 %v3394, %v3393
        %v3443 = vld [vmem:[%s12] sm:$0x1]
        %v3445 = vlaneseq
        %v3446 = vshrl.u32 %v3445, 7
        %v3447 = vsub.s32 0, %v3446
        %v3448 = vrot.slane %v3443, %v3447
        %v3482 = vunpack.c.l.b16 %v3395
        %v3483 = vunpack.c.l.b16 %v3396
        %v3484 = vunpack.c.l.b16 %v3397
        %v3485 = vunpack.c.l.b16 %v3398
        %v3486 = vunpack.c.l.b16 %v3399
        %v3487 = vunpack.c.l.b16 %v3400
        %v3488 = vunpack.c.l.b16 %v3401
        %v3489 = vunpack.c.l.b16 %v3402
        %v3490 = vunpack.c.l.b16 %v3403
        %v3491 = vunpack.c.l.b16 %v3404
        %v3492 = vunpack.c.l.b16 %v3405
        %v3493 = vunpack.c.l.b16 %v3406
        %v3494 = vunpack.c.l.b16 %v3407
        %v3495 = vunpack.c.l.b16 %v3408
        %v3496 = vunpack.c.l.b16 %v3409
        %v3497 = vunpack.c.l.b16 %v3410
        %v3498 = vunpack.c.l.b16 %v3411
        %v3499 = vunpack.c.l.b16 %v3412
        %v3500 = vunpack.c.l.b16 %v3413
        %v3501 = vunpack.c.l.b16 %v3414
        %v3502 = vunpack.c.l.b16 %v3415
        %v3503 = vunpack.c.l.b16 %v3416
        %v3504 = vunpack.c.l.b16 %v3417
        %v3505 = vunpack.c.l.b16 %v3418
        %v3506 = vunpack.c.l.b16 %v3419
        %v3507 = vunpack.c.l.b16 %v3420
        %v3508 = vunpack.c.l.b16 %v3421
        %v3509 = vunpack.c.l.b16 %v3422
        %v3510 = vunpack.c.l.b16 %v3423
        %v3511 = vunpack.c.l.b16 %v3424
        %v3512 = vunpack.c.l.b16 %v3425
        %v3513 = vunpack.c.l.b16 %v3426
        %v3514 = vpack.c.b16 %v3483, %v3482
        %v3515 = vpack.c.b16 %v3485, %v3484
        %v3516 = vpack.c.b16 %v3487, %v3486
        %v3517 = vpack.c.b16 %v3489, %v3488
        %v3518 = vpack.c.b16 %v3491, %v3490
        %v3519 = vpack.c.b16 %v3493, %v3492
        %v3520 = vpack.c.b16 %v3495, %v3494
        %v3521 = vpack.c.b16 %v3497, %v3496
        %v3522 = vpack.c.b16 %v3499, %v3498
        %v3523 = vpack.c.b16 %v3501, %v3500
        %v3524 = vpack.c.b16 %v3503, %v3502
        %v3525 = vpack.c.b16 %v3505, %v3504
        %v3526 = vpack.c.b16 %v3507, %v3506
        %v3527 = vpack.c.b16 %v3509, %v3508
        %v3528 = vpack.c.b16 %v3511, %v3510
        %v3529 = vpack.c.b16 %v3513, %v3512
        %3546 = vmatprep.subr.bf16.mxu0 0
        %3547 = vmatpush1.bf16.msra.mxu0 %v3514
        %3548 = vmatprep.subr.bf16.mxu0 0
        %3549 = vmatpush1.bf16.msra.mxu0 %v3515
        %3550 = vmatprep.subr.bf16.mxu0 0
        %3551 = vmatpush1.bf16.msra.mxu0 %v3516
        %3552 = vmatprep.subr.bf16.mxu0 0
        %3553 = vmatpush1.bf16.msra.mxu0 %v3517
        %3554 = vmatprep.subr.bf16.mxu0 0
        %3555 = vmatpush1.bf16.msra.mxu0 %v3518
        %3556 = vmatprep.subr.bf16.mxu0 0
        %3557 = vmatpush1.bf16.msra.mxu0 %v3519
        %3558 = vmatprep.subr.bf16.mxu0 0
        %3559 = vmatpush1.bf16.msra.mxu0 %v3520
        %3560 = vmatprep.subr.bf16.mxu0 0
        %3561 = vmatpush1.bf16.msra.mxu0 %v3521
        %3562 = vmatprep.subr.bf16.mxu0 0
        %3563 = vmatpush1.bf16.msra.mxu0 %v3522
        %3564 = vmatprep.subr.bf16.mxu0 0
        %3565 = vmatpush1.bf16.msra.mxu0 %v3523
        %3566 = vmatprep.subr.bf16.mxu0 0
        %3567 = vmatpush1.bf16.msra.mxu0 %v3524
        %3568 = vmatprep.subr.bf16.mxu0 0
        %3569 = vmatpush1.bf16.msra.mxu0 %v3525
        %3570 = vmatprep.subr.bf16.mxu0 0
        %3571 = vmatpush1.bf16.msra.mxu0 %v3526
        %3572 = vmatprep.subr.bf16.mxu0 0
        %3573 = vmatpush1.bf16.msra.mxu0 %v3527
        %3574 = vmatprep.subr.bf16.mxu0 0
        %3575 = vmatpush1.bf16.msra.mxu0 %v3528
        %3576 = vmatprep.subr.bf16.mxu0 0
        %3577 = vmatpush1.bf16.msra.mxu0 %v3529
        %3578 = vmatprep.mubr.bf16.mxu0 %v3428
        %3579 = vmatmul.mubr.bf16.gmra.mrb[0].mxu0 %v3427
        %v3580 = vpop.f32.mrb[0].mxu0
        %v3581 = vadd.f32 %v3448, %v3580
        %v3582 = vpop.f32.mrb[0].mxu0
        %v3583 = vpop.f32.mrb[0].mxu0
        %v3584 = vadd.f32 %v3448, %v3583
        %v3585 = vpop.f32.mrb[0].mxu0
        %3586 = vmatprep.mubr.bf16.mxu0 %v3430
        %3587 = vmatmul.mubr.bf16.gmra.mrb[0].mxu0 %v3429
        %v3588 = vpop.f32.mrb[0].mxu0
        %v3589 = vadd.f32 %v3448, %v3588
        %v3590 = vpop.f32.mrb[0].mxu0
        %v3591 = vpop.f32.mrb[0].mxu0
        %v3592 = vadd.f32 %v3448, %v3591
        %v3593 = vpop.f32.mrb[0].mxu0
        %3594 = vmatprep.mubr.bf16.mxu0 %v3432
        %3595 = vmatmul.mubr.bf16.gmra.mrb[0].mxu0 %v3431
        %v3596 = vpop.f32.mrb[0].mxu0
        %v3597 = vadd.f32 %v3448, %v3596
        %v3598 = vpop.f32.mrb[0].mxu0
        %v3599 = vpop.f32.mrb[0].mxu0
        %v3600 = vadd.f32 %v3448, %v3599
        %v3601 = vpop.f32.mrb[0].mxu0
        %3602 = vmatprep.mubr.bf16.mxu0 %v3434
        %3603 = vmatmul.mubr.bf16.gmra.mrb[0].mxu0 %v3433
        %v3604 = vpop.f32.mrb[0].mxu0
        %v3605 = vadd.f32 %v3448, %v3604
        %v3606 = vpop.f32.mrb[0].mxu0
        %v3607 = vpop.f32.mrb[0].mxu0
        %v3608 = vadd.f32 %v3448, %v3607
        %v3609 = vpop.f32.mrb[0].mxu0
        %3610 = vmatprep.mubr.bf16.mxu0 %v3436
        %3611 = vmatmul.mubr.bf16.gmra.mrb[0].mxu0 %v3435
        %v3612 = vpop.f32.mrb[0].mxu0
        %v3613 = vadd.f32 %v3448, %v3612
        %v3614 = vpop.f32.mrb[0].mxu0
        %v3615 = vpop.f32.mrb[0].mxu0
        %v3616 = vadd.f32 %v3448, %v3615
        %v3617 = vpop.f32.mrb[0].mxu0
        %3618 = vmatprep.mubr.bf16.mxu0 %v3438
        %3619 = vmatmul.mubr.bf16.gmra.mrb[0].mxu0 %v3437
        %v3620 = vpop.f32.mrb[0].mxu0
        %v3621 = vadd.f32 %v3448, %v3620
        %v3622 = vpop.f32.mrb[0].mxu0
        %v3623 = vpop.f32.mrb[0].mxu0
        %v3624 = vadd.f32 %v3448, %v3623
        %v3625 = vpop.f32.mrb[0].mxu0
        %3626 = vmatprep.mubr.bf16.mxu0 %v3440
        %3627 = vmatmul.mubr.bf16.gmra.mrb[0].mxu0 %v3439
        %v3628 = vpop.f32.mrb[0].mxu0
        %v3629 = vadd.f32 %v3448, %v3628
        %v3630 = vpop.f32.mrb[0].mxu0
        %v3631 = vpop.f32.mrb[0].mxu0
        %v3632 = vadd.f32 %v3448, %v3631
        %v3633 = vpop.f32.mrb[0].mxu0
        %3634 = vmatprep.mubr.bf16.mxu0 %v3442
        %3635 = vmatmul.mubr.bf16.gmra.mrb[0].mxu0 %v3441
        %v3636 = vpop.f32.mrb[0].mxu0
        %v3637 = vadd.f32 %v3448, %v3636
        %v3638 = vpop.f32.mrb[0].mxu0
        %v3639 = vpop.f32.mrb[0].mxu0
        %v3640 = vadd.f32 %v3448, %v3639
        %v3641 = vpop.f32.mrb[0].mxu0
        %3642 = vdwg.mxu0
        %v3643 = vmax.f32 %v3581, 0.0
        %v3644 = vmax.f32 %v3584, 0.0
        %v3645 = vmax.f32 %v3589, 0.0
        %v3646 = vmax.f32 %v3592, 0.0
        %v3647 = vmax.f32 %v3597, 0.0
        %v3648 = vmax.f32 %v3600, 0.0
        %v3649 = vmax.f32 %v3605, 0.0
        %v3650 = vmax.f32 %v3608, 0.0
        %v3651 = vmax.f32 %v3613, 0.0
        %v3652 = vmax.f32 %v3616, 0.0
        %v3653 = vmax.f32 %v3621, 0.0
        %v3654 = vmax.f32 %v3624, 0.0
        %v3655 = vmax.f32 %v3629, 0.0
        %v3656 = vmax.f32 %v3632, 0.0
        %v3657 = vmax.f32 %v3637, 0.0
        %v3658 = vmax.f32 %v3640, 0.0
        %v3659 = vld [vmem:[%s13] sm:$0xf]
        %v3660 = vld [vmem:[%s13 + $0x4] sm:$0xf]
        %v3661 = vld [vmem:[%s13 + $0x8] sm:$0xf]
        %v3662 = vld [vmem:[%s13 + $0xc] sm:$0xf]
        %v3663 = vld [vmem:[%s13 + $0x10] sm:$0xf]
        %v3664 = vld [vmem:[%s13 + $0x14] sm:$0xf]
        %v3665 = vld [vmem:[%s13 + $0x18] sm:$0xf]
        %v3666 = vld [vmem:[%s13 + $0x1c] sm:$0xf]
        %v3667 = vld [vmem:[%s13 + $0x20] sm:$0xf]
        %v3668 = vld [vmem:[%s13 + $0x24] sm:$0xf]
        %v3669 = vld [vmem:[%s13 + $0x28] sm:$0xf]
        %v3670 = vld [vmem:[%s13 + $0x2c] sm:$0xf]
        %v3671 = vld [vmem:[%s13 + $0x30] sm:$0xf]
        %v3672 = vld [vmem:[%s13 + $0x34] sm:$0xf]
        %v3673 = vld [vmem:[%s13 + $0x38] sm:$0xf]
        %v3674 = vld [vmem:[%s13 + $0x3c] sm:$0xf]
        %v3675 = vpack.c.bf16 %v3644, %v3643
        %v3676 = vpack.c.bf16 %v3646, %v3645
        %v3677 = vpack.c.bf16 %v3648, %v3647
        %v3678 = vpack.c.bf16 %v3650, %v3649
        %v3679 = vpack.c.bf16 %v3652, %v3651
        %v3680 = vpack.c.bf16 %v3654, %v3653
        %v3681 = vpack.c.bf16 %v3656, %v3655
        %v3682 = vpack.c.bf16 %v3658, %v3657
        %v3683 = vld [vmem:[%s14] sm:$0x1]
        %v3685 = vlaneseq
        %v3686 = vshrl.u32 %v3685, 7
        %v3687 = vsub.s32 0, %v3686
        %v3688 = vrot.slane %v3683, %v3687
        %v3706 = vunpack.c.l.b16 %v3659
        %v3707 = vunpack.c.l.b16 %v3660
        %v3708 = vunpack.c.l.b16 %v3661
        %v3709 = vunpack.c.l.b16 %v3662
        %v3710 = vunpack.c.l.b16 %v3663
        %v3711 = vunpack.c.l.b16 %v3664
        %v3712 = vunpack.c.l.b16 %v3665
        %v3713 = vunpack.c.l.b16 %v3666
        %v3714 = vunpack.c.l.b16 %v3667
        %v3715 = vunpack.c.l.b16 %v3668
        %v3716 = vunpack.c.l.b16 %v3669
        %v3717 = vunpack.c.l.b16 %v3670
        %v3718 = vunpack.c.l.b16 %v3671
        %v3719 = vunpack.c.l.b16 %v3672
        %v3720 = vunpack.c.l.b16 %v3673
        %v3721 = vunpack.c.l.b16 %v3674
        %v3722 = vpack.c.b16 %v3707, %v3706
        %v3723 = vpack.c.b16 %v3709, %v3708
        %v3724 = vpack.c.b16 %v3711, %v3710
        %v3725 = vpack.c.b16 %v3713, %v3712
        %v3726 = vpack.c.b16 %v3715, %v3714
        %v3727 = vpack.c.b16 %v3717, %v3716
        %v3728 = vpack.c.b16 %v3719, %v3718
        %v3729 = vpack.c.b16 %v3721, %v3720
        %3738 = vmatprep.subr.bf16.mxu0 0
        %3739 = vmatpush1.bf16.msra.mxu0 %v3722
        %3740 = vmatprep.subr.bf16.mxu0 0
        %3741 = vmatpush1.bf16.msra.mxu0 %v3723
        %3742 = vmatprep.subr.bf16.mxu0 0
        %3743 = vmatpush1.bf16.msra.mxu0 %v3724
        %3744 = vmatprep.subr.bf16.mxu0 0
        %3745 = vmatpush1.bf16.msra.mxu0 %v3725
        %3746 = vmatprep.subr.bf16.mxu0 0
        %3747 = vmatpush1.bf16.msra.mxu0 %v3726
        %3748 = vmatprep.subr.bf16.mxu0 0
        %3749 = vmatpush1.bf16.msra.mxu0 %v3727
        %3750 = vmatprep.subr.bf16.mxu0 0
        %3751 = vmatpush1.bf16.msra.mxu0 %v3728
        %3752 = vmatprep.subr.bf16.mxu0 0
        %3753 = vmatpush1.bf16.msra.mxu0 %v3729
        %3754 = vmatprep.subr.bf16.mxu0 0
        %3755 = vmatpush1.bf16.msra.mxu0 0
        %3756 = vmatprep.subr.bf16.mxu0 0
        %3757 = vmatpush1.bf16.msra.mxu0 0
        %3758 = vmatprep.subr.bf16.mxu0 0
        %3759 = vmatpush1.bf16.msra.mxu0 0
        %3760 = vmatprep.subr.bf16.mxu0 0
        %3761 = vmatpush1.bf16.msra.mxu0 0
        %3762 = vmatprep.subr.bf16.mxu0 0
        %3763 = vmatpush1.bf16.msra.mxu0 0
        %3764 = vmatprep.subr.bf16.mxu0 0
        %3765 = vmatpush1.bf16.msra.mxu0 0
        %3766 = vmatprep.subr.bf16.mxu0 0
        %3767 = vmatpush1.bf16.msra.mxu0 0
        %3768 = vmatprep.subr.bf16.mxu0 0
        %3769 = vmatpush1.bf16.msra.mxu0 0
        %3770 = vmatprep.mubr.bf16.mxu0 0
        %3771 = vmatmul.mubr.bf16.gmra.mrb[0].mxu0 %v3675
        %v3772 = vpop.f32.mrb[0].mxu0
        %v3773 = vadd.f32 %v3688, %v3772
        %v3774 = vpop.f32.mrb[0].mxu0
        %v3775 = vpop.f32.mrb[0].mxu0
        %v3776 = vadd.f32 %v3688, %v3775
        %v3777 = vpop.f32.mrb[0].mxu0
        %3778 = vmatprep.mubr.bf16.mxu0 0
        %3779 = vmatmul.mubr.bf16.gmra.mrb[0].mxu0 %v3676
        %v3780 = vpop.f32.mrb[0].mxu0
        %v3781 = vadd.f32 %v3688, %v3780
        %v3782 = vpop.f32.mrb[0].mxu0
        %v3783 = vpop.f32.mrb[0].mxu0
        %v3784 = vadd.f32 %v3688, %v3783
        %v3785 = vpop.f32.mrb[0].mxu0
        %3786 = vmatprep.mubr.bf16.mxu0 0
        %3787 = vmatmul.mubr.bf16.gmra.mrb[0].mxu0 %v3677
        %v3788 = vpop.f32.mrb[0].mxu0
        %v3789 = vadd.f32 %v3688, %v3788
        %v3790 = vpop.f32.mrb[0].mxu0
        %v3791 = vpop.f32.mrb[0].mxu0
        %v3792 = vadd.f32 %v3688, %v3791
        %v3793 = vpop.f32.mrb[0].mxu0
        %3794 = vmatprep.mubr.bf16.mxu0 0
        %3795 = vmatmul.mubr.bf16.gmra.mrb[0].mxu0 %v3678
        %v3796 = vpop.f32.mrb[0].mxu0
        %v3797 = vadd.f32 %v3688, %v3796
        %v3798 = vpop.f32.mrb[0].mxu0
        %v3799 = vpop.f32.mrb[0].mxu0
        %v3800 = vadd.f32 %v3688, %v3799
        %v3801 = vpop.f32.mrb[0].mxu0
        %3802 = vmatprep.mubr.bf16.mxu0 0
        %3803 = vmatmul.mubr.bf16.gmra.mrb[0].mxu0 %v3679
        %v3804 = vpop.f32.mrb[0].mxu0
        %v3805 = vadd.f32 %v3688, %v3804
        %v3806 = vpop.f32.mrb[0].mxu0
        %v3807 = vpop.f32.mrb[0].mxu0
        %v3808 = vadd.f32 %v3688, %v3807
        %v3809 = vpop.f32.mrb[0].mxu0
        %3810 = vmatprep.mubr.bf16.mxu0 0
        %3811 = vmatmul.mubr.bf16.gmra.mrb[0].mxu0 %v3680
        %v3812 = vpop.f32.mrb[0].mxu0
        %v3813 = vadd.f32 %v3688, %v3812
        %v3814 = vpop.f32.mrb[0].mxu0
        %v3815 = vpop.f32.mrb[0].mxu0
        %v3816 = vadd.f32 %v3688, %v3815
        %v3817 = vpop.f32.mrb[0].mxu0
        %3818 = vmatprep.mubr.bf16.mxu0 0
        %3819 = vmatmul.mubr.bf16.gmra.mrb[0].mxu0 %v3681
        %v3820 = vpop.f32.mrb[0].mxu0
        %v3821 = vadd.f32 %v3688, %v3820
        %v3822 = vpop.f32.mrb[0].mxu0
        %v3823 = vpop.f32.mrb[0].mxu0
        %v3824 = vadd.f32 %v3688, %v3823
        %v3825 = vpop.f32.mrb[0].mxu0
        %3826 = vmatprep.mubr.bf16.mxu0 0
        %3827 = vmatmul.mubr.bf16.gmra.mrb[0].mxu0 %v3682
        %v3828 = vpop.f32.mrb[0].mxu0
        %v3829 = vadd.f32 %v3688, %v3828
        %v3830 = vpop.f32.mrb[0].mxu0
        %v3831 = vpop.f32.mrb[0].mxu0
        %v3832 = vadd.f32 %v3688, %v3831
        %v3833 = vpop.f32.mrb[0].mxu0
        %3834 = vdwg.mxu0
        %v3835 = vxor.u32 %v3773, 2147483648
        %v3836 = vxor.u32 %v3776, 2147483648
        %v3837 = vxor.u32 %v3781, 2147483648
        %v3838 = vxor.u32 %v3784, 2147483648
        %v3839 = vxor.u32 %v3789, 2147483648
        %v3840 = vxor.u32 %v3792, 2147483648
        %v3841 = vxor.u32 %v3797, 2147483648
        %v3842 = vxor.u32 %v3800, 2147483648
        %v3843 = vxor.u32 %v3805, 2147483648
        %v3844 = vxor.u32 %v3808, 2147483648
        %v3845 = vxor.u32 %v3813, 2147483648
        %v3846 = vxor.u32 %v3816, 2147483648
        %v3847 = vxor.u32 %v3821, 2147483648
        %v3848 = vxor.u32 %v3824, 2147483648
        %v3849 = vxor.u32 %v3829, 2147483648
        %v3850 = vxor.u32 %v3832, 2147483648
        %v3851 = vmul.f32 %v3835, 1.442695
        %v3852 = vpow.pop %v3851
        %v3853 = vmul.f32 %v3836, 1.442695
        %v3854 = vpow.pop %v3853
        %v3855 = vmul.f32 %v3837, 1.442695
        %v3856 = vpow.pop %v3855
        %v3857 = vmul.f32 %v3838, 1.442695
        %v3858 = vpow.pop %v3857
        %v3859 = vmul.f32 %v3839, 1.442695
        %v3860 = vpow.pop %v3859
        %v3861 = vmul.f32 %v3840, 1.442695
        %v3862 = vpow.pop %v3861
        %v3863 = vmul.f32 %v3841, 1.442695
        %v3864 = vpow.pop %v3863
        %v3865 = vmul.f32 %v3842, 1.442695
        %v3866 = vpow.pop %v3865
        %v3867 = vmul.f32 %v3843, 1.442695
        %v3868 = vpow.pop %v3867
        %v3869 = vmul.f32 %v3844, 1.442695
        %v3870 = vpow.pop %v3869
        %v3871 = vmul.f32 %v3845, 1.442695
        %v3872 = vpow.pop %v3871
        %v3873 = vmul.f32 %v3846, 1.442695
        %v3874 = vpow.pop %v3873
        %v3875 = vmul.f32 %v3847, 1.442695
        %v3876 = vpow.pop %v3875
        %v3877 = vmul.f32 %v3848, 1.442695
        %v3878 = vpow.pop %v3877
        %v3879 = vmul.f32 %v3849, 1.442695
        %v3880 = vpow.pop %v3879
        %v3881 = vmul.f32 %v3850, 1.442695
        %v3882 = vpow.pop %v3881
        %v3883 = vadd.f32 %v3852, 1.0
        %v3884 = vadd.f32 %v3854, 1.0
        %v3885 = vadd.f32 %v3856, 1.0
        %v3886 = vadd.f32 %v3858, 1.0
        %v3887 = vadd.f32 %v3860, 1.0
        %v3888 = vadd.f32 %v3862, 1.0
        %v3889 = vadd.f32 %v3864, 1.0
        %v3890 = vadd.f32 %v3866, 1.0
        %v3891 = vadd.f32 %v3868, 1.0
        %v3892 = vadd.f32 %v3870, 1.0
        %v3893 = vadd.f32 %v3872, 1.0
        %v3894 = vadd.f32 %v3874, 1.0
        %v3895 = vadd.f32 %v3876, 1.0
        %v3896 = vadd.f32 %v3878, 1.0
        %v3897 = vadd.f32 %v3880, 1.0
        %v3898 = vadd.f32 %v3882, 1.0
        %v3899 = vrcp.pop %v3883
        %v3900 = vmul.f32 1.0, %v3899
        %v3901 = vrcp.pop %v3884
        %v3902 = vmul.f32 1.0, %v3901
        %v3903 = vrcp.pop %v3885
        %v3904 = vmul.f32 1.0, %v3903
        %v3905 = vrcp.pop %v3886
        %v3906 = vmul.f32 1.0, %v3905
        %v3907 = vrcp.pop %v3887
        %v3908 = vmul.f32 1.0, %v3907
        %v3909 = vrcp.pop %v3888
        %v3910 = vmul.f32 1.0, %v3909
        %v3911 = vrcp.pop %v3889
        %v3912 = vmul.f32 1.0, %v3911
        %v3913 = vrcp.pop %v3890
        %v3914 = vmul.f32 1.0, %v3913
        %v3915 = vrcp.pop %v3891
        %v3916 = vmul.f32 1.0, %v3915
        %v3917 = vrcp.pop %v3892
        %v3918 = vmul.f32 1.0, %v3917
        %v3919 = vrcp.pop %v3893
        %v3920 = vmul.f32 1.0, %v3919
        %v3921 = vrcp.pop %v3894
        %v3922 = vmul.f32 1.0, %v3921
        %v3923 = vrcp.pop %v3895
        %v3924 = vmul.f32 1.0, %v3923
        %v3925 = vrcp.pop %v3896
        %v3926 = vmul.f32 1.0, %v3925
        %v3927 = vrcp.pop %v3897
        %v3928 = vmul.f32 1.0, %v3927
        %v3929 = vrcp.pop %v3898
        %v3930 = vmul.f32 1.0, %v3929
        %3931 = vst [vmem:[%s536] sm:$0xff] %v3900
        %3932 = vst [vmem:[%s536 + $0x8] sm:$0xff] %v3902
        %3933 = vst [vmem:[%s536 + $0x10] sm:$0xff] %v3904
        %3934 = vst [vmem:[%s536 + $0x18] sm:$0xff] %v3906
        %3935 = vst [vmem:[%s536 + $0x20] sm:$0xff] %v3908
        %3936 = vst [vmem:[%s536 + $0x28] sm:$0xff] %v3910
        %3937 = vst [vmem:[%s536 + $0x30] sm:$0xff] %v3912
        %3938 = vst [vmem:[%s536 + $0x38] sm:$0xff] %v3914
        %3939 = vst [vmem:[%s536 + $0x40] sm:$0xff] %v3916
        %3940 = vst [vmem:[%s536 + $0x48] sm:$0xff] %v3918
        %3941 = vst [vmem:[%s536 + $0x50] sm:$0xff] %v3920
        %3942 = vst [vmem:[%s536 + $0x58] sm:$0xff] %v3922
        %3943 = vst [vmem:[%s536 + $0x60] sm:$0xff] %v3924
        %3944 = vst [vmem:[%s536 + $0x68] sm:$0xff] %v3926
        %3945 = vst [vmem:[%s536 + $0x70] sm:$0xff] %v3928
        %3946 = vst [vmem:[%s536 + $0x78] sm:$0xff] %v3930
        %s3947 = sand.u32 %s372, 1
        %s3948 = scalar_lea.sflag [#allocation3], %s3947
        %s3949 = sand.u32 %s372, 1
        %s3950 = smul.addr %s3949, 128
        %s3951 = scalar_lea.vmem [#allocation2], %s3950
        // Predicated region
        $region81: #{tpu_custom_call.1} parent=79 // pred_check
          %p3952 = pneg %p382
        $region82: #{tpu_custom_call.1} parent=79 // pred_check_branch
          %3954 = sbr.rel (%p3952) target = $region84
        $region83: #{tpu_custom_call.1} parent=79 // pred_region
          %s3955 = smul.u32 16, %s29
          %s3957 = ssub.s32 2048, 2048
          %3958 = vsyncadd %s3948, %s3957
          %s3959 = smul.addr %s3955, 128
          %s3960 = scalar_lea.hbm %s15, %s3959
          %s3961 = sshll.u32 %s3951, 4
          %s3962 = int_to_ptr.vmem [resolvable:$true] %s3961
          %3967 = dma.vmem_to_hbm [thread:$0]  %s3962, 2048, %s3960, %s3948, 128, 128, 8
        $region84: #{tpu_custom_call.1} parent=79 // pred_fallthru
          _
      $region80: #{tpu_custom_call.1} parent=5 // pred_fallthru
        _
      %p3968 = scmp.le.s32.totalorder 2, %s24
      // Predicated region
      $region85: #{tpu_custom_call.1} parent=5 // pred_check
        %p3969 = pneg %p3968
      $region86: #{tpu_custom_call.1} parent=5 // pred_check_branch
        %3971 = sbr.rel (%p3969) target = $region88
      $region87: #{tpu_custom_call.1} parent=5 // pred_region
        %s3972 = ssub.s32 %s24, 2
        // Predicated region
        $region89: #{tpu_custom_call.1} parent=87 // pred_check
          %p3973 = pneg %p388
        $region90: #{tpu_custom_call.1} parent=87 // pred_check_branch
          %3975 = sbr.rel (%p3973) target = $region92
        $region91: #{tpu_custom_call.1} parent=87 // pred_region
          %s3976 = sand.u32 %s373, 1
          %s3977 = scalar_lea.sflag [#allocation3], %s3976
          %s3978 = sand.u32 %s373, 1
          %s3979 = smul.addr %s3978, 128
          %s3980 = scalar_lea.vmem [#allocation2], %s3979
          %3981 = dma.done %s3977, 2048
        $region92: #{tpu_custom_call.1} parent=87 // pred_fallthru
          _
      $region88: #{tpu_custom_call.1} parent=5 // pred_fallthru
        _
    $region6: #{tpu_custom_call.1} parent=1 // loop_footer
      %s28 = sadd.s32 1, %s24
    $region7: #{tpu_custom_call.1} parent=1 // loop_footer_branch
      %23 = sbr.rel target = $region3
    $region8: #{tpu_custom_call.1} parent=1 // loop_exit
      _
    %3982 = vsyncpa [#allocation3], 1
    %s3983 = scalar_lea.sflag [#allocation3], 1
    %3984 = vsyncpa %s3983, 1

</llo_original>
